<compile_context>
chip_gen: v6e
topology: v6e:2x2x1
jax: 0.10.0
libtpu: 0.0.40
codegen_flags: <defaults>
</compile_context>

<pallas_src>
import functools

import jax
import jax.numpy as jnp
from jax import lax
from jax.experimental import pallas as pl
from jax.experimental.pallas import tpu as pltpu


_VMEM_SPEC = pl.BlockSpec(memory_space=pltpu.MemorySpace.VMEM)

LPAD = 128  # classifier label dim padded to one full lane tile


# ----------------------------------------------------------------------------
# Fused Pallas kernel
# ----------------------------------------------------------------------------
def _textrnn_kernel(num_layers, T, H, *refs):
    """Fused bidirectional multi-layer LSTM + FC + softmax.

    refs layout (all VMEM):
      inputs : x (T, Bp, E) bf16 time-major,
               then per layer, per direction (fwd, bwd):
                   w_ih_t (I, 4H) bf16, w_hh_t (H, 4H) bf16, b (1, 4H) f32,
               then fc_w_t (2H, LPAD) bf16, fc_b (1, LPAD) f32 (padded -1e30)
      outputs: out (Bp, 2*LPAD) f32  -> [:, :LPAD] logits, [:, LPAD:] probs
      scratch: fwd_buf (T, Bp, H) f32, bwd_buf (T, Bp, H) f32,
               gxf (T, Bp, 4H) f32, gxb (T, Bp, 4H) f32
    Gate column order (set at init): i, f, o, g.
    """
    x_ref = refs[0]
    idx = 1
    layer_refs = []
    for _ in range(num_layers):
        dirs = []
        for _ in range(2):
            dirs.append((refs[idx], refs[idx + 1], refs[idx + 2]))
            idx += 3
        layer_refs.append(dirs)
    fc_w_ref, fc_b_ref = refs[idx], refs[idx + 1]
    out_ref = refs[idx + 2]
    fwd_buf, bwd_buf, gxf_ref, gxb_ref = refs[idx + 3: idx + 7]

    Bp = x_ref.shape[1]
    f32, bf16 = jnp.float32, jnp.bfloat16

    def cell(gates, c):
        # gate columns ordered (i, f, o, g): one contiguous sigmoid, one tanh
        sig = jax.nn.sigmoid(gates[:, : 3 * H])
        i_g = sig[:, 0 * H:1 * H]
        f_g = sig[:, 1 * H:2 * H]
        o_g = sig[:, 2 * H:3 * H]
        g_g = jnp.tanh(gates[:, 3 * H:])
        c_new = f_g * c + i_g * g_g
        return o_g * jnp.tanh(c_new), c_new

    for layer in range(num_layers):
        (wf_ih, wf_hh, bf_r), (wb_ih, wb_hh, bb_r) = layer_refs[layer]
        bf_v, bb_v = bf_r[...], bb_r[...]

        # ---- hoisted input projection (off the serial critical path) --------
        # one tile-aligned (Bp, I) x (I, 4H) dot per timestep; for layer > 0
        # the two direction halves of w_ih are used instead of concatenating
        # [fwd_buf, bwd_buf] along lanes.
        if layer == 0:
            wfi, wbi = wf_ih[...], wb_ih[...]

            @pl.loop(0, T)
            def _(t):
                xt = x_ref[t]                                     # (Bp, E) bf16
                gxf_ref[t] = jnp.dot(xt, wfi, preferred_element_type=f32) + bf_v
                gxb_ref[t] = jnp.dot(xt, wbi, preferred_element_type=f32) + bb_v
        else:
            wf_top, wf_bot = wf_ih[0:H, :], wf_ih[H:2 * H, :]     # static slices
            wb_top, wb_bot = wb_ih[0:H, :], wb_ih[H:2 * H, :]

            @pl.loop(0, T)
            def _(t):
                hf = fwd_buf[t].astype(bf16)                      # (Bp, H)
                hb = bwd_buf[t].astype(bf16)
                gxf_ref[t] = (jnp.dot(hf, wf_top, preferred_element_type=f32)
                              + jnp.dot(hb, wf_bot, preferred_element_type=f32)
                              + bf_v)
                gxb_ref[t] = (jnp.dot(hf, wb_top, preferred_element_type=f32)
                              + jnp.dot(hb, wb_bot, preferred_element_type=f32)
                              + bb_v)

        # ---- serial recurrence: fwd and bwd interleaved in one time loop ----
        whh_f, whh_b = wf_hh[...], wb_hh[...]

        def step(t, carry):
            h_f, c_f, h_b, c_b = carry
            tb = T - 1 - t       # backward direction reads reversed time
            g_f = gxf_ref[t] + jnp.dot(h_f.astype(bf16), whh_f,
                                       preferred_element_type=f32)
            g_b = gxb_ref[tb] + jnp.dot(h_b.astype(bf16), whh_b,
                                        preferred_element_type=f32)
            h_f, c_f = cell(g_f, c_f)
            h_b, c_b = cell(g_b, c_b)
            fwd_buf[t] = h_f
            bwd_buf[tb] = h_b
            return (h_f, c_f, h_b, c_b)

        z = jnp.zeros((Bp, H), f32)
        lax.fori_loop(0, T, step, (z, z, z, z),
                      unroll=(True if T <= 16 else 8))

    # ---- classifier + softmax on out[:, -1, :] (both direction states at
    #      time T-1, matching PyTorch batch_first output[:, -1, :]) ----------
    h_f_last = fwd_buf[T - 1].astype(bf16)
    h_b_last = bwd_buf[T - 1].astype(bf16)
    logits = (jnp.dot(h_f_last, fc_w_ref[0:H, :], preferred_element_type=f32)
              + jnp.dot(h_b_last, fc_w_ref[H:2 * H, :], preferred_element_type=f32)
              + fc_b_ref[...])                                    # (Bp, LPAD)
    out_ref[:, 0:LPAD] = logits

    m = jnp.max(logits, axis=-1, keepdims=True)
    e = jnp.exp(logits - m)           # padded labels carry bias -1e30 -> exp = 0
    out_ref[:, LPAD:2 * LPAD] = e / jnp.sum(e, axis=-1, keepdims=True)


# ----------------------------------------------------------------------------
# Full TextRNN forward (one pallas_call)
# ----------------------------------------------------------------------------
@functools.partial(jax.jit, static_argnames=("num_layers", "num_labels"))
def textrnn_forward(text_ids, params, *, num_layers, num_labels):
    # Embedding lookup (glue, plain JAX): (B, T) -> (B, T, E)
    emb = jnp.take(params["embedding"], text_ids, axis=0)
    B, T, E = emb.shape

    # time-major, batch padded to a sublane multiple, bf16 for the MXU
    x = jnp.transpose(emb, (1, 0, 2))                             # (T, B, E)
    Bp = ((B + 7) // 8) * 8
    if Bp != B:
        x = jnp.pad(x, ((0, 0), (0, Bp - B), (0, 0)))
    x = x.astype(jnp.bfloat16)

    H = params["lstm"][0]["fwd"]["w_hh_t"].shape[0]

    inputs = [x]
    for layer in range(num_layers):
        for d in ("fwd", "bwd"):
            lw = params["lstm"][layer][d]
            inputs += [lw["w_ih_t"], lw["w_hh_t"], lw["b"]]
    inputs += [params["fc_w_t"], params["fc_b"]]

    kernel = functools.partial(_textrnn_kernel, num_layers, T, H)

    out = pl.pallas_call(
        kernel,
        out_shape=jax.ShapeDtypeStruct((Bp, 2 * LPAD), jnp.float32),
        in_specs=[_VMEM_SPEC] * len(inputs),
        out_specs=_VMEM_SPEC,
        scratch_shapes=[
            pltpu.VMEM((T, Bp, H), jnp.float32),        # fwd hidden sequence
            pltpu.VMEM((T, Bp, H), jnp.float32),        # bwd hidden sequence
            pltpu.VMEM((T, Bp, 4 * H), jnp.float32),    # fwd input-proj gates
            pltpu.VMEM((T, Bp, 4 * H), jnp.float32),    # bwd input-proj gates
        ],
        compiler_params=pltpu.CompilerParams(vmem_limit_bytes=64 * 1024 * 1024),
    )(*inputs)

    logits = out[:B, :num_labels]
    prob = out[:B, LPAD:LPAD + num_labels]
    return logits, prob


# ----------------------------------------------------------------------------
# Deterministic parameter init (shapes follow nn.LSTM / nn.Linear conventions)
# ----------------------------------------------------------------------------
def _reorder_ifgo_to_ifog(w, hidden):
    """Rows are PyTorch (i, f, g, o) blocks of size `hidden`; return (i, f, o, g)."""
    return jnp.concatenate(
        [w[: 2 * hidden], w[3 * hidden: 4 * hidden], w[2 * hidden: 3 * hidden]],
        axis=0)


def init_params(key, *, vocab, embed_dim, hidden, num_layers, num_labels):
    keys = iter(jax.random.split(key, 8 * num_layers + 8))
    scale_h = 1.0 / jnp.sqrt(hidden)

    params = {
        "embedding": jax.random.normal(next(keys), (vocab, embed_dim),
                                       jnp.float32) * 0.1
    }

    lstm_layers = []
    for layer in range(num_layers):
        in_size = embed_dim if layer == 0 else 2 * hidden
        layer_p = {}
        for direction in ("fwd", "bwd"):
            w_ih = jax.random.uniform(next(keys), (4 * hidden, in_size),
                                      minval=-scale_h, maxval=scale_h)
            w_hh = jax.random.uniform(next(keys), (4 * hidden, hidden),
                                      minval=-scale_h, maxval=scale_h)
            b_ih = jax.random.uniform(next(keys), (4 * hidden,),
                                      minval=-scale_h, maxval=scale_h)
            b_hh = jax.random.uniform(next(keys), (4 * hidden,),
                                      minval=-scale_h, maxval=scale_h)
            # PyTorch gate order (i, f, g, o) -> kernel order (i, f, o, g)
            w_ih = _reorder_ifgo_to_ifog(w_ih, hidden)
            w_hh = _reorder_ifgo_to_ifog(w_hh, hidden)
            b = _reorder_ifgo_to_ifog(b_ih + b_hh, hidden)
            layer_p[direction] = {
                "w_ih_t": jnp.asarray(w_ih.T, jnp.bfloat16),           # (I, 4H)
                "w_hh_t": jnp.asarray(w_hh.T, jnp.bfloat16),           # (H, 4H)
                "b": jnp.asarray(b[None, :], jnp.float32),             # (1, 4H)
            }
        lstm_layers.append(layer_p)
    params["lstm"] = lstm_layers

    scale_fc = 1.0 / jnp.sqrt(2 * hidden)
    fc_w = jax.random.uniform(next(keys), (num_labels, 2 * hidden),
                              minval=-scale_fc, maxval=scale_fc)
    fc_b = jax.random.uniform(next(keys), (num_labels,),
                              minval=-scale_fc, maxval=scale_fc)
    # lane-dense classifier: pad to LPAD columns; padded bias -1e30 so softmax
    # over the padded row is exact on the real labels.
    fc_w_t = jnp.zeros((2 * hidden, LPAD), jnp.bfloat16)
    fc_w_t = fc_w_t.at[:, :num_labels].set(fc_w.T.astype(jnp.bfloat16))
    fc_b_p = jnp.full((1, LPAD), -1e30, jnp.float32)
    fc_b_p = fc_b_p.at[0, :num_labels].set(fc_b.astype(jnp.float32))
    params["fc_w_t"] = fc_w_t
    params["fc_b"] = fc_b_p
    return params


# ----------------------------------------------------------------------------
if __name__ == "__main__":
    VOCAB = 50
    EMBED_DIM = 16
    HIDDEN = 32
    NUM_LAYERS = 2
    NUM_LABELS = 4
    BATCH = 2
    SEQ = 8

    key = jax.random.PRNGKey(0)
    k_param, k_text = jax.random.split(key)

    params = init_params(
        k_param,
        vocab=VOCAB, embed_dim=EMBED_DIM, hidden=HIDDEN,
        num_layers=NUM_LAYERS, num_labels=NUM_LABELS,
    )
    text_ids = jax.random.randint(k_text, (BATCH, SEQ), 0, VOCAB, dtype=jnp.int32)

    logits, prob = textrnn_forward(text_ids, params,
                                   num_layers=NUM_LAYERS, num_labels=NUM_LABELS)
    jax.block_until_ready((logits, prob))

    assert logits.shape == (BATCH, NUM_LABELS)
    assert prob.shape == (BATCH, NUM_LABELS)
    assert bool(jnp.all(jnp.isfinite(logits)))
    assert bool(jnp.all(jnp.isfinite(prob)))
    assert bool(jnp.all(prob >= 0.0))
    # exact softmax in-kernel -> tight tolerance on the row sums
    assert bool(jnp.allclose(jnp.sum(prob, axis=-1), 1.0, atol=1e-4))

    print("KERNEL_OK")
</pallas_src>

<mosaic_0001>
module attributes {stable_mosaic.version = 11 : i64} {
  func.func @_textrnn_kernel(%arg0: memref<8x8x16xbf16, #tpu.memory_space<vmem>>, %arg1: memref<16x128xbf16, #tpu.memory_space<vmem>>, %arg2: memref<32x128xbf16, #tpu.memory_space<vmem>>, %arg3: memref<1x128xf32, #tpu.memory_space<vmem>>, %arg4: memref<16x128xbf16, #tpu.memory_space<vmem>>, %arg5: memref<32x128xbf16, #tpu.memory_space<vmem>>, %arg6: memref<1x128xf32, #tpu.memory_space<vmem>>, %arg7: memref<64x128xbf16, #tpu.memory_space<vmem>>, %arg8: memref<32x128xbf16, #tpu.memory_space<vmem>>, %arg9: memref<1x128xf32, #tpu.memory_space<vmem>>, %arg10: memref<64x128xbf16, #tpu.memory_space<vmem>>, %arg11: memref<32x128xbf16, #tpu.memory_space<vmem>>, %arg12: memref<1x128xf32, #tpu.memory_space<vmem>>, %arg13: memref<64x128xbf16, #tpu.memory_space<vmem>>, %arg14: memref<1x128xf32, #tpu.memory_space<vmem>>, %arg15: memref<8x256xf32, #tpu.memory_space<vmem>>, %arg16: memref<8x8x32xf32, #tpu.memory_space<vmem>>, %arg17: memref<8x8x32xf32, #tpu.memory_space<vmem>>, %arg18: memref<8x8x128xf32, #tpu.memory_space<vmem>>, %arg19: memref<8x8x128xf32, #tpu.memory_space<vmem>>) attributes {dimension_semantics = [], scalar_prefetch = 0 : i64, scratch_operands = 4 : i64, tpu.core_type = #tpu.core_type<tc>} {
    %c0 = arith.constant 0 : index
    %c0_0 = arith.constant 0 : index
    %0 = vector.load %arg3[%c0, %c0_0] : memref<1x128xf32, #tpu.memory_space<vmem>>, vector<1x128xf32>
    %c0_1 = arith.constant 0 : index
    %c0_2 = arith.constant 0 : index
    %1 = vector.load %arg6[%c0_1, %c0_2] : memref<1x128xf32, #tpu.memory_space<vmem>>, vector<1x128xf32>
    %c0_3 = arith.constant 0 : index
    %c0_4 = arith.constant 0 : index
    %2 = vector.load %arg1[%c0_3, %c0_4] : memref<16x128xbf16, #tpu.memory_space<vmem>>, vector<16x128xbf16>
    %c0_5 = arith.constant 0 : index
    %c0_6 = arith.constant 0 : index
    %3 = vector.load %arg4[%c0_5, %c0_6] : memref<16x128xbf16, #tpu.memory_space<vmem>>, vector<16x128xbf16>
    %c0_i32 = arith.constant 0 : i32
    %c8_i32 = arith.constant 8 : i32
    %4 = arith.addi %c0_i32, %c8_i32 : i32
    %c1_i32 = arith.constant 1 : i32
    scf.for %arg20 = %c0_i32 to %4 step %c1_i32  : i32 {
      %c1_i32_270 = arith.constant 1 : i32
      %891 = arith.muli %arg20, %c1_i32_270 : i32
      %c0_i32_271 = arith.constant 0 : i32
      %892 = arith.addi %c0_i32_271, %891 : i32
      %893 = arith.index_cast %892 : i32 to index
      %c0_272 = arith.constant 0 : index
      %c0_273 = arith.constant 0 : index
      %894 = vector.load %arg0[%893, %c0_272, %c0_273] : memref<8x8x16xbf16, #tpu.memory_space<vmem>>, vector<1x8x16xbf16>
      %895 = vector.shape_cast %894 : vector<1x8x16xbf16> to vector<8x16xbf16>
      %cst_274 = arith.constant dense<0.000000e+00> : vector<8x128xf32>
      %896 = tpu.matmul %895, %2, %cst_274 {dimension_numbers = #tpu.dot_dimension_numbers<[1], [0], [0], [1], [0, 0, 1, 1], [], []>} : vector<8x16xbf16>, vector<16x128xbf16>, vector<8x128xf32> -> vector<8x128xf32>
      %897 = vector.broadcast %0 : vector<1x128xf32> to vector<8x128xf32>
      %898 = arith.addf %896, %897 : vector<8x128xf32>
      %899 = arith.index_cast %892 : i32 to index
      %c0_275 = arith.constant 0 : index
      %c0_276 = arith.constant 0 : index
      %900 = vector.load %arg18[%899, %c0_275, %c0_276] : memref<8x8x128xf32, #tpu.memory_space<vmem>>, vector<1x8x128xf32>
      %901 = vector.shape_cast %900 : vector<1x8x128xf32> to vector<8x128xf32>
      %902 = vector.shape_cast %898 : vector<8x128xf32> to vector<1x8x128xf32>
      tpu.vector_store %arg18[%899, %c0_275, %c0_276], %902 {strides = array<i32>} : memref<8x8x128xf32, #tpu.memory_space<vmem>>, vector<1x8x128xf32>,
      %cst_277 = arith.constant dense<0.000000e+00> : vector<8x128xf32>
      %903 = tpu.matmul %895, %3, %cst_277 {dimension_numbers = #tpu.dot_dimension_numbers<[1], [0], [0], [1], [0, 0, 1, 1], [], []>} : vector<8x16xbf16>, vector<16x128xbf16>, vector<8x128xf32> -> vector<8x128xf32>
      %904 = vector.broadcast %1 : vector<1x128xf32> to vector<8x128xf32>
      %905 = arith.addf %903, %904 : vector<8x128xf32>
      %906 = arith.index_cast %892 : i32 to index
      %c0_278 = arith.constant 0 : index
      %c0_279 = arith.constant 0 : index
      %907 = vector.load %arg19[%906, %c0_278, %c0_279] : memref<8x8x128xf32, #tpu.memory_space<vmem>>, vector<1x8x128xf32>
      %908 = vector.shape_cast %907 : vector<1x8x128xf32> to vector<8x128xf32>
      %909 = vector.shape_cast %905 : vector<8x128xf32> to vector<1x8x128xf32>
      tpu.vector_store %arg19[%906, %c0_278, %c0_279], %909 {strides = array<i32>} : memref<8x8x128xf32, #tpu.memory_space<vmem>>, vector<1x8x128xf32>,
    }
    %c8_i32_7 = arith.constant 8 : i32
    %c0_8 = arith.constant 0 : index
    %c0_9 = arith.constant 0 : index
    %5 = vector.load %arg2[%c0_8, %c0_9] : memref<32x128xbf16, #tpu.memory_space<vmem>>, vector<32x128xbf16>
    %c0_10 = arith.constant 0 : index
    %c0_11 = arith.constant 0 : index
    %6 = vector.load %arg5[%c0_10, %c0_11] : memref<32x128xbf16, #tpu.memory_space<vmem>>, vector<32x128xbf16>
    %cst = arith.constant 0.000000e+00 : f32
    %7 = vector.broadcast %cst : f32 to vector<8x32xf32>
    %c0_i32_12 = arith.constant 0 : i32
    %c7_i32 = arith.constant 7 : i32
    %8 = arith.subi %c7_i32, %c0_i32_12 : i32
    %9 = arith.index_cast %c0_i32_12 : i32 to index
    %c0_13 = arith.constant 0 : index
    %c0_14 = arith.constant 0 : index
    %10 = vector.load %arg18[%9, %c0_13, %c0_14] : memref<8x8x128xf32, #tpu.memory_space<vmem>>, vector<1x8x128xf32>
    %11 = vector.shape_cast %10 : vector<1x8x128xf32> to vector<8x128xf32>
    %12 = arith.truncf %7 : vector<8x32xf32> to vector<8x32xbf16>
    %cst_15 = arith.constant dense<0.000000e+00> : vector<8x128xf32>
    %13 = tpu.matmul %12, %5, %cst_15 {dimension_numbers = #tpu.dot_dimension_numbers<[1], [0], [0], [1], [0, 0, 1, 1], [], []>} : vector<8x32xbf16>, vector<32x128xbf16>, vector<8x128xf32> -> vector<8x128xf32>
    %14 = arith.addf %11, %13 : vector<8x128xf32>
    %15 = arith.index_cast %8 : i32 to index
    %c0_16 = arith.constant 0 : index
    %c0_17 = arith.constant 0 : index
    %16 = vector.load %arg19[%15, %c0_16, %c0_17] : memref<8x8x128xf32, #tpu.memory_space<vmem>>, vector<1x8x128xf32>
    %17 = vector.shape_cast %16 : vector<1x8x128xf32> to vector<8x128xf32>
    %18 = arith.truncf %7 : vector<8x32xf32> to vector<8x32xbf16>
    %cst_18 = arith.constant dense<0.000000e+00> : vector<8x128xf32>
    %19 = tpu.matmul %18, %6, %cst_18 {dimension_numbers = #tpu.dot_dimension_numbers<[1], [0], [0], [1], [0, 0, 1, 1], [], []>} : vector<8x32xbf16>, vector<32x128xbf16>, vector<8x128xf32> -> vector<8x128xf32>
    %20 = arith.addf %17, %19 : vector<8x128xf32>
    %21 = vector.extract_strided_slice %14 {offsets = [0, 0], sizes = [8, 96], strides = [1, 1]} : vector<8x128xf32> to vector<8x96xf32>
    %22 = arith.negf %21 : vector<8x96xf32>
    %23 = math.exp %22 : vector<8x96xf32>
    %cst_19 = arith.constant 1.000000e+00 : f32
    %24 = vector.broadcast %cst_19 : f32 to vector<8x96xf32>
    %25 = arith.addf %24, %23 : vector<8x96xf32>
    %26 = arith.divf %24, %25 : vector<8x96xf32>
    %27 = vector.extract_strided_slice %26 {offsets = [0, 0], sizes = [8, 32], strides = [1, 1]} : vector<8x96xf32> to vector<8x32xf32>
    %28 = vector.extract_strided_slice %26 {offsets = [0, 32], sizes = [8, 32], strides = [1, 1]} : vector<8x96xf32> to vector<8x32xf32>
    %29 = vector.extract_strided_slice %26 {offsets = [0, 64], sizes = [8, 32], strides = [1, 1]} : vector<8x96xf32> to vector<8x32xf32>
    %30 = vector.extract_strided_slice %14 {offsets = [0, 96], sizes = [8, 32], strides = [1, 1]} : vector<8x128xf32> to vector<8x32xf32>
    %31 = math.tanh %30 : vector<8x32xf32>
    %32 = arith.mulf %28, %7 : vector<8x32xf32>
    %33 = arith.mulf %27, %31 : vector<8x32xf32>
    %34 = arith.addf %32, %33 : vector<8x32xf32>
    %35 = math.tanh %34 : vector<8x32xf32>
    %36 = arith.mulf %29, %35 : vector<8x32xf32>
    %37 = vector.extract_strided_slice %20 {offsets = [0, 0], sizes = [8, 96], strides = [1, 1]} : vector<8x128xf32> to vector<8x96xf32>
    %38 = arith.negf %37 : vector<8x96xf32>
    %39 = math.exp %38 : vector<8x96xf32>
    %cst_20 = arith.constant 1.000000e+00 : f32
    %40 = vector.broadcast %cst_20 : f32 to vector<8x96xf32>
    %41 = arith.addf %40, %39 : vector<8x96xf32>
    %42 = arith.divf %40, %41 : vector<8x96xf32>
    %43 = vector.extract_strided_slice %42 {offsets = [0, 0], sizes = [8, 32], strides = [1, 1]} : vector<8x96xf32> to vector<8x32xf32>
    %44 = vector.extract_strided_slice %42 {offsets = [0, 32], sizes = [8, 32], strides = [1, 1]} : vector<8x96xf32> to vector<8x32xf32>
    %45 = vector.extract_strided_slice %42 {offsets = [0, 64], sizes = [8, 32], strides = [1, 1]} : vector<8x96xf32> to vector<8x32xf32>
    %46 = vector.extract_strided_slice %20 {offsets = [0, 96], sizes = [8, 32], strides = [1, 1]} : vector<8x128xf32> to vector<8x32xf32>
    %47 = math.tanh %46 : vector<8x32xf32>
    %48 = arith.mulf %44, %7 : vector<8x32xf32>
    %49 = arith.mulf %43, %47 : vector<8x32xf32>
    %50 = arith.addf %48, %49 : vector<8x32xf32>
    %51 = math.tanh %50 : vector<8x32xf32>
    %52 = arith.mulf %45, %51 : vector<8x32xf32>
    %53 = arith.index_cast %c0_i32_12 : i32 to index
    %c0_21 = arith.constant 0 : index
    %c0_22 = arith.constant 0 : index
    %54 = vector.load %arg16[%53, %c0_21, %c0_22] : memref<8x8x32xf32, #tpu.memory_space<vmem>>, vector<1x8x32xf32>
    %55 = vector.shape_cast %54 : vector<1x8x32xf32> to vector<8x32xf32>
    %56 = vector.shape_cast %36 : vector<8x32xf32> to vector<1x8x32xf32>
    tpu.vector_store %arg16[%53, %c0_21, %c0_22], %56 {strides = array<i32>} : memref<8x8x32xf32, #tpu.memory_space<vmem>>, vector<1x8x32xf32>,
    %57 = arith.index_cast %8 : i32 to index
    %c0_23 = arith.constant 0 : index
    %c0_24 = arith.constant 0 : index
    %58 = vector.load %arg17[%57, %c0_23, %c0_24] : memref<8x8x32xf32, #tpu.memory_space<vmem>>, vector<1x8x32xf32>
    %59 = vector.shape_cast %58 : vector<1x8x32xf32> to vector<8x32xf32>
    %60 = vector.shape_cast %52 : vector<8x32xf32> to vector<1x8x32xf32>
    tpu.vector_store %arg17[%57, %c0_23, %c0_24], %60 {strides = array<i32>} : memref<8x8x32xf32, #tpu.memory_space<vmem>>, vector<1x8x32xf32>,
    %c1_i32_25 = arith.constant 1 : i32
    %c7_i32_26 = arith.constant 7 : i32
    %61 = arith.subi %c7_i32_26, %c1_i32_25 : i32
    %62 = arith.index_cast %c1_i32_25 : i32 to index
    %c0_27 = arith.constant 0 : index
    %c0_28 = arith.constant 0 : index
    %63 = vector.load %arg18[%62, %c0_27, %c0_28] : memref<8x8x128xf32, #tpu.memory_space<vmem>>, vector<1x8x128xf32>
    %64 = vector.shape_cast %63 : vector<1x8x128xf32> to vector<8x128xf32>
    %65 = arith.truncf %36 : vector<8x32xf32> to vector<8x32xbf16>
    %cst_29 = arith.constant dense<0.000000e+00> : vector<8x128xf32>
    %66 = tpu.matmul %65, %5, %cst_29 {dimension_numbers = #tpu.dot_dimension_numbers<[1], [0], [0], [1], [0, 0, 1, 1], [], []>} : vector<8x32xbf16>, vector<32x128xbf16>, vector<8x128xf32> -> vector<8x128xf32>
    %67 = arith.addf %64, %66 : vector<8x128xf32>
    %68 = arith.index_cast %61 : i32 to index
    %c0_30 = arith.constant 0 : index
    %c0_31 = arith.constant 0 : index
    %69 = vector.load %arg19[%68, %c0_30, %c0_31] : memref<8x8x128xf32, #tpu.memory_space<vmem>>, vector<1x8x128xf32>
    %70 = vector.shape_cast %69 : vector<1x8x128xf32> to vector<8x128xf32>
    %71 = arith.truncf %52 : vector<8x32xf32> to vector<8x32xbf16>
    %cst_32 = arith.constant dense<0.000000e+00> : vector<8x128xf32>
    %72 = tpu.matmul %71, %6, %cst_32 {dimension_numbers = #tpu.dot_dimension_numbers<[1], [0], [0], [1], [0, 0, 1, 1], [], []>} : vector<8x32xbf16>, vector<32x128xbf16>, vector<8x128xf32> -> vector<8x128xf32>
    %73 = arith.addf %70, %72 : vector<8x128xf32>
    %74 = vector.extract_strided_slice %67 {offsets = [0, 0], sizes = [8, 96], strides = [1, 1]} : vector<8x128xf32> to vector<8x96xf32>
    %75 = arith.negf %74 : vector<8x96xf32>
    %76 = math.exp %75 : vector<8x96xf32>
    %cst_33 = arith.constant 1.000000e+00 : f32
    %77 = vector.broadcast %cst_33 : f32 to vector<8x96xf32>
    %78 = arith.addf %77, %76 : vector<8x96xf32>
    %79 = arith.divf %77, %78 : vector<8x96xf32>
    %80 = vector.extract_strided_slice %79 {offsets = [0, 0], sizes = [8, 32], strides = [1, 1]} : vector<8x96xf32> to vector<8x32xf32>
    %81 = vector.extract_strided_slice %79 {offsets = [0, 32], sizes = [8, 32], strides = [1, 1]} : vector<8x96xf32> to vector<8x32xf32>
    %82 = vector.extract_strided_slice %79 {offsets = [0, 64], sizes = [8, 32], strides = [1, 1]} : vector<8x96xf32> to vector<8x32xf32>
    %83 = vector.extract_strided_slice %67 {offsets = [0, 96], sizes = [8, 32], strides = [1, 1]} : vector<8x128xf32> to vector<8x32xf32>
    %84 = math.tanh %83 : vector<8x32xf32>
    %85 = arith.mulf %81, %34 : vector<8x32xf32>
    %86 = arith.mulf %80, %84 : vector<8x32xf32>
    %87 = arith.addf %85, %86 : vector<8x32xf32>
    %88 = math.tanh %87 : vector<8x32xf32>
    %89 = arith.mulf %82, %88 : vector<8x32xf32>
    %90 = vector.extract_strided_slice %73 {offsets = [0, 0], sizes = [8, 96], strides = [1, 1]} : vector<8x128xf32> to vector<8x96xf32>
    %91 = arith.negf %90 : vector<8x96xf32>
    %92 = math.exp %91 : vector<8x96xf32>
    %cst_34 = arith.constant 1.000000e+00 : f32
    %93 = vector.broadcast %cst_34 : f32 to vector<8x96xf32>
    %94 = arith.addf %93, %92 : vector<8x96xf32>
    %95 = arith.divf %93, %94 : vector<8x96xf32>
    %96 = vector.extract_strided_slice %95 {offsets = [0, 0], sizes = [8, 32], strides = [1, 1]} : vector<8x96xf32> to vector<8x32xf32>
    %97 = vector.extract_strided_slice %95 {offsets = [0, 32], sizes = [8, 32], strides = [1, 1]} : vector<8x96xf32> to vector<8x32xf32>
    %98 = vector.extract_strided_slice %95 {offsets = [0, 64], sizes = [8, 32], strides = [1, 1]} : vector<8x96xf32> to vector<8x32xf32>
    %99 = vector.extract_strided_slice %73 {offsets = [0, 96], sizes = [8, 32], strides = [1, 1]} : vector<8x128xf32> to vector<8x32xf32>
    %100 = math.tanh %99 : vector<8x32xf32>
    %101 = arith.mulf %97, %50 : vector<8x32xf32>
    %102 = arith.mulf %96, %100 : vector<8x32xf32>
    %103 = arith.addf %101, %102 : vector<8x32xf32>
    %104 = math.tanh %103 : vector<8x32xf32>
    %105 = arith.mulf %98, %104 : vector<8x32xf32>
    %106 = arith.index_cast %c1_i32_25 : i32 to index
    %c0_35 = arith.constant 0 : index
    %c0_36 = arith.constant 0 : index
    %107 = vector.load %arg16[%106, %c0_35, %c0_36] : memref<8x8x32xf32, #tpu.memory_space<vmem>>, vector<1x8x32xf32>
    %108 = vector.shape_cast %107 : vector<1x8x32xf32> to vector<8x32xf32>
    %109 = vector.shape_cast %89 : vector<8x32xf32> to vector<1x8x32xf32>
    tpu.vector_store %arg16[%106, %c0_35, %c0_36], %109 {strides = array<i32>} : memref<8x8x32xf32, #tpu.memory_space<vmem>>, vector<1x8x32xf32>,
    %110 = arith.index_cast %61 : i32 to index
    %c0_37 = arith.constant 0 : index
    %c0_38 = arith.constant 0 : index
    %111 = vector.load %arg17[%110, %c0_37, %c0_38] : memref<8x8x32xf32, #tpu.memory_space<vmem>>, vector<1x8x32xf32>
    %112 = vector.shape_cast %111 : vector<1x8x32xf32> to vector<8x32xf32>
    %113 = vector.shape_cast %105 : vector<8x32xf32> to vector<1x8x32xf32>
    tpu.vector_store %arg17[%110, %c0_37, %c0_38], %113 {strides = array<i32>} : memref<8x8x32xf32, #tpu.memory_space<vmem>>, vector<1x8x32xf32>,
    %c2_i32 = arith.constant 2 : i32
    %c7_i32_39 = arith.constant 7 : i32
    %114 = arith.subi %c7_i32_39, %c2_i32 : i32
    %115 = arith.index_cast %c2_i32 : i32 to index
    %c0_40 = arith.constant 0 : index
    %c0_41 = arith.constant 0 : index
    %116 = vector.load %arg18[%115, %c0_40, %c0_41] : memref<8x8x128xf32, #tpu.memory_space<vmem>>, vector<1x8x128xf32>
    %117 = vector.shape_cast %116 : vector<1x8x128xf32> to vector<8x128xf32>
    %118 = arith.truncf %89 : vector<8x32xf32> to vector<8x32xbf16>
    %cst_42 = arith.constant dense<0.000000e+00> : vector<8x128xf32>
    %119 = tpu.matmul %118, %5, %cst_42 {dimension_numbers = #tpu.dot_dimension_numbers<[1], [0], [0], [1], [0, 0, 1, 1], [], []>} : vector<8x32xbf16>, vector<32x128xbf16>, vector<8x128xf32> -> vector<8x128xf32>
    %120 = arith.addf %117, %119 : vector<8x128xf32>
    %121 = arith.index_cast %114 : i32 to index
    %c0_43 = arith.constant 0 : index
    %c0_44 = arith.constant 0 : index
    %122 = vector.load %arg19[%121, %c0_43, %c0_44] : memref<8x8x128xf32, #tpu.memory_space<vmem>>, vector<1x8x128xf32>
    %123 = vector.shape_cast %122 : vector<1x8x128xf32> to vector<8x128xf32>
    %124 = arith.truncf %105 : vector<8x32xf32> to vector<8x32xbf16>
    %cst_45 = arith.constant dense<0.000000e+00> : vector<8x128xf32>
    %125 = tpu.matmul %124, %6, %cst_45 {dimension_numbers = #tpu.dot_dimension_numbers<[1], [0], [0], [1], [0, 0, 1, 1], [], []>} : vector<8x32xbf16>, vector<32x128xbf16>, vector<8x128xf32> -> vector<8x128xf32>
    %126 = arith.addf %123, %125 : vector<8x128xf32>
    %127 = vector.extract_strided_slice %120 {offsets = [0, 0], sizes = [8, 96], strides = [1, 1]} : vector<8x128xf32> to vector<8x96xf32>
    %128 = arith.negf %127 : vector<8x96xf32>
    %129 = math.exp %128 : vector<8x96xf32>
    %cst_46 = arith.constant 1.000000e+00 : f32
    %130 = vector.broadcast %cst_46 : f32 to vector<8x96xf32>
    %131 = arith.addf %130, %129 : vector<8x96xf32>
    %132 = arith.divf %130, %131 : vector<8x96xf32>
    %133 = vector.extract_strided_slice %132 {offsets = [0, 0], sizes = [8, 32], strides = [1, 1]} : vector<8x96xf32> to vector<8x32xf32>
    %134 = vector.extract_strided_slice %132 {offsets = [0, 32], sizes = [8, 32], strides = [1, 1]} : vector<8x96xf32> to vector<8x32xf32>
    %135 = vector.extract_strided_slice %132 {offsets = [0, 64], sizes = [8, 32], strides = [1, 1]} : vector<8x96xf32> to vector<8x32xf32>
    %136 = vector.extract_strided_slice %120 {offsets = [0, 96], sizes = [8, 32], strides = [1, 1]} : vector<8x128xf32> to vector<8x32xf32>
    %137 = math.tanh %136 : vector<8x32xf32>
    %138 = arith.mulf %134, %87 : vector<8x32xf32>
    %139 = arith.mulf %133, %137 : vector<8x32xf32>
    %140 = arith.addf %138, %139 : vector<8x32xf32>
    %141 = math.tanh %140 : vector<8x32xf32>
    %142 = arith.mulf %135, %141 : vector<8x32xf32>
    %143 = vector.extract_strided_slice %126 {offsets = [0, 0], sizes = [8, 96], strides = [1, 1]} : vector<8x128xf32> to vector<8x96xf32>
    %144 = arith.negf %143 : vector<8x96xf32>
    %145 = math.exp %144 : vector<8x96xf32>
    %cst_47 = arith.constant 1.000000e+00 : f32
    %146 = vector.broadcast %cst_47 : f32 to vector<8x96xf32>
    %147 = arith.addf %146, %145 : vector<8x96xf32>
    %148 = arith.divf %146, %147 : vector<8x96xf32>
    %149 = vector.extract_strided_slice %148 {offsets = [0, 0], sizes = [8, 32], strides = [1, 1]} : vector<8x96xf32> to vector<8x32xf32>
    %150 = vector.extract_strided_slice %148 {offsets = [0, 32], sizes = [8, 32], strides = [1, 1]} : vector<8x96xf32> to vector<8x32xf32>
    %151 = vector.extract_strided_slice %148 {offsets = [0, 64], sizes = [8, 32], strides = [1, 1]} : vector<8x96xf32> to vector<8x32xf32>
    %152 = vector.extract_strided_slice %126 {offsets = [0, 96], sizes = [8, 32], strides = [1, 1]} : vector<8x128xf32> to vector<8x32xf32>
    %153 = math.tanh %152 : vector<8x32xf32>
    %154 = arith.mulf %150, %103 : vector<8x32xf32>
    %155 = arith.mulf %149, %153 : vector<8x32xf32>
    %156 = arith.addf %154, %155 : vector<8x32xf32>
    %157 = math.tanh %156 : vector<8x32xf32>
    %158 = arith.mulf %151, %157 : vector<8x32xf32>
    %159 = arith.index_cast %c2_i32 : i32 to index
    %c0_48 = arith.constant 0 : index
    %c0_49 = arith.constant 0 : index
    %160 = vector.load %arg16[%159, %c0_48, %c0_49] : memref<8x8x32xf32, #tpu.memory_space<vmem>>, vector<1x8x32xf32>
    %161 = vector.shape_cast %160 : vector<1x8x32xf32> to vector<8x32xf32>
    %162 = vector.shape_cast %142 : vector<8x32xf32> to vector<1x8x32xf32>
    tpu.vector_store %arg16[%159, %c0_48, %c0_49], %162 {strides = array<i32>} : memref<8x8x32xf32, #tpu.memory_space<vmem>>, vector<1x8x32xf32>,
    %163 = arith.index_cast %114 : i32 to index
    %c0_50 = arith.constant 0 : index
    %c0_51 = arith.constant 0 : index
    %164 = vector.load %arg17[%163, %c0_50, %c0_51] : memref<8x8x32xf32, #tpu.memory_space<vmem>>, vector<1x8x32xf32>
    %165 = vector.shape_cast %164 : vector<1x8x32xf32> to vector<8x32xf32>
    %166 = vector.shape_cast %158 : vector<8x32xf32> to vector<1x8x32xf32>
    tpu.vector_store %arg17[%163, %c0_50, %c0_51], %166 {strides = array<i32>} : memref<8x8x32xf32, #tpu.memory_space<vmem>>, vector<1x8x32xf32>,
    %c3_i32 = arith.constant 3 : i32
    %c7_i32_52 = arith.constant 7 : i32
    %167 = arith.subi %c7_i32_52, %c3_i32 : i32
    %168 = arith.index_cast %c3_i32 : i32 to index
    %c0_53 = arith.constant 0 : index
    %c0_54 = arith.constant 0 : index
    %169 = vector.load %arg18[%168, %c0_53, %c0_54] : memref<8x8x128xf32, #tpu.memory_space<vmem>>, vector<1x8x128xf32>
    %170 = vector.shape_cast %169 : vector<1x8x128xf32> to vector<8x128xf32>
    %171 = arith.truncf %142 : vector<8x32xf32> to vector<8x32xbf16>
    %cst_55 = arith.constant dense<0.000000e+00> : vector<8x128xf32>
    %172 = tpu.matmul %171, %5, %cst_55 {dimension_numbers = #tpu.dot_dimension_numbers<[1], [0], [0], [1], [0, 0, 1, 1], [], []>} : vector<8x32xbf16>, vector<32x128xbf16>, vector<8x128xf32> -> vector<8x128xf32>
    %173 = arith.addf %170, %172 : vector<8x128xf32>
    %174 = arith.index_cast %167 : i32 to index
    %c0_56 = arith.constant 0 : index
    %c0_57 = arith.constant 0 : index
    %175 = vector.load %arg19[%174, %c0_56, %c0_57] : memref<8x8x128xf32, #tpu.memory_space<vmem>>, vector<1x8x128xf32>
    %176 = vector.shape_cast %175 : vector<1x8x128xf32> to vector<8x128xf32>
    %177 = arith.truncf %158 : vector<8x32xf32> to vector<8x32xbf16>
    %cst_58 = arith.constant dense<0.000000e+00> : vector<8x128xf32>
    %178 = tpu.matmul %177, %6, %cst_58 {dimension_numbers = #tpu.dot_dimension_numbers<[1], [0], [0], [1], [0, 0, 1, 1], [], []>} : vector<8x32xbf16>, vector<32x128xbf16>, vector<8x128xf32> -> vector<8x128xf32>
    %179 = arith.addf %176, %178 : vector<8x128xf32>
    %180 = vector.extract_strided_slice %173 {offsets = [0, 0], sizes = [8, 96], strides = [1, 1]} : vector<8x128xf32> to vector<8x96xf32>
    %181 = arith.negf %180 : vector<8x96xf32>
    %182 = math.exp %181 : vector<8x96xf32>
    %cst_59 = arith.constant 1.000000e+00 : f32
    %183 = vector.broadcast %cst_59 : f32 to vector<8x96xf32>
    %184 = arith.addf %183, %182 : vector<8x96xf32>
    %185 = arith.divf %183, %184 : vector<8x96xf32>
    %186 = vector.extract_strided_slice %185 {offsets = [0, 0], sizes = [8, 32], strides = [1, 1]} : vector<8x96xf32> to vector<8x32xf32>
    %187 = vector.extract_strided_slice %185 {offsets = [0, 32], sizes = [8, 32], strides = [1, 1]} : vector<8x96xf32> to vector<8x32xf32>
    %188 = vector.extract_strided_slice %185 {offsets = [0, 64], sizes = [8, 32], strides = [1, 1]} : vector<8x96xf32> to vector<8x32xf32>
    %189 = vector.extract_strided_slice %173 {offsets = [0, 96], sizes = [8, 32], strides = [1, 1]} : vector<8x128xf32> to vector<8x32xf32>
    %190 = math.tanh %189 : vector<8x32xf32>
    %191 = arith.mulf %187, %140 : vector<8x32xf32>
    %192 = arith.mulf %186, %190 : vector<8x32xf32>
    %193 = arith.addf %191, %192 : vector<8x32xf32>
    %194 = math.tanh %193 : vector<8x32xf32>
    %195 = arith.mulf %188, %194 : vector<8x32xf32>
    %196 = vector.extract_strided_slice %179 {offsets = [0, 0], sizes = [8, 96], strides = [1, 1]} : vector<8x128xf32> to vector<8x96xf32>
    %197 = arith.negf %196 : vector<8x96xf32>
    %198 = math.exp %197 : vector<8x96xf32>
    %cst_60 = arith.constant 1.000000e+00 : f32
    %199 = vector.broadcast %cst_60 : f32 to vector<8x96xf32>
    %200 = arith.addf %199, %198 : vector<8x96xf32>
    %201 = arith.divf %199, %200 : vector<8x96xf32>
    %202 = vector.extract_strided_slice %201 {offsets = [0, 0], sizes = [8, 32], strides = [1, 1]} : vector<8x96xf32> to vector<8x32xf32>
    %203 = vector.extract_strided_slice %201 {offsets = [0, 32], sizes = [8, 32], strides = [1, 1]} : vector<8x96xf32> to vector<8x32xf32>
    %204 = vector.extract_strided_slice %201 {offsets = [0, 64], sizes = [8, 32], strides = [1, 1]} : vector<8x96xf32> to vector<8x32xf32>
    %205 = vector.extract_strided_slice %179 {offsets = [0, 96], sizes = [8, 32], strides = [1, 1]} : vector<8x128xf32> to vector<8x32xf32>
    %206 = math.tanh %205 : vector<8x32xf32>
    %207 = arith.mulf %203, %156 : vector<8x32xf32>
    %208 = arith.mulf %202, %206 : vector<8x32xf32>
    %209 = arith.addf %207, %208 : vector<8x32xf32>
    %210 = math.tanh %209 : vector<8x32xf32>
    %211 = arith.mulf %204, %210 : vector<8x32xf32>
    %212 = arith.index_cast %c3_i32 : i32 to index
    %c0_61 = arith.constant 0 : index
    %c0_62 = arith.constant 0 : index
    %213 = vector.load %arg16[%212, %c0_61, %c0_62] : memref<8x8x32xf32, #tpu.memory_space<vmem>>, vector<1x8x32xf32>
    %214 = vector.shape_cast %213 : vector<1x8x32xf32> to vector<8x32xf32>
    %215 = vector.shape_cast %195 : vector<8x32xf32> to vector<1x8x32xf32>
    tpu.vector_store %arg16[%212, %c0_61, %c0_62], %215 {strides = array<i32>} : memref<8x8x32xf32, #tpu.memory_space<vmem>>, vector<1x8x32xf32>,
    %216 = arith.index_cast %167 : i32 to index
    %c0_63 = arith.constant 0 : index
    %c0_64 = arith.constant 0 : index
    %217 = vector.load %arg17[%216, %c0_63, %c0_64] : memref<8x8x32xf32, #tpu.memory_space<vmem>>, vector<1x8x32xf32>
    %218 = vector.shape_cast %217 : vector<1x8x32xf32> to vector<8x32xf32>
    %219 = vector.shape_cast %211 : vector<8x32xf32> to vector<1x8x32xf32>
    tpu.vector_store %arg17[%216, %c0_63, %c0_64], %219 {strides = array<i32>} : memref<8x8x32xf32, #tpu.memory_space<vmem>>, vector<1x8x32xf32>,
    %c4_i32 = arith.constant 4 : i32
    %c7_i32_65 = arith.constant 7 : i32
    %220 = arith.subi %c7_i32_65, %c4_i32 : i32
    %221 = arith.index_cast %c4_i32 : i32 to index
    %c0_66 = arith.constant 0 : index
    %c0_67 = arith.constant 0 : index
    %222 = vector.load %arg18[%221, %c0_66, %c0_67] : memref<8x8x128xf32, #tpu.memory_space<vmem>>, vector<1x8x128xf32>
    %223 = vector.shape_cast %222 : vector<1x8x128xf32> to vector<8x128xf32>
    %224 = arith.truncf %195 : vector<8x32xf32> to vector<8x32xbf16>
    %cst_68 = arith.constant dense<0.000000e+00> : vector<8x128xf32>
    %225 = tpu.matmul %224, %5, %cst_68 {dimension_numbers = #tpu.dot_dimension_numbers<[1], [0], [0], [1], [0, 0, 1, 1], [], []>} : vector<8x32xbf16>, vector<32x128xbf16>, vector<8x128xf32> -> vector<8x128xf32>
    %226 = arith.addf %223, %225 : vector<8x128xf32>
    %227 = arith.index_cast %220 : i32 to index
    %c0_69 = arith.constant 0 : index
    %c0_70 = arith.constant 0 : index
    %228 = vector.load %arg19[%227, %c0_69, %c0_70] : memref<8x8x128xf32, #tpu.memory_space<vmem>>, vector<1x8x128xf32>
    %229 = vector.shape_cast %228 : vector<1x8x128xf32> to vector<8x128xf32>
    %230 = arith.truncf %211 : vector<8x32xf32> to vector<8x32xbf16>
    %cst_71 = arith.constant dense<0.000000e+00> : vector<8x128xf32>
    %231 = tpu.matmul %230, %6, %cst_71 {dimension_numbers = #tpu.dot_dimension_numbers<[1], [0], [0], [1], [0, 0, 1, 1], [], []>} : vector<8x32xbf16>, vector<32x128xbf16>, vector<8x128xf32> -> vector<8x128xf32>
    %232 = arith.addf %229, %231 : vector<8x128xf32>
    %233 = vector.extract_strided_slice %226 {offsets = [0, 0], sizes = [8, 96], strides = [1, 1]} : vector<8x128xf32> to vector<8x96xf32>
    %234 = arith.negf %233 : vector<8x96xf32>
    %235 = math.exp %234 : vector<8x96xf32>
    %cst_72 = arith.constant 1.000000e+00 : f32
    %236 = vector.broadcast %cst_72 : f32 to vector<8x96xf32>
    %237 = arith.addf %236, %235 : vector<8x96xf32>
    %238 = arith.divf %236, %237 : vector<8x96xf32>
    %239 = vector.extract_strided_slice %238 {offsets = [0, 0], sizes = [8, 32], strides = [1, 1]} : vector<8x96xf32> to vector<8x32xf32>
    %240 = vector.extract_strided_slice %238 {offsets = [0, 32], sizes = [8, 32], strides = [1, 1]} : vector<8x96xf32> to vector<8x32xf32>
    %241 = vector.extract_strided_slice %238 {offsets = [0, 64], sizes = [8, 32], strides = [1, 1]} : vector<8x96xf32> to vector<8x32xf32>
    %242 = vector.extract_strided_slice %226 {offsets = [0, 96], sizes = [8, 32], strides = [1, 1]} : vector<8x128xf32> to vector<8x32xf32>
    %243 = math.tanh %242 : vector<8x32xf32>
    %244 = arith.mulf %240, %193 : vector<8x32xf32>
    %245 = arith.mulf %239, %243 : vector<8x32xf32>
    %246 = arith.addf %244, %245 : vector<8x32xf32>
    %247 = math.tanh %246 : vector<8x32xf32>
    %248 = arith.mulf %241, %247 : vector<8x32xf32>
    %249 = vector.extract_strided_slice %232 {offsets = [0, 0], sizes = [8, 96], strides = [1, 1]} : vector<8x128xf32> to vector<8x96xf32>
    %250 = arith.negf %249 : vector<8x96xf32>
    %251 = math.exp %250 : vector<8x96xf32>
    %cst_73 = arith.constant 1.000000e+00 : f32
    %252 = vector.broadcast %cst_73 : f32 to vector<8x96xf32>
    %253 = arith.addf %252, %251 : vector<8x96xf32>
    %254 = arith.divf %252, %253 : vector<8x96xf32>
    %255 = vector.extract_strided_slice %254 {offsets = [0, 0], sizes = [8, 32], strides = [1, 1]} : vector<8x96xf32> to vector<8x32xf32>
    %256 = vector.extract_strided_slice %254 {offsets = [0, 32], sizes = [8, 32], strides = [1, 1]} : vector<8x96xf32> to vector<8x32xf32>
    %257 = vector.extract_strided_slice %254 {offsets = [0, 64], sizes = [8, 32], strides = [1, 1]} : vector<8x96xf32> to vector<8x32xf32>
    %258 = vector.extract_strided_slice %232 {offsets = [0, 96], sizes = [8, 32], strides = [1, 1]} : vector<8x128xf32> to vector<8x32xf32>
    %259 = math.tanh %258 : vector<8x32xf32>
    %260 = arith.mulf %256, %209 : vector<8x32xf32>
    %261 = arith.mulf %255, %259 : vector<8x32xf32>
    %262 = arith.addf %260, %261 : vector<8x32xf32>
    %263 = math.tanh %262 : vector<8x32xf32>
    %264 = arith.mulf %257, %263 : vector<8x32xf32>
    %265 = arith.index_cast %c4_i32 : i32 to index
    %c0_74 = arith.constant 0 : index
    %c0_75 = arith.constant 0 : index
    %266 = vector.load %arg16[%265, %c0_74, %c0_75] : memref<8x8x32xf32, #tpu.memory_space<vmem>>, vector<1x8x32xf32>
    %267 = vector.shape_cast %266 : vector<1x8x32xf32> to vector<8x32xf32>
    %268 = vector.shape_cast %248 : vector<8x32xf32> to vector<1x8x32xf32>
    tpu.vector_store %arg16[%265, %c0_74, %c0_75], %268 {strides = array<i32>} : memref<8x8x32xf32, #tpu.memory_space<vmem>>, vector<1x8x32xf32>,
    %269 = arith.index_cast %220 : i32 to index
    %c0_76 = arith.constant 0 : index
    %c0_77 = arith.constant 0 : index
    %270 = vector.load %arg17[%269, %c0_76, %c0_77] : memref<8x8x32xf32, #tpu.memory_space<vmem>>, vector<1x8x32xf32>
    %271 = vector.shape_cast %270 : vector<1x8x32xf32> to vector<8x32xf32>
    %272 = vector.shape_cast %264 : vector<8x32xf32> to vector<1x8x32xf32>
    tpu.vector_store %arg17[%269, %c0_76, %c0_77], %272 {strides = array<i32>} : memref<8x8x32xf32, #tpu.memory_space<vmem>>, vector<1x8x32xf32>,
    %c5_i32 = arith.constant 5 : i32
    %c7_i32_78 = arith.constant 7 : i32
    %273 = arith.subi %c7_i32_78, %c5_i32 : i32
    %274 = arith.index_cast %c5_i32 : i32 to index
    %c0_79 = arith.constant 0 : index
    %c0_80 = arith.constant 0 : index
    %275 = vector.load %arg18[%274, %c0_79, %c0_80] : memref<8x8x128xf32, #tpu.memory_space<vmem>>, vector<1x8x128xf32>
    %276 = vector.shape_cast %275 : vector<1x8x128xf32> to vector<8x128xf32>
    %277 = arith.truncf %248 : vector<8x32xf32> to vector<8x32xbf16>
    %cst_81 = arith.constant dense<0.000000e+00> : vector<8x128xf32>
    %278 = tpu.matmul %277, %5, %cst_81 {dimension_numbers = #tpu.dot_dimension_numbers<[1], [0], [0], [1], [0, 0, 1, 1], [], []>} : vector<8x32xbf16>, vector<32x128xbf16>, vector<8x128xf32> -> vector<8x128xf32>
    %279 = arith.addf %276, %278 : vector<8x128xf32>
    %280 = arith.index_cast %273 : i32 to index
    %c0_82 = arith.constant 0 : index
    %c0_83 = arith.constant 0 : index
    %281 = vector.load %arg19[%280, %c0_82, %c0_83] : memref<8x8x128xf32, #tpu.memory_space<vmem>>, vector<1x8x128xf32>
    %282 = vector.shape_cast %281 : vector<1x8x128xf32> to vector<8x128xf32>
    %283 = arith.truncf %264 : vector<8x32xf32> to vector<8x32xbf16>
    %cst_84 = arith.constant dense<0.000000e+00> : vector<8x128xf32>
    %284 = tpu.matmul %283, %6, %cst_84 {dimension_numbers = #tpu.dot_dimension_numbers<[1], [0], [0], [1], [0, 0, 1, 1], [], []>} : vector<8x32xbf16>, vector<32x128xbf16>, vector<8x128xf32> -> vector<8x128xf32>
    %285 = arith.addf %282, %284 : vector<8x128xf32>
    %286 = vector.extract_strided_slice %279 {offsets = [0, 0], sizes = [8, 96], strides = [1, 1]} : vector<8x128xf32> to vector<8x96xf32>
    %287 = arith.negf %286 : vector<8x96xf32>
    %288 = math.exp %287 : vector<8x96xf32>
    %cst_85 = arith.constant 1.000000e+00 : f32
    %289 = vector.broadcast %cst_85 : f32 to vector<8x96xf32>
    %290 = arith.addf %289, %288 : vector<8x96xf32>
    %291 = arith.divf %289, %290 : vector<8x96xf32>
    %292 = vector.extract_strided_slice %291 {offsets = [0, 0], sizes = [8, 32], strides = [1, 1]} : vector<8x96xf32> to vector<8x32xf32>
    %293 = vector.extract_strided_slice %291 {offsets = [0, 32], sizes = [8, 32], strides = [1, 1]} : vector<8x96xf32> to vector<8x32xf32>
    %294 = vector.extract_strided_slice %291 {offsets = [0, 64], sizes = [8, 32], strides = [1, 1]} : vector<8x96xf32> to vector<8x32xf32>
    %295 = vector.extract_strided_slice %279 {offsets = [0, 96], sizes = [8, 32], strides = [1, 1]} : vector<8x128xf32> to vector<8x32xf32>
    %296 = math.tanh %295 : vector<8x32xf32>
    %297 = arith.mulf %293, %246 : vector<8x32xf32>
    %298 = arith.mulf %292, %296 : vector<8x32xf32>
    %299 = arith.addf %297, %298 : vector<8x32xf32>
    %300 = math.tanh %299 : vector<8x32xf32>
    %301 = arith.mulf %294, %300 : vector<8x32xf32>
    %302 = vector.extract_strided_slice %285 {offsets = [0, 0], sizes = [8, 96], strides = [1, 1]} : vector<8x128xf32> to vector<8x96xf32>
    %303 = arith.negf %302 : vector<8x96xf32>
    %304 = math.exp %303 : vector<8x96xf32>
    %cst_86 = arith.constant 1.000000e+00 : f32
    %305 = vector.broadcast %cst_86 : f32 to vector<8x96xf32>
    %306 = arith.addf %305, %304 : vector<8x96xf32>
    %307 = arith.divf %305, %306 : vector<8x96xf32>
    %308 = vector.extract_strided_slice %307 {offsets = [0, 0], sizes = [8, 32], strides = [1, 1]} : vector<8x96xf32> to vector<8x32xf32>
    %309 = vector.extract_strided_slice %307 {offsets = [0, 32], sizes = [8, 32], strides = [1, 1]} : vector<8x96xf32> to vector<8x32xf32>
    %310 = vector.extract_strided_slice %307 {offsets = [0, 64], sizes = [8, 32], strides = [1, 1]} : vector<8x96xf32> to vector<8x32xf32>
    %311 = vector.extract_strided_slice %285 {offsets = [0, 96], sizes = [8, 32], strides = [1, 1]} : vector<8x128xf32> to vector<8x32xf32>
    %312 = math.tanh %311 : vector<8x32xf32>
    %313 = arith.mulf %309, %262 : vector<8x32xf32>
    %314 = arith.mulf %308, %312 : vector<8x32xf32>
    %315 = arith.addf %313, %314 : vector<8x32xf32>
    %316 = math.tanh %315 : vector<8x32xf32>
    %317 = arith.mulf %310, %316 : vector<8x32xf32>
    %318 = arith.index_cast %c5_i32 : i32 to index
    %c0_87 = arith.constant 0 : index
    %c0_88 = arith.constant 0 : index
    %319 = vector.load %arg16[%318, %c0_87, %c0_88] : memref<8x8x32xf32, #tpu.memory_space<vmem>>, vector<1x8x32xf32>
    %320 = vector.shape_cast %319 : vector<1x8x32xf32> to vector<8x32xf32>
    %321 = vector.shape_cast %301 : vector<8x32xf32> to vector<1x8x32xf32>
    tpu.vector_store %arg16[%318, %c0_87, %c0_88], %321 {strides = array<i32>} : memref<8x8x32xf32, #tpu.memory_space<vmem>>, vector<1x8x32xf32>,
    %322 = arith.index_cast %273 : i32 to index
    %c0_89 = arith.constant 0 : index
    %c0_90 = arith.constant 0 : index
    %323 = vector.load %arg17[%322, %c0_89, %c0_90] : memref<8x8x32xf32, #tpu.memory_space<vmem>>, vector<1x8x32xf32>
    %324 = vector.shape_cast %323 : vector<1x8x32xf32> to vector<8x32xf32>
    %325 = vector.shape_cast %317 : vector<8x32xf32> to vector<1x8x32xf32>
    tpu.vector_store %arg17[%322, %c0_89, %c0_90], %325 {strides = array<i32>} : memref<8x8x32xf32, #tpu.memory_space<vmem>>, vector<1x8x32xf32>,
    %c6_i32 = arith.constant 6 : i32
    %c7_i32_91 = arith.constant 7 : i32
    %326 = arith.subi %c7_i32_91, %c6_i32 : i32
    %327 = arith.index_cast %c6_i32 : i32 to index
    %c0_92 = arith.constant 0 : index
    %c0_93 = arith.constant 0 : index
    %328 = vector.load %arg18[%327, %c0_92, %c0_93] : memref<8x8x128xf32, #tpu.memory_space<vmem>>, vector<1x8x128xf32>
    %329 = vector.shape_cast %328 : vector<1x8x128xf32> to vector<8x128xf32>
    %330 = arith.truncf %301 : vector<8x32xf32> to vector<8x32xbf16>
    %cst_94 = arith.constant dense<0.000000e+00> : vector<8x128xf32>
    %331 = tpu.matmul %330, %5, %cst_94 {dimension_numbers = #tpu.dot_dimension_numbers<[1], [0], [0], [1], [0, 0, 1, 1], [], []>} : vector<8x32xbf16>, vector<32x128xbf16>, vector<8x128xf32> -> vector<8x128xf32>
    %332 = arith.addf %329, %331 : vector<8x128xf32>
    %333 = arith.index_cast %326 : i32 to index
    %c0_95 = arith.constant 0 : index
    %c0_96 = arith.constant 0 : index
    %334 = vector.load %arg19[%333, %c0_95, %c0_96] : memref<8x8x128xf32, #tpu.memory_space<vmem>>, vector<1x8x128xf32>
    %335 = vector.shape_cast %334 : vector<1x8x128xf32> to vector<8x128xf32>
    %336 = arith.truncf %317 : vector<8x32xf32> to vector<8x32xbf16>
    %cst_97 = arith.constant dense<0.000000e+00> : vector<8x128xf32>
    %337 = tpu.matmul %336, %6, %cst_97 {dimension_numbers = #tpu.dot_dimension_numbers<[1], [0], [0], [1], [0, 0, 1, 1], [], []>} : vector<8x32xbf16>, vector<32x128xbf16>, vector<8x128xf32> -> vector<8x128xf32>
    %338 = arith.addf %335, %337 : vector<8x128xf32>
    %339 = vector.extract_strided_slice %332 {offsets = [0, 0], sizes = [8, 96], strides = [1, 1]} : vector<8x128xf32> to vector<8x96xf32>
    %340 = arith.negf %339 : vector<8x96xf32>
    %341 = math.exp %340 : vector<8x96xf32>
    %cst_98 = arith.constant 1.000000e+00 : f32
    %342 = vector.broadcast %cst_98 : f32 to vector<8x96xf32>
    %343 = arith.addf %342, %341 : vector<8x96xf32>
    %344 = arith.divf %342, %343 : vector<8x96xf32>
    %345 = vector.extract_strided_slice %344 {offsets = [0, 0], sizes = [8, 32], strides = [1, 1]} : vector<8x96xf32> to vector<8x32xf32>
    %346 = vector.extract_strided_slice %344 {offsets = [0, 32], sizes = [8, 32], strides = [1, 1]} : vector<8x96xf32> to vector<8x32xf32>
    %347 = vector.extract_strided_slice %344 {offsets = [0, 64], sizes = [8, 32], strides = [1, 1]} : vector<8x96xf32> to vector<8x32xf32>
    %348 = vector.extract_strided_slice %332 {offsets = [0, 96], sizes = [8, 32], strides = [1, 1]} : vector<8x128xf32> to vector<8x32xf32>
    %349 = math.tanh %348 : vector<8x32xf32>
    %350 = arith.mulf %346, %299 : vector<8x32xf32>
    %351 = arith.mulf %345, %349 : vector<8x32xf32>
    %352 = arith.addf %350, %351 : vector<8x32xf32>
    %353 = math.tanh %352 : vector<8x32xf32>
    %354 = arith.mulf %347, %353 : vector<8x32xf32>
    %355 = vector.extract_strided_slice %338 {offsets = [0, 0], sizes = [8, 96], strides = [1, 1]} : vector<8x128xf32> to vector<8x96xf32>
    %356 = arith.negf %355 : vector<8x96xf32>
    %357 = math.exp %356 : vector<8x96xf32>
    %cst_99 = arith.constant 1.000000e+00 : f32
    %358 = vector.broadcast %cst_99 : f32 to vector<8x96xf32>
    %359 = arith.addf %358, %357 : vector<8x96xf32>
    %360 = arith.divf %358, %359 : vector<8x96xf32>
    %361 = vector.extract_strided_slice %360 {offsets = [0, 0], sizes = [8, 32], strides = [1, 1]} : vector<8x96xf32> to vector<8x32xf32>
    %362 = vector.extract_strided_slice %360 {offsets = [0, 32], sizes = [8, 32], strides = [1, 1]} : vector<8x96xf32> to vector<8x32xf32>
    %363 = vector.extract_strided_slice %360 {offsets = [0, 64], sizes = [8, 32], strides = [1, 1]} : vector<8x96xf32> to vector<8x32xf32>
    %364 = vector.extract_strided_slice %338 {offsets = [0, 96], sizes = [8, 32], strides = [1, 1]} : vector<8x128xf32> to vector<8x32xf32>
    %365 = math.tanh %364 : vector<8x32xf32>
    %366 = arith.mulf %362, %315 : vector<8x32xf32>
    %367 = arith.mulf %361, %365 : vector<8x32xf32>
    %368 = arith.addf %366, %367 : vector<8x32xf32>
    %369 = math.tanh %368 : vector<8x32xf32>
    %370 = arith.mulf %363, %369 : vector<8x32xf32>
    %371 = arith.index_cast %c6_i32 : i32 to index
    %c0_100 = arith.constant 0 : index
    %c0_101 = arith.constant 0 : index
    %372 = vector.load %arg16[%371, %c0_100, %c0_101] : memref<8x8x32xf32, #tpu.memory_space<vmem>>, vector<1x8x32xf32>
    %373 = vector.shape_cast %372 : vector<1x8x32xf32> to vector<8x32xf32>
    %374 = vector.shape_cast %354 : vector<8x32xf32> to vector<1x8x32xf32>
    tpu.vector_store %arg16[%371, %c0_100, %c0_101], %374 {strides = array<i32>} : memref<8x8x32xf32, #tpu.memory_space<vmem>>, vector<1x8x32xf32>,
    %375 = arith.index_cast %326 : i32 to index
    %c0_102 = arith.constant 0 : index
    %c0_103 = arith.constant 0 : index
    %376 = vector.load %arg17[%375, %c0_102, %c0_103] : memref<8x8x32xf32, #tpu.memory_space<vmem>>, vector<1x8x32xf32>
    %377 = vector.shape_cast %376 : vector<1x8x32xf32> to vector<8x32xf32>
    %378 = vector.shape_cast %370 : vector<8x32xf32> to vector<1x8x32xf32>
    tpu.vector_store %arg17[%375, %c0_102, %c0_103], %378 {strides = array<i32>} : memref<8x8x32xf32, #tpu.memory_space<vmem>>, vector<1x8x32xf32>,
    %c7_i32_104 = arith.constant 7 : i32
    %c7_i32_105 = arith.constant 7 : i32
    %379 = arith.subi %c7_i32_105, %c7_i32_104 : i32
    %380 = arith.index_cast %c7_i32_104 : i32 to index
    %c0_106 = arith.constant 0 : index
    %c0_107 = arith.constant 0 : index
    %381 = vector.load %arg18[%380, %c0_106, %c0_107] : memref<8x8x128xf32, #tpu.memory_space<vmem>>, vector<1x8x128xf32>
    %382 = vector.shape_cast %381 : vector<1x8x128xf32> to vector<8x128xf32>
    %383 = arith.truncf %354 : vector<8x32xf32> to vector<8x32xbf16>
    %cst_108 = arith.constant dense<0.000000e+00> : vector<8x128xf32>
    %384 = tpu.matmul %383, %5, %cst_108 {dimension_numbers = #tpu.dot_dimension_numbers<[1], [0], [0], [1], [0, 0, 1, 1], [], []>} : vector<8x32xbf16>, vector<32x128xbf16>, vector<8x128xf32> -> vector<8x128xf32>
    %385 = arith.addf %382, %384 : vector<8x128xf32>
    %386 = arith.index_cast %379 : i32 to index
    %c0_109 = arith.constant 0 : index
    %c0_110 = arith.constant 0 : index
    %387 = vector.load %arg19[%386, %c0_109, %c0_110] : memref<8x8x128xf32, #tpu.memory_space<vmem>>, vector<1x8x128xf32>
    %388 = vector.shape_cast %387 : vector<1x8x128xf32> to vector<8x128xf32>
    %389 = arith.truncf %370 : vector<8x32xf32> to vector<8x32xbf16>
    %cst_111 = arith.constant dense<0.000000e+00> : vector<8x128xf32>
    %390 = tpu.matmul %389, %6, %cst_111 {dimension_numbers = #tpu.dot_dimension_numbers<[1], [0], [0], [1], [0, 0, 1, 1], [], []>} : vector<8x32xbf16>, vector<32x128xbf16>, vector<8x128xf32> -> vector<8x128xf32>
    %391 = arith.addf %388, %390 : vector<8x128xf32>
    %392 = vector.extract_strided_slice %385 {offsets = [0, 0], sizes = [8, 96], strides = [1, 1]} : vector<8x128xf32> to vector<8x96xf32>
    %393 = arith.negf %392 : vector<8x96xf32>
    %394 = math.exp %393 : vector<8x96xf32>
    %cst_112 = arith.constant 1.000000e+00 : f32
    %395 = vector.broadcast %cst_112 : f32 to vector<8x96xf32>
    %396 = arith.addf %395, %394 : vector<8x96xf32>
    %397 = arith.divf %395, %396 : vector<8x96xf32>
    %398 = vector.extract_strided_slice %397 {offsets = [0, 0], sizes = [8, 32], strides = [1, 1]} : vector<8x96xf32> to vector<8x32xf32>
    %399 = vector.extract_strided_slice %397 {offsets = [0, 32], sizes = [8, 32], strides = [1, 1]} : vector<8x96xf32> to vector<8x32xf32>
    %400 = vector.extract_strided_slice %397 {offsets = [0, 64], sizes = [8, 32], strides = [1, 1]} : vector<8x96xf32> to vector<8x32xf32>
    %401 = vector.extract_strided_slice %385 {offsets = [0, 96], sizes = [8, 32], strides = [1, 1]} : vector<8x128xf32> to vector<8x32xf32>
    %402 = math.tanh %401 : vector<8x32xf32>
    %403 = arith.mulf %399, %352 : vector<8x32xf32>
    %404 = arith.mulf %398, %402 : vector<8x32xf32>
    %405 = arith.addf %403, %404 : vector<8x32xf32>
    %406 = math.tanh %405 : vector<8x32xf32>
    %407 = arith.mulf %400, %406 : vector<8x32xf32>
    %408 = vector.extract_strided_slice %391 {offsets = [0, 0], sizes = [8, 96], strides = [1, 1]} : vector<8x128xf32> to vector<8x96xf32>
    %409 = arith.negf %408 : vector<8x96xf32>
    %410 = math.exp %409 : vector<8x96xf32>
    %cst_113 = arith.constant 1.000000e+00 : f32
    %411 = vector.broadcast %cst_113 : f32 to vector<8x96xf32>
    %412 = arith.addf %411, %410 : vector<8x96xf32>
    %413 = arith.divf %411, %412 : vector<8x96xf32>
    %414 = vector.extract_strided_slice %413 {offsets = [0, 0], sizes = [8, 32], strides = [1, 1]} : vector<8x96xf32> to vector<8x32xf32>
    %415 = vector.extract_strided_slice %413 {offsets = [0, 32], sizes = [8, 32], strides = [1, 1]} : vector<8x96xf32> to vector<8x32xf32>
    %416 = vector.extract_strided_slice %413 {offsets = [0, 64], sizes = [8, 32], strides = [1, 1]} : vector<8x96xf32> to vector<8x32xf32>
    %417 = vector.extract_strided_slice %391 {offsets = [0, 96], sizes = [8, 32], strides = [1, 1]} : vector<8x128xf32> to vector<8x32xf32>
    %418 = math.tanh %417 : vector<8x32xf32>
    %419 = arith.mulf %415, %368 : vector<8x32xf32>
    %420 = arith.mulf %414, %418 : vector<8x32xf32>
    %421 = arith.addf %419, %420 : vector<8x32xf32>
    %422 = math.tanh %421 : vector<8x32xf32>
    %423 = arith.mulf %416, %422 : vector<8x32xf32>
    %424 = arith.index_cast %c7_i32_104 : i32 to index
    %c0_114 = arith.constant 0 : index
    %c0_115 = arith.constant 0 : index
    %425 = vector.load %arg16[%424, %c0_114, %c0_115] : memref<8x8x32xf32, #tpu.memory_space<vmem>>, vector<1x8x32xf32>
    %426 = vector.shape_cast %425 : vector<1x8x32xf32> to vector<8x32xf32>
    %427 = vector.shape_cast %407 : vector<8x32xf32> to vector<1x8x32xf32>
    tpu.vector_store %arg16[%424, %c0_114, %c0_115], %427 {strides = array<i32>} : memref<8x8x32xf32, #tpu.memory_space<vmem>>, vector<1x8x32xf32>,
    %428 = arith.index_cast %379 : i32 to index
    %c0_116 = arith.constant 0 : index
    %c0_117 = arith.constant 0 : index
    %429 = vector.load %arg17[%428, %c0_116, %c0_117] : memref<8x8x32xf32, #tpu.memory_space<vmem>>, vector<1x8x32xf32>
    %430 = vector.shape_cast %429 : vector<1x8x32xf32> to vector<8x32xf32>
    %431 = vector.shape_cast %423 : vector<8x32xf32> to vector<1x8x32xf32>
    tpu.vector_store %arg17[%428, %c0_116, %c0_117], %431 {strides = array<i32>} : memref<8x8x32xf32, #tpu.memory_space<vmem>>, vector<1x8x32xf32>,
    %c8_i32_118 = arith.constant 8 : i32
    %c0_119 = arith.constant 0 : index
    %c0_120 = arith.constant 0 : index
    %432 = vector.load %arg9[%c0_119, %c0_120] : memref<1x128xf32, #tpu.memory_space<vmem>>, vector<1x128xf32>
    %c0_121 = arith.constant 0 : index
    %c0_122 = arith.constant 0 : index
    %433 = vector.load %arg12[%c0_121, %c0_122] : memref<1x128xf32, #tpu.memory_space<vmem>>, vector<1x128xf32>
    %c0_123 = arith.constant 0 : index
    %c0_124 = arith.constant 0 : index
    %434 = vector.load %arg7[%c0_123, %c0_124] : memref<64x128xbf16, #tpu.memory_space<vmem>>, vector<32x128xbf16>
    %c32 = arith.constant 32 : index
    %c0_125 = arith.constant 0 : index
    %435 = vector.load %arg7[%c32, %c0_125] : memref<64x128xbf16, #tpu.memory_space<vmem>>, vector<32x128xbf16>
    %c0_126 = arith.constant 0 : index
    %c0_127 = arith.constant 0 : index
    %436 = vector.load %arg10[%c0_126, %c0_127] : memref<64x128xbf16, #tpu.memory_space<vmem>>, vector<32x128xbf16>
    %c32_128 = arith.constant 32 : index
    %c0_129 = arith.constant 0 : index
    %437 = vector.load %arg10[%c32_128, %c0_129] : memref<64x128xbf16, #tpu.memory_space<vmem>>, vector<32x128xbf16>
    %c0_i32_130 = arith.constant 0 : i32
    %c8_i32_131 = arith.constant 8 : i32
    %438 = arith.addi %c0_i32_130, %c8_i32_131 : i32
    %c1_i32_132 = arith.constant 1 : i32
    scf.for %arg20 = %c0_i32_130 to %438 step %c1_i32_132  : i32 {
      %c1_i32_270 = arith.constant 1 : i32
      %891 = arith.muli %arg20, %c1_i32_270 : i32
      %c0_i32_271 = arith.constant 0 : i32
      %892 = arith.addi %c0_i32_271, %891 : i32
      %893 = arith.index_cast %892 : i32 to index
      %c0_272 = arith.constant 0 : index
      %c0_273 = arith.constant 0 : index
      %894 = vector.load %arg16[%893, %c0_272, %c0_273] : memref<8x8x32xf32, #tpu.memory_space<vmem>>, vector<1x8x32xf32>
      %895 = vector.shape_cast %894 : vector<1x8x32xf32> to vector<8x32xf32>
      %896 = arith.truncf %895 : vector<8x32xf32> to vector<8x32xbf16>
      %897 = arith.index_cast %892 : i32 to index
      %c0_274 = arith.constant 0 : index
      %c0_275 = arith.constant 0 : index
      %898 = vector.load %arg17[%897, %c0_274, %c0_275] : memref<8x8x32xf32, #tpu.memory_space<vmem>>, vector<1x8x32xf32>
      %899 = vector.shape_cast %898 : vector<1x8x32xf32> to vector<8x32xf32>
      %900 = arith.truncf %899 : vector<8x32xf32> to vector<8x32xbf16>
      %cst_276 = arith.constant dense<0.000000e+00> : vector<8x128xf32>
      %901 = tpu.matmul %896, %434, %cst_276 {dimension_numbers = #tpu.dot_dimension_numbers<[1], [0], [0], [1], [0, 0, 1, 1], [], []>} : vector<8x32xbf16>, vector<32x128xbf16>, vector<8x128xf32> -> vector<8x128xf32>
      %cst_277 = arith.constant dense<0.000000e+00> : vector<8x128xf32>
      %902 = tpu.matmul %900, %435, %cst_277 {dimension_numbers = #tpu.dot_dimension_numbers<[1], [0], [0], [1], [0, 0, 1, 1], [], []>} : vector<8x32xbf16>, vector<32x128xbf16>, vector<8x128xf32> -> vector<8x128xf32>
      %903 = arith.addf %901, %902 : vector<8x128xf32>
      %904 = vector.broadcast %432 : vector<1x128xf32> to vector<8x128xf32>
      %905 = arith.addf %903, %904 : vector<8x128xf32>
      %906 = arith.index_cast %892 : i32 to index
      %c0_278 = arith.constant 0 : index
      %c0_279 = arith.constant 0 : index
      %907 = vector.load %arg18[%906, %c0_278, %c0_279] : memref<8x8x128xf32, #tpu.memory_space<vmem>>, vector<1x8x128xf32>
      %908 = vector.shape_cast %907 : vector<1x8x128xf32> to vector<8x128xf32>
      %909 = vector.shape_cast %905 : vector<8x128xf32> to vector<1x8x128xf32>
      tpu.vector_store %arg18[%906, %c0_278, %c0_279], %909 {strides = array<i32>} : memref<8x8x128xf32, #tpu.memory_space<vmem>>, vector<1x8x128xf32>,
      %cst_280 = arith.constant dense<0.000000e+00> : vector<8x128xf32>
      %910 = tpu.matmul %896, %436, %cst_280 {dimension_numbers = #tpu.dot_dimension_numbers<[1], [0], [0], [1], [0, 0, 1, 1], [], []>} : vector<8x32xbf16>, vector<32x128xbf16>, vector<8x128xf32> -> vector<8x128xf32>
      %cst_281 = arith.constant dense<0.000000e+00> : vector<8x128xf32>
      %911 = tpu.matmul %900, %437, %cst_281 {dimension_numbers = #tpu.dot_dimension_numbers<[1], [0], [0], [1], [0, 0, 1, 1], [], []>} : vector<8x32xbf16>, vector<32x128xbf16>, vector<8x128xf32> -> vector<8x128xf32>
      %912 = arith.addf %910, %911 : vector<8x128xf32>
      %913 = vector.broadcast %433 : vector<1x128xf32> to vector<8x128xf32>
      %914 = arith.addf %912, %913 : vector<8x128xf32>
      %915 = arith.index_cast %892 : i32 to index
      %c0_282 = arith.constant 0 : index
      %c0_283 = arith.constant 0 : index
      %916 = vector.load %arg19[%915, %c0_282, %c0_283] : memref<8x8x128xf32, #tpu.memory_space<vmem>>, vector<1x8x128xf32>
      %917 = vector.shape_cast %916 : vector<1x8x128xf32> to vector<8x128xf32>
      %918 = vector.shape_cast %914 : vector<8x128xf32> to vector<1x8x128xf32>
      tpu.vector_store %arg19[%915, %c0_282, %c0_283], %918 {strides = array<i32>} : memref<8x8x128xf32, #tpu.memory_space<vmem>>, vector<1x8x128xf32>,
    }
    %c8_i32_133 = arith.constant 8 : i32
    %c0_134 = arith.constant 0 : index
    %c0_135 = arith.constant 0 : index
    %439 = vector.load %arg8[%c0_134, %c0_135] : memref<32x128xbf16, #tpu.memory_space<vmem>>, vector<32x128xbf16>
    %c0_136 = arith.constant 0 : index
    %c0_137 = arith.constant 0 : index
    %440 = vector.load %arg11[%c0_136, %c0_137] : memref<32x128xbf16, #tpu.memory_space<vmem>>, vector<32x128xbf16>
    %cst_138 = arith.constant 0.000000e+00 : f32
    %441 = vector.broadcast %cst_138 : f32 to vector<8x32xf32>
    %c0_i32_139 = arith.constant 0 : i32
    %c7_i32_140 = arith.constant 7 : i32
    %442 = arith.subi %c7_i32_140, %c0_i32_139 : i32
    %443 = arith.index_cast %c0_i32_139 : i32 to index
    %c0_141 = arith.constant 0 : index
    %c0_142 = arith.constant 0 : index
    %444 = vector.load %arg18[%443, %c0_141, %c0_142] : memref<8x8x128xf32, #tpu.memory_space<vmem>>, vector<1x8x128xf32>
    %445 = vector.shape_cast %444 : vector<1x8x128xf32> to vector<8x128xf32>
    %446 = arith.truncf %441 : vector<8x32xf32> to vector<8x32xbf16>
    %cst_143 = arith.constant dense<0.000000e+00> : vector<8x128xf32>
    %447 = tpu.matmul %446, %439, %cst_143 {dimension_numbers = #tpu.dot_dimension_numbers<[1], [0], [0], [1], [0, 0, 1, 1], [], []>} : vector<8x32xbf16>, vector<32x128xbf16>, vector<8x128xf32> -> vector<8x128xf32>
    %448 = arith.addf %445, %447 : vector<8x128xf32>
    %449 = arith.index_cast %442 : i32 to index
    %c0_144 = arith.constant 0 : index
    %c0_145 = arith.constant 0 : index
    %450 = vector.load %arg19[%449, %c0_144, %c0_145] : memref<8x8x128xf32, #tpu.memory_space<vmem>>, vector<1x8x128xf32>
    %451 = vector.shape_cast %450 : vector<1x8x128xf32> to vector<8x128xf32>
    %452 = arith.truncf %441 : vector<8x32xf32> to vector<8x32xbf16>
    %cst_146 = arith.constant dense<0.000000e+00> : vector<8x128xf32>
    %453 = tpu.matmul %452, %440, %cst_146 {dimension_numbers = #tpu.dot_dimension_numbers<[1], [0], [0], [1], [0, 0, 1, 1], [], []>} : vector<8x32xbf16>, vector<32x128xbf16>, vector<8x128xf32> -> vector<8x128xf32>
    %454 = arith.addf %451, %453 : vector<8x128xf32>
    %455 = vector.extract_strided_slice %448 {offsets = [0, 0], sizes = [8, 96], strides = [1, 1]} : vector<8x128xf32> to vector<8x96xf32>
    %456 = arith.negf %455 : vector<8x96xf32>
    %457 = math.exp %456 : vector<8x96xf32>
    %cst_147 = arith.constant 1.000000e+00 : f32
    %458 = vector.broadcast %cst_147 : f32 to vector<8x96xf32>
    %459 = arith.addf %458, %457 : vector<8x96xf32>
    %460 = arith.divf %458, %459 : vector<8x96xf32>
    %461 = vector.extract_strided_slice %460 {offsets = [0, 0], sizes = [8, 32], strides = [1, 1]} : vector<8x96xf32> to vector<8x32xf32>
    %462 = vector.extract_strided_slice %460 {offsets = [0, 32], sizes = [8, 32], strides = [1, 1]} : vector<8x96xf32> to vector<8x32xf32>
    %463 = vector.extract_strided_slice %460 {offsets = [0, 64], sizes = [8, 32], strides = [1, 1]} : vector<8x96xf32> to vector<8x32xf32>
    %464 = vector.extract_strided_slice %448 {offsets = [0, 96], sizes = [8, 32], strides = [1, 1]} : vector<8x128xf32> to vector<8x32xf32>
    %465 = math.tanh %464 : vector<8x32xf32>
    %466 = arith.mulf %462, %441 : vector<8x32xf32>
    %467 = arith.mulf %461, %465 : vector<8x32xf32>
    %468 = arith.addf %466, %467 : vector<8x32xf32>
    %469 = math.tanh %468 : vector<8x32xf32>
    %470 = arith.mulf %463, %469 : vector<8x32xf32>
    %471 = vector.extract_strided_slice %454 {offsets = [0, 0], sizes = [8, 96], strides = [1, 1]} : vector<8x128xf32> to vector<8x96xf32>
    %472 = arith.negf %471 : vector<8x96xf32>
    %473 = math.exp %472 : vector<8x96xf32>
    %cst_148 = arith.constant 1.000000e+00 : f32
    %474 = vector.broadcast %cst_148 : f32 to vector<8x96xf32>
    %475 = arith.addf %474, %473 : vector<8x96xf32>
    %476 = arith.divf %474, %475 : vector<8x96xf32>
    %477 = vector.extract_strided_slice %476 {offsets = [0, 0], sizes = [8, 32], strides = [1, 1]} : vector<8x96xf32> to vector<8x32xf32>
    %478 = vector.extract_strided_slice %476 {offsets = [0, 32], sizes = [8, 32], strides = [1, 1]} : vector<8x96xf32> to vector<8x32xf32>
    %479 = vector.extract_strided_slice %476 {offsets = [0, 64], sizes = [8, 32], strides = [1, 1]} : vector<8x96xf32> to vector<8x32xf32>
    %480 = vector.extract_strided_slice %454 {offsets = [0, 96], sizes = [8, 32], strides = [1, 1]} : vector<8x128xf32> to vector<8x32xf32>
    %481 = math.tanh %480 : vector<8x32xf32>
    %482 = arith.mulf %478, %441 : vector<8x32xf32>
    %483 = arith.mulf %477, %481 : vector<8x32xf32>
    %484 = arith.addf %482, %483 : vector<8x32xf32>
    %485 = math.tanh %484 : vector<8x32xf32>
    %486 = arith.mulf %479, %485 : vector<8x32xf32>
    %487 = arith.index_cast %c0_i32_139 : i32 to index
    %c0_149 = arith.constant 0 : index
    %c0_150 = arith.constant 0 : index
    %488 = vector.load %arg16[%487, %c0_149, %c0_150] : memref<8x8x32xf32, #tpu.memory_space<vmem>>, vector<1x8x32xf32>
    %489 = vector.shape_cast %488 : vector<1x8x32xf32> to vector<8x32xf32>
    %490 = vector.shape_cast %470 : vector<8x32xf32> to vector<1x8x32xf32>
    tpu.vector_store %arg16[%487, %c0_149, %c0_150], %490 {strides = array<i32>} : memref<8x8x32xf32, #tpu.memory_space<vmem>>, vector<1x8x32xf32>,
    %491 = arith.index_cast %442 : i32 to index
    %c0_151 = arith.constant 0 : index
    %c0_152 = arith.constant 0 : index
    %492 = vector.load %arg17[%491, %c0_151, %c0_152] : memref<8x8x32xf32, #tpu.memory_space<vmem>>, vector<1x8x32xf32>
    %493 = vector.shape_cast %492 : vector<1x8x32xf32> to vector<8x32xf32>
    %494 = vector.shape_cast %486 : vector<8x32xf32> to vector<1x8x32xf32>
    tpu.vector_store %arg17[%491, %c0_151, %c0_152], %494 {strides = array<i32>} : memref<8x8x32xf32, #tpu.memory_space<vmem>>, vector<1x8x32xf32>,
    %c1_i32_153 = arith.constant 1 : i32
    %c7_i32_154 = arith.constant 7 : i32
    %495 = arith.subi %c7_i32_154, %c1_i32_153 : i32
    %496 = arith.index_cast %c1_i32_153 : i32 to index
    %c0_155 = arith.constant 0 : index
    %c0_156 = arith.constant 0 : index
    %497 = vector.load %arg18[%496, %c0_155, %c0_156] : memref<8x8x128xf32, #tpu.memory_space<vmem>>, vector<1x8x128xf32>
    %498 = vector.shape_cast %497 : vector<1x8x128xf32> to vector<8x128xf32>
    %499 = arith.truncf %470 : vector<8x32xf32> to vector<8x32xbf16>
    %cst_157 = arith.constant dense<0.000000e+00> : vector<8x128xf32>
    %500 = tpu.matmul %499, %439, %cst_157 {dimension_numbers = #tpu.dot_dimension_numbers<[1], [0], [0], [1], [0, 0, 1, 1], [], []>} : vector<8x32xbf16>, vector<32x128xbf16>, vector<8x128xf32> -> vector<8x128xf32>
    %501 = arith.addf %498, %500 : vector<8x128xf32>
    %502 = arith.index_cast %495 : i32 to index
    %c0_158 = arith.constant 0 : index
    %c0_159 = arith.constant 0 : index
    %503 = vector.load %arg19[%502, %c0_158, %c0_159] : memref<8x8x128xf32, #tpu.memory_space<vmem>>, vector<1x8x128xf32>
    %504 = vector.shape_cast %503 : vector<1x8x128xf32> to vector<8x128xf32>
    %505 = arith.truncf %486 : vector<8x32xf32> to vector<8x32xbf16>
    %cst_160 = arith.constant dense<0.000000e+00> : vector<8x128xf32>
    %506 = tpu.matmul %505, %440, %cst_160 {dimension_numbers = #tpu.dot_dimension_numbers<[1], [0], [0], [1], [0, 0, 1, 1], [], []>} : vector<8x32xbf16>, vector<32x128xbf16>, vector<8x128xf32> -> vector<8x128xf32>
    %507 = arith.addf %504, %506 : vector<8x128xf32>
    %508 = vector.extract_strided_slice %501 {offsets = [0, 0], sizes = [8, 96], strides = [1, 1]} : vector<8x128xf32> to vector<8x96xf32>
    %509 = arith.negf %508 : vector<8x96xf32>
    %510 = math.exp %509 : vector<8x96xf32>
    %cst_161 = arith.constant 1.000000e+00 : f32
    %511 = vector.broadcast %cst_161 : f32 to vector<8x96xf32>
    %512 = arith.addf %511, %510 : vector<8x96xf32>
    %513 = arith.divf %511, %512 : vector<8x96xf32>
    %514 = vector.extract_strided_slice %513 {offsets = [0, 0], sizes = [8, 32], strides = [1, 1]} : vector<8x96xf32> to vector<8x32xf32>
    %515 = vector.extract_strided_slice %513 {offsets = [0, 32], sizes = [8, 32], strides = [1, 1]} : vector<8x96xf32> to vector<8x32xf32>
    %516 = vector.extract_strided_slice %513 {offsets = [0, 64], sizes = [8, 32], strides = [1, 1]} : vector<8x96xf32> to vector<8x32xf32>
    %517 = vector.extract_strided_slice %501 {offsets = [0, 96], sizes = [8, 32], strides = [1, 1]} : vector<8x128xf32> to vector<8x32xf32>
    %518 = math.tanh %517 : vector<8x32xf32>
    %519 = arith.mulf %515, %468 : vector<8x32xf32>
    %520 = arith.mulf %514, %518 : vector<8x32xf32>
    %521 = arith.addf %519, %520 : vector<8x32xf32>
    %522 = math.tanh %521 : vector<8x32xf32>
    %523 = arith.mulf %516, %522 : vector<8x32xf32>
    %524 = vector.extract_strided_slice %507 {offsets = [0, 0], sizes = [8, 96], strides = [1, 1]} : vector<8x128xf32> to vector<8x96xf32>
    %525 = arith.negf %524 : vector<8x96xf32>
    %526 = math.exp %525 : vector<8x96xf32>
    %cst_162 = arith.constant 1.000000e+00 : f32
    %527 = vector.broadcast %cst_162 : f32 to vector<8x96xf32>
    %528 = arith.addf %527, %526 : vector<8x96xf32>
    %529 = arith.divf %527, %528 : vector<8x96xf32>
    %530 = vector.extract_strided_slice %529 {offsets = [0, 0], sizes = [8, 32], strides = [1, 1]} : vector<8x96xf32> to vector<8x32xf32>
    %531 = vector.extract_strided_slice %529 {offsets = [0, 32], sizes = [8, 32], strides = [1, 1]} : vector<8x96xf32> to vector<8x32xf32>
    %532 = vector.extract_strided_slice %529 {offsets = [0, 64], sizes = [8, 32], strides = [1, 1]} : vector<8x96xf32> to vector<8x32xf32>
    %533 = vector.extract_strided_slice %507 {offsets = [0, 96], sizes = [8, 32], strides = [1, 1]} : vector<8x128xf32> to vector<8x32xf32>
    %534 = math.tanh %533 : vector<8x32xf32>
    %535 = arith.mulf %531, %484 : vector<8x32xf32>
    %536 = arith.mulf %530, %534 : vector<8x32xf32>
    %537 = arith.addf %535, %536 : vector<8x32xf32>
    %538 = math.tanh %537 : vector<8x32xf32>
    %539 = arith.mulf %532, %538 : vector<8x32xf32>
    %540 = arith.index_cast %c1_i32_153 : i32 to index
    %c0_163 = arith.constant 0 : index
    %c0_164 = arith.constant 0 : index
    %541 = vector.load %arg16[%540, %c0_163, %c0_164] : memref<8x8x32xf32, #tpu.memory_space<vmem>>, vector<1x8x32xf32>
    %542 = vector.shape_cast %541 : vector<1x8x32xf32> to vector<8x32xf32>
    %543 = vector.shape_cast %523 : vector<8x32xf32> to vector<1x8x32xf32>
    tpu.vector_store %arg16[%540, %c0_163, %c0_164], %543 {strides = array<i32>} : memref<8x8x32xf32, #tpu.memory_space<vmem>>, vector<1x8x32xf32>,
    %544 = arith.index_cast %495 : i32 to index
    %c0_165 = arith.constant 0 : index
    %c0_166 = arith.constant 0 : index
    %545 = vector.load %arg17[%544, %c0_165, %c0_166] : memref<8x8x32xf32, #tpu.memory_space<vmem>>, vector<1x8x32xf32>
    %546 = vector.shape_cast %545 : vector<1x8x32xf32> to vector<8x32xf32>
    %547 = vector.shape_cast %539 : vector<8x32xf32> to vector<1x8x32xf32>
    tpu.vector_store %arg17[%544, %c0_165, %c0_166], %547 {strides = array<i32>} : memref<8x8x32xf32, #tpu.memory_space<vmem>>, vector<1x8x32xf32>,
    %c2_i32_167 = arith.constant 2 : i32
    %c7_i32_168 = arith.constant 7 : i32
    %548 = arith.subi %c7_i32_168, %c2_i32_167 : i32
    %549 = arith.index_cast %c2_i32_167 : i32 to index
    %c0_169 = arith.constant 0 : index
    %c0_170 = arith.constant 0 : index
    %550 = vector.load %arg18[%549, %c0_169, %c0_170] : memref<8x8x128xf32, #tpu.memory_space<vmem>>, vector<1x8x128xf32>
    %551 = vector.shape_cast %550 : vector<1x8x128xf32> to vector<8x128xf32>
    %552 = arith.truncf %523 : vector<8x32xf32> to vector<8x32xbf16>
    %cst_171 = arith.constant dense<0.000000e+00> : vector<8x128xf32>
    %553 = tpu.matmul %552, %439, %cst_171 {dimension_numbers = #tpu.dot_dimension_numbers<[1], [0], [0], [1], [0, 0, 1, 1], [], []>} : vector<8x32xbf16>, vector<32x128xbf16>, vector<8x128xf32> -> vector<8x128xf32>
    %554 = arith.addf %551, %553 : vector<8x128xf32>
    %555 = arith.index_cast %548 : i32 to index
    %c0_172 = arith.constant 0 : index
    %c0_173 = arith.constant 0 : index
    %556 = vector.load %arg19[%555, %c0_172, %c0_173] : memref<8x8x128xf32, #tpu.memory_space<vmem>>, vector<1x8x128xf32>
    %557 = vector.shape_cast %556 : vector<1x8x128xf32> to vector<8x128xf32>
    %558 = arith.truncf %539 : vector<8x32xf32> to vector<8x32xbf16>
    %cst_174 = arith.constant dense<0.000000e+00> : vector<8x128xf32>
    %559 = tpu.matmul %558, %440, %cst_174 {dimension_numbers = #tpu.dot_dimension_numbers<[1], [0], [0], [1], [0, 0, 1, 1], [], []>} : vector<8x32xbf16>, vector<32x128xbf16>, vector<8x128xf32> -> vector<8x128xf32>
    %560 = arith.addf %557, %559 : vector<8x128xf32>
    %561 = vector.extract_strided_slice %554 {offsets = [0, 0], sizes = [8, 96], strides = [1, 1]} : vector<8x128xf32> to vector<8x96xf32>
    %562 = arith.negf %561 : vector<8x96xf32>
    %563 = math.exp %562 : vector<8x96xf32>
    %cst_175 = arith.constant 1.000000e+00 : f32
    %564 = vector.broadcast %cst_175 : f32 to vector<8x96xf32>
    %565 = arith.addf %564, %563 : vector<8x96xf32>
    %566 = arith.divf %564, %565 : vector<8x96xf32>
    %567 = vector.extract_strided_slice %566 {offsets = [0, 0], sizes = [8, 32], strides = [1, 1]} : vector<8x96xf32> to vector<8x32xf32>
    %568 = vector.extract_strided_slice %566 {offsets = [0, 32], sizes = [8, 32], strides = [1, 1]} : vector<8x96xf32> to vector<8x32xf32>
    %569 = vector.extract_strided_slice %566 {offsets = [0, 64], sizes = [8, 32], strides = [1, 1]} : vector<8x96xf32> to vector<8x32xf32>
    %570 = vector.extract_strided_slice %554 {offsets = [0, 96], sizes = [8, 32], strides = [1, 1]} : vector<8x128xf32> to vector<8x32xf32>
    %571 = math.tanh %570 : vector<8x32xf32>
    %572 = arith.mulf %568, %521 : vector<8x32xf32>
    %573 = arith.mulf %567, %571 : vector<8x32xf32>
    %574 = arith.addf %572, %573 : vector<8x32xf32>
    %575 = math.tanh %574 : vector<8x32xf32>
    %576 = arith.mulf %569, %575 : vector<8x32xf32>
    %577 = vector.extract_strided_slice %560 {offsets = [0, 0], sizes = [8, 96], strides = [1, 1]} : vector<8x128xf32> to vector<8x96xf32>
    %578 = arith.negf %577 : vector<8x96xf32>
    %579 = math.exp %578 : vector<8x96xf32>
    %cst_176 = arith.constant 1.000000e+00 : f32
    %580 = vector.broadcast %cst_176 : f32 to vector<8x96xf32>
    %581 = arith.addf %580, %579 : vector<8x96xf32>
    %582 = arith.divf %580, %581 : vector<8x96xf32>
    %583 = vector.extract_strided_slice %582 {offsets = [0, 0], sizes = [8, 32], strides = [1, 1]} : vector<8x96xf32> to vector<8x32xf32>
    %584 = vector.extract_strided_slice %582 {offsets = [0, 32], sizes = [8, 32], strides = [1, 1]} : vector<8x96xf32> to vector<8x32xf32>
    %585 = vector.extract_strided_slice %582 {offsets = [0, 64], sizes = [8, 32], strides = [1, 1]} : vector<8x96xf32> to vector<8x32xf32>
    %586 = vector.extract_strided_slice %560 {offsets = [0, 96], sizes = [8, 32], strides = [1, 1]} : vector<8x128xf32> to vector<8x32xf32>
    %587 = math.tanh %586 : vector<8x32xf32>
    %588 = arith.mulf %584, %537 : vector<8x32xf32>
    %589 = arith.mulf %583, %587 : vector<8x32xf32>
    %590 = arith.addf %588, %589 : vector<8x32xf32>
    %591 = math.tanh %590 : vector<8x32xf32>
    %592 = arith.mulf %585, %591 : vector<8x32xf32>
    %593 = arith.index_cast %c2_i32_167 : i32 to index
    %c0_177 = arith.constant 0 : index
    %c0_178 = arith.constant 0 : index
    %594 = vector.load %arg16[%593, %c0_177, %c0_178] : memref<8x8x32xf32, #tpu.memory_space<vmem>>, vector<1x8x32xf32>
    %595 = vector.shape_cast %594 : vector<1x8x32xf32> to vector<8x32xf32>
    %596 = vector.shape_cast %576 : vector<8x32xf32> to vector<1x8x32xf32>
    tpu.vector_store %arg16[%593, %c0_177, %c0_178], %596 {strides = array<i32>} : memref<8x8x32xf32, #tpu.memory_space<vmem>>, vector<1x8x32xf32>,
    %597 = arith.index_cast %548 : i32 to index
    %c0_179 = arith.constant 0 : index
    %c0_180 = arith.constant 0 : index
    %598 = vector.load %arg17[%597, %c0_179, %c0_180] : memref<8x8x32xf32, #tpu.memory_space<vmem>>, vector<1x8x32xf32>
    %599 = vector.shape_cast %598 : vector<1x8x32xf32> to vector<8x32xf32>
    %600 = vector.shape_cast %592 : vector<8x32xf32> to vector<1x8x32xf32>
    tpu.vector_store %arg17[%597, %c0_179, %c0_180], %600 {strides = array<i32>} : memref<8x8x32xf32, #tpu.memory_space<vmem>>, vector<1x8x32xf32>,
    %c3_i32_181 = arith.constant 3 : i32
    %c7_i32_182 = arith.constant 7 : i32
    %601 = arith.subi %c7_i32_182, %c3_i32_181 : i32
    %602 = arith.index_cast %c3_i32_181 : i32 to index
    %c0_183 = arith.constant 0 : index
    %c0_184 = arith.constant 0 : index
    %603 = vector.load %arg18[%602, %c0_183, %c0_184] : memref<8x8x128xf32, #tpu.memory_space<vmem>>, vector<1x8x128xf32>
    %604 = vector.shape_cast %603 : vector<1x8x128xf32> to vector<8x128xf32>
    %605 = arith.truncf %576 : vector<8x32xf32> to vector<8x32xbf16>
    %cst_185 = arith.constant dense<0.000000e+00> : vector<8x128xf32>
    %606 = tpu.matmul %605, %439, %cst_185 {dimension_numbers = #tpu.dot_dimension_numbers<[1], [0], [0], [1], [0, 0, 1, 1], [], []>} : vector<8x32xbf16>, vector<32x128xbf16>, vector<8x128xf32> -> vector<8x128xf32>
    %607 = arith.addf %604, %606 : vector<8x128xf32>
    %608 = arith.index_cast %601 : i32 to index
    %c0_186 = arith.constant 0 : index
    %c0_187 = arith.constant 0 : index
    %609 = vector.load %arg19[%608, %c0_186, %c0_187] : memref<8x8x128xf32, #tpu.memory_space<vmem>>, vector<1x8x128xf32>
    %610 = vector.shape_cast %609 : vector<1x8x128xf32> to vector<8x128xf32>
    %611 = arith.truncf %592 : vector<8x32xf32> to vector<8x32xbf16>
    %cst_188 = arith.constant dense<0.000000e+00> : vector<8x128xf32>
    %612 = tpu.matmul %611, %440, %cst_188 {dimension_numbers = #tpu.dot_dimension_numbers<[1], [0], [0], [1], [0, 0, 1, 1], [], []>} : vector<8x32xbf16>, vector<32x128xbf16>, vector<8x128xf32> -> vector<8x128xf32>
    %613 = arith.addf %610, %612 : vector<8x128xf32>
    %614 = vector.extract_strided_slice %607 {offsets = [0, 0], sizes = [8, 96], strides = [1, 1]} : vector<8x128xf32> to vector<8x96xf32>
    %615 = arith.negf %614 : vector<8x96xf32>
    %616 = math.exp %615 : vector<8x96xf32>
    %cst_189 = arith.constant 1.000000e+00 : f32
    %617 = vector.broadcast %cst_189 : f32 to vector<8x96xf32>
    %618 = arith.addf %617, %616 : vector<8x96xf32>
    %619 = arith.divf %617, %618 : vector<8x96xf32>
    %620 = vector.extract_strided_slice %619 {offsets = [0, 0], sizes = [8, 32], strides = [1, 1]} : vector<8x96xf32> to vector<8x32xf32>
    %621 = vector.extract_strided_slice %619 {offsets = [0, 32], sizes = [8, 32], strides = [1, 1]} : vector<8x96xf32> to vector<8x32xf32>
    %622 = vector.extract_strided_slice %619 {offsets = [0, 64], sizes = [8, 32], strides = [1, 1]} : vector<8x96xf32> to vector<8x32xf32>
    %623 = vector.extract_strided_slice %607 {offsets = [0, 96], sizes = [8, 32], strides = [1, 1]} : vector<8x128xf32> to vector<8x32xf32>
    %624 = math.tanh %623 : vector<8x32xf32>
    %625 = arith.mulf %621, %574 : vector<8x32xf32>
    %626 = arith.mulf %620, %624 : vector<8x32xf32>
    %627 = arith.addf %625, %626 : vector<8x32xf32>
    %628 = math.tanh %627 : vector<8x32xf32>
    %629 = arith.mulf %622, %628 : vector<8x32xf32>
    %630 = vector.extract_strided_slice %613 {offsets = [0, 0], sizes = [8, 96], strides = [1, 1]} : vector<8x128xf32> to vector<8x96xf32>
    %631 = arith.negf %630 : vector<8x96xf32>
    %632 = math.exp %631 : vector<8x96xf32>
    %cst_190 = arith.constant 1.000000e+00 : f32
    %633 = vector.broadcast %cst_190 : f32 to vector<8x96xf32>
    %634 = arith.addf %633, %632 : vector<8x96xf32>
    %635 = arith.divf %633, %634 : vector<8x96xf32>
    %636 = vector.extract_strided_slice %635 {offsets = [0, 0], sizes = [8, 32], strides = [1, 1]} : vector<8x96xf32> to vector<8x32xf32>
    %637 = vector.extract_strided_slice %635 {offsets = [0, 32], sizes = [8, 32], strides = [1, 1]} : vector<8x96xf32> to vector<8x32xf32>
    %638 = vector.extract_strided_slice %635 {offsets = [0, 64], sizes = [8, 32], strides = [1, 1]} : vector<8x96xf32> to vector<8x32xf32>
    %639 = vector.extract_strided_slice %613 {offsets = [0, 96], sizes = [8, 32], strides = [1, 1]} : vector<8x128xf32> to vector<8x32xf32>
    %640 = math.tanh %639 : vector<8x32xf32>
    %641 = arith.mulf %637, %590 : vector<8x32xf32>
    %642 = arith.mulf %636, %640 : vector<8x32xf32>
    %643 = arith.addf %641, %642 : vector<8x32xf32>
    %644 = math.tanh %643 : vector<8x32xf32>
    %645 = arith.mulf %638, %644 : vector<8x32xf32>
    %646 = arith.index_cast %c3_i32_181 : i32 to index
    %c0_191 = arith.constant 0 : index
    %c0_192 = arith.constant 0 : index
    %647 = vector.load %arg16[%646, %c0_191, %c0_192] : memref<8x8x32xf32, #tpu.memory_space<vmem>>, vector<1x8x32xf32>
    %648 = vector.shape_cast %647 : vector<1x8x32xf32> to vector<8x32xf32>
    %649 = vector.shape_cast %629 : vector<8x32xf32> to vector<1x8x32xf32>
    tpu.vector_store %arg16[%646, %c0_191, %c0_192], %649 {strides = array<i32>} : memref<8x8x32xf32, #tpu.memory_space<vmem>>, vector<1x8x32xf32>,
    %650 = arith.index_cast %601 : i32 to index
    %c0_193 = arith.constant 0 : index
    %c0_194 = arith.constant 0 : index
    %651 = vector.load %arg17[%650, %c0_193, %c0_194] : memref<8x8x32xf32, #tpu.memory_space<vmem>>, vector<1x8x32xf32>
    %652 = vector.shape_cast %651 : vector<1x8x32xf32> to vector<8x32xf32>
    %653 = vector.shape_cast %645 : vector<8x32xf32> to vector<1x8x32xf32>
    tpu.vector_store %arg17[%650, %c0_193, %c0_194], %653 {strides = array<i32>} : memref<8x8x32xf32, #tpu.memory_space<vmem>>, vector<1x8x32xf32>,
    %c4_i32_195 = arith.constant 4 : i32
    %c7_i32_196 = arith.constant 7 : i32
    %654 = arith.subi %c7_i32_196, %c4_i32_195 : i32
    %655 = arith.index_cast %c4_i32_195 : i32 to index
    %c0_197 = arith.constant 0 : index
    %c0_198 = arith.constant 0 : index
    %656 = vector.load %arg18[%655, %c0_197, %c0_198] : memref<8x8x128xf32, #tpu.memory_space<vmem>>, vector<1x8x128xf32>
    %657 = vector.shape_cast %656 : vector<1x8x128xf32> to vector<8x128xf32>
    %658 = arith.truncf %629 : vector<8x32xf32> to vector<8x32xbf16>
    %cst_199 = arith.constant dense<0.000000e+00> : vector<8x128xf32>
    %659 = tpu.matmul %658, %439, %cst_199 {dimension_numbers = #tpu.dot_dimension_numbers<[1], [0], [0], [1], [0, 0, 1, 1], [], []>} : vector<8x32xbf16>, vector<32x128xbf16>, vector<8x128xf32> -> vector<8x128xf32>
    %660 = arith.addf %657, %659 : vector<8x128xf32>
    %661 = arith.index_cast %654 : i32 to index
    %c0_200 = arith.constant 0 : index
    %c0_201 = arith.constant 0 : index
    %662 = vector.load %arg19[%661, %c0_200, %c0_201] : memref<8x8x128xf32, #tpu.memory_space<vmem>>, vector<1x8x128xf32>
    %663 = vector.shape_cast %662 : vector<1x8x128xf32> to vector<8x128xf32>
    %664 = arith.truncf %645 : vector<8x32xf32> to vector<8x32xbf16>
    %cst_202 = arith.constant dense<0.000000e+00> : vector<8x128xf32>
    %665 = tpu.matmul %664, %440, %cst_202 {dimension_numbers = #tpu.dot_dimension_numbers<[1], [0], [0], [1], [0, 0, 1, 1], [], []>} : vector<8x32xbf16>, vector<32x128xbf16>, vector<8x128xf32> -> vector<8x128xf32>
    %666 = arith.addf %663, %665 : vector<8x128xf32>
    %667 = vector.extract_strided_slice %660 {offsets = [0, 0], sizes = [8, 96], strides = [1, 1]} : vector<8x128xf32> to vector<8x96xf32>
    %668 = arith.negf %667 : vector<8x96xf32>
    %669 = math.exp %668 : vector<8x96xf32>
    %cst_203 = arith.constant 1.000000e+00 : f32
    %670 = vector.broadcast %cst_203 : f32 to vector<8x96xf32>
    %671 = arith.addf %670, %669 : vector<8x96xf32>
    %672 = arith.divf %670, %671 : vector<8x96xf32>
    %673 = vector.extract_strided_slice %672 {offsets = [0, 0], sizes = [8, 32], strides = [1, 1]} : vector<8x96xf32> to vector<8x32xf32>
    %674 = vector.extract_strided_slice %672 {offsets = [0, 32], sizes = [8, 32], strides = [1, 1]} : vector<8x96xf32> to vector<8x32xf32>
    %675 = vector.extract_strided_slice %672 {offsets = [0, 64], sizes = [8, 32], strides = [1, 1]} : vector<8x96xf32> to vector<8x32xf32>
    %676 = vector.extract_strided_slice %660 {offsets = [0, 96], sizes = [8, 32], strides = [1, 1]} : vector<8x128xf32> to vector<8x32xf32>
    %677 = math.tanh %676 : vector<8x32xf32>
    %678 = arith.mulf %674, %627 : vector<8x32xf32>
    %679 = arith.mulf %673, %677 : vector<8x32xf32>
    %680 = arith.addf %678, %679 : vector<8x32xf32>
    %681 = math.tanh %680 : vector<8x32xf32>
    %682 = arith.mulf %675, %681 : vector<8x32xf32>
    %683 = vector.extract_strided_slice %666 {offsets = [0, 0], sizes = [8, 96], strides = [1, 1]} : vector<8x128xf32> to vector<8x96xf32>
    %684 = arith.negf %683 : vector<8x96xf32>
    %685 = math.exp %684 : vector<8x96xf32>
    %cst_204 = arith.constant 1.000000e+00 : f32
    %686 = vector.broadcast %cst_204 : f32 to vector<8x96xf32>
    %687 = arith.addf %686, %685 : vector<8x96xf32>
    %688 = arith.divf %686, %687 : vector<8x96xf32>
    %689 = vector.extract_strided_slice %688 {offsets = [0, 0], sizes = [8, 32], strides = [1, 1]} : vector<8x96xf32> to vector<8x32xf32>
    %690 = vector.extract_strided_slice %688 {offsets = [0, 32], sizes = [8, 32], strides = [1, 1]} : vector<8x96xf32> to vector<8x32xf32>
    %691 = vector.extract_strided_slice %688 {offsets = [0, 64], sizes = [8, 32], strides = [1, 1]} : vector<8x96xf32> to vector<8x32xf32>
    %692 = vector.extract_strided_slice %666 {offsets = [0, 96], sizes = [8, 32], strides = [1, 1]} : vector<8x128xf32> to vector<8x32xf32>
    %693 = math.tanh %692 : vector<8x32xf32>
    %694 = arith.mulf %690, %643 : vector<8x32xf32>
    %695 = arith.mulf %689, %693 : vector<8x32xf32>
    %696 = arith.addf %694, %695 : vector<8x32xf32>
    %697 = math.tanh %696 : vector<8x32xf32>
    %698 = arith.mulf %691, %697 : vector<8x32xf32>
    %699 = arith.index_cast %c4_i32_195 : i32 to index
    %c0_205 = arith.constant 0 : index
    %c0_206 = arith.constant 0 : index
    %700 = vector.load %arg16[%699, %c0_205, %c0_206] : memref<8x8x32xf32, #tpu.memory_space<vmem>>, vector<1x8x32xf32>
    %701 = vector.shape_cast %700 : vector<1x8x32xf32> to vector<8x32xf32>
    %702 = vector.shape_cast %682 : vector<8x32xf32> to vector<1x8x32xf32>
    tpu.vector_store %arg16[%699, %c0_205, %c0_206], %702 {strides = array<i32>} : memref<8x8x32xf32, #tpu.memory_space<vmem>>, vector<1x8x32xf32>,
    %703 = arith.index_cast %654 : i32 to index
    %c0_207 = arith.constant 0 : index
    %c0_208 = arith.constant 0 : index
    %704 = vector.load %arg17[%703, %c0_207, %c0_208] : memref<8x8x32xf32, #tpu.memory_space<vmem>>, vector<1x8x32xf32>
    %705 = vector.shape_cast %704 : vector<1x8x32xf32> to vector<8x32xf32>
    %706 = vector.shape_cast %698 : vector<8x32xf32> to vector<1x8x32xf32>
    tpu.vector_store %arg17[%703, %c0_207, %c0_208], %706 {strides = array<i32>} : memref<8x8x32xf32, #tpu.memory_space<vmem>>, vector<1x8x32xf32>,
    %c5_i32_209 = arith.constant 5 : i32
    %c7_i32_210 = arith.constant 7 : i32
    %707 = arith.subi %c7_i32_210, %c5_i32_209 : i32
    %708 = arith.index_cast %c5_i32_209 : i32 to index
    %c0_211 = arith.constant 0 : index
    %c0_212 = arith.constant 0 : index
    %709 = vector.load %arg18[%708, %c0_211, %c0_212] : memref<8x8x128xf32, #tpu.memory_space<vmem>>, vector<1x8x128xf32>
    %710 = vector.shape_cast %709 : vector<1x8x128xf32> to vector<8x128xf32>
    %711 = arith.truncf %682 : vector<8x32xf32> to vector<8x32xbf16>
    %cst_213 = arith.constant dense<0.000000e+00> : vector<8x128xf32>
    %712 = tpu.matmul %711, %439, %cst_213 {dimension_numbers = #tpu.dot_dimension_numbers<[1], [0], [0], [1], [0, 0, 1, 1], [], []>} : vector<8x32xbf16>, vector<32x128xbf16>, vector<8x128xf32> -> vector<8x128xf32>
    %713 = arith.addf %710, %712 : vector<8x128xf32>
    %714 = arith.index_cast %707 : i32 to index
    %c0_214 = arith.constant 0 : index
    %c0_215 = arith.constant 0 : index
    %715 = vector.load %arg19[%714, %c0_214, %c0_215] : memref<8x8x128xf32, #tpu.memory_space<vmem>>, vector<1x8x128xf32>
    %716 = vector.shape_cast %715 : vector<1x8x128xf32> to vector<8x128xf32>
    %717 = arith.truncf %698 : vector<8x32xf32> to vector<8x32xbf16>
    %cst_216 = arith.constant dense<0.000000e+00> : vector<8x128xf32>
    %718 = tpu.matmul %717, %440, %cst_216 {dimension_numbers = #tpu.dot_dimension_numbers<[1], [0], [0], [1], [0, 0, 1, 1], [], []>} : vector<8x32xbf16>, vector<32x128xbf16>, vector<8x128xf32> -> vector<8x128xf32>
    %719 = arith.addf %716, %718 : vector<8x128xf32>
    %720 = vector.extract_strided_slice %713 {offsets = [0, 0], sizes = [8, 96], strides = [1, 1]} : vector<8x128xf32> to vector<8x96xf32>
    %721 = arith.negf %720 : vector<8x96xf32>
    %722 = math.exp %721 : vector<8x96xf32>
    %cst_217 = arith.constant 1.000000e+00 : f32
    %723 = vector.broadcast %cst_217 : f32 to vector<8x96xf32>
    %724 = arith.addf %723, %722 : vector<8x96xf32>
    %725 = arith.divf %723, %724 : vector<8x96xf32>
    %726 = vector.extract_strided_slice %725 {offsets = [0, 0], sizes = [8, 32], strides = [1, 1]} : vector<8x96xf32> to vector<8x32xf32>
    %727 = vector.extract_strided_slice %725 {offsets = [0, 32], sizes = [8, 32], strides = [1, 1]} : vector<8x96xf32> to vector<8x32xf32>
    %728 = vector.extract_strided_slice %725 {offsets = [0, 64], sizes = [8, 32], strides = [1, 1]} : vector<8x96xf32> to vector<8x32xf32>
    %729 = vector.extract_strided_slice %713 {offsets = [0, 96], sizes = [8, 32], strides = [1, 1]} : vector<8x128xf32> to vector<8x32xf32>
    %730 = math.tanh %729 : vector<8x32xf32>
    %731 = arith.mulf %727, %680 : vector<8x32xf32>
    %732 = arith.mulf %726, %730 : vector<8x32xf32>
    %733 = arith.addf %731, %732 : vector<8x32xf32>
    %734 = math.tanh %733 : vector<8x32xf32>
    %735 = arith.mulf %728, %734 : vector<8x32xf32>
    %736 = vector.extract_strided_slice %719 {offsets = [0, 0], sizes = [8, 96], strides = [1, 1]} : vector<8x128xf32> to vector<8x96xf32>
    %737 = arith.negf %736 : vector<8x96xf32>
    %738 = math.exp %737 : vector<8x96xf32>
    %cst_218 = arith.constant 1.000000e+00 : f32
    %739 = vector.broadcast %cst_218 : f32 to vector<8x96xf32>
    %740 = arith.addf %739, %738 : vector<8x96xf32>
    %741 = arith.divf %739, %740 : vector<8x96xf32>
    %742 = vector.extract_strided_slice %741 {offsets = [0, 0], sizes = [8, 32], strides = [1, 1]} : vector<8x96xf32> to vector<8x32xf32>
    %743 = vector.extract_strided_slice %741 {offsets = [0, 32], sizes = [8, 32], strides = [1, 1]} : vector<8x96xf32> to vector<8x32xf32>
    %744 = vector.extract_strided_slice %741 {offsets = [0, 64], sizes = [8, 32], strides = [1, 1]} : vector<8x96xf32> to vector<8x32xf32>
    %745 = vector.extract_strided_slice %719 {offsets = [0, 96], sizes = [8, 32], strides = [1, 1]} : vector<8x128xf32> to vector<8x32xf32>
    %746 = math.tanh %745 : vector<8x32xf32>
    %747 = arith.mulf %743, %696 : vector<8x32xf32>
    %748 = arith.mulf %742, %746 : vector<8x32xf32>
    %749 = arith.addf %747, %748 : vector<8x32xf32>
    %750 = math.tanh %749 : vector<8x32xf32>
    %751 = arith.mulf %744, %750 : vector<8x32xf32>
    %752 = arith.index_cast %c5_i32_209 : i32 to index
    %c0_219 = arith.constant 0 : index
    %c0_220 = arith.constant 0 : index
    %753 = vector.load %arg16[%752, %c0_219, %c0_220] : memref<8x8x32xf32, #tpu.memory_space<vmem>>, vector<1x8x32xf32>
    %754 = vector.shape_cast %753 : vector<1x8x32xf32> to vector<8x32xf32>
    %755 = vector.shape_cast %735 : vector<8x32xf32> to vector<1x8x32xf32>
    tpu.vector_store %arg16[%752, %c0_219, %c0_220], %755 {strides = array<i32>} : memref<8x8x32xf32, #tpu.memory_space<vmem>>, vector<1x8x32xf32>,
    %756 = arith.index_cast %707 : i32 to index
    %c0_221 = arith.constant 0 : index
    %c0_222 = arith.constant 0 : index
    %757 = vector.load %arg17[%756, %c0_221, %c0_222] : memref<8x8x32xf32, #tpu.memory_space<vmem>>, vector<1x8x32xf32>
    %758 = vector.shape_cast %757 : vector<1x8x32xf32> to vector<8x32xf32>
    %759 = vector.shape_cast %751 : vector<8x32xf32> to vector<1x8x32xf32>
    tpu.vector_store %arg17[%756, %c0_221, %c0_222], %759 {strides = array<i32>} : memref<8x8x32xf32, #tpu.memory_space<vmem>>, vector<1x8x32xf32>,
    %c6_i32_223 = arith.constant 6 : i32
    %c7_i32_224 = arith.constant 7 : i32
    %760 = arith.subi %c7_i32_224, %c6_i32_223 : i32
    %761 = arith.index_cast %c6_i32_223 : i32 to index
    %c0_225 = arith.constant 0 : index
    %c0_226 = arith.constant 0 : index
    %762 = vector.load %arg18[%761, %c0_225, %c0_226] : memref<8x8x128xf32, #tpu.memory_space<vmem>>, vector<1x8x128xf32>
    %763 = vector.shape_cast %762 : vector<1x8x128xf32> to vector<8x128xf32>
    %764 = arith.truncf %735 : vector<8x32xf32> to vector<8x32xbf16>
    %cst_227 = arith.constant dense<0.000000e+00> : vector<8x128xf32>
    %765 = tpu.matmul %764, %439, %cst_227 {dimension_numbers = #tpu.dot_dimension_numbers<[1], [0], [0], [1], [0, 0, 1, 1], [], []>} : vector<8x32xbf16>, vector<32x128xbf16>, vector<8x128xf32> -> vector<8x128xf32>
    %766 = arith.addf %763, %765 : vector<8x128xf32>
    %767 = arith.index_cast %760 : i32 to index
    %c0_228 = arith.constant 0 : index
    %c0_229 = arith.constant 0 : index
    %768 = vector.load %arg19[%767, %c0_228, %c0_229] : memref<8x8x128xf32, #tpu.memory_space<vmem>>, vector<1x8x128xf32>
    %769 = vector.shape_cast %768 : vector<1x8x128xf32> to vector<8x128xf32>
    %770 = arith.truncf %751 : vector<8x32xf32> to vector<8x32xbf16>
    %cst_230 = arith.constant dense<0.000000e+00> : vector<8x128xf32>
    %771 = tpu.matmul %770, %440, %cst_230 {dimension_numbers = #tpu.dot_dimension_numbers<[1], [0], [0], [1], [0, 0, 1, 1], [], []>} : vector<8x32xbf16>, vector<32x128xbf16>, vector<8x128xf32> -> vector<8x128xf32>
    %772 = arith.addf %769, %771 : vector<8x128xf32>
    %773 = vector.extract_strided_slice %766 {offsets = [0, 0], sizes = [8, 96], strides = [1, 1]} : vector<8x128xf32> to vector<8x96xf32>
    %774 = arith.negf %773 : vector<8x96xf32>
    %775 = math.exp %774 : vector<8x96xf32>
    %cst_231 = arith.constant 1.000000e+00 : f32
    %776 = vector.broadcast %cst_231 : f32 to vector<8x96xf32>
    %777 = arith.addf %776, %775 : vector<8x96xf32>
    %778 = arith.divf %776, %777 : vector<8x96xf32>
    %779 = vector.extract_strided_slice %778 {offsets = [0, 0], sizes = [8, 32], strides = [1, 1]} : vector<8x96xf32> to vector<8x32xf32>
    %780 = vector.extract_strided_slice %778 {offsets = [0, 32], sizes = [8, 32], strides = [1, 1]} : vector<8x96xf32> to vector<8x32xf32>
    %781 = vector.extract_strided_slice %778 {offsets = [0, 64], sizes = [8, 32], strides = [1, 1]} : vector<8x96xf32> to vector<8x32xf32>
    %782 = vector.extract_strided_slice %766 {offsets = [0, 96], sizes = [8, 32], strides = [1, 1]} : vector<8x128xf32> to vector<8x32xf32>
    %783 = math.tanh %782 : vector<8x32xf32>
    %784 = arith.mulf %780, %733 : vector<8x32xf32>
    %785 = arith.mulf %779, %783 : vector<8x32xf32>
    %786 = arith.addf %784, %785 : vector<8x32xf32>
    %787 = math.tanh %786 : vector<8x32xf32>
    %788 = arith.mulf %781, %787 : vector<8x32xf32>
    %789 = vector.extract_strided_slice %772 {offsets = [0, 0], sizes = [8, 96], strides = [1, 1]} : vector<8x128xf32> to vector<8x96xf32>
    %790 = arith.negf %789 : vector<8x96xf32>
    %791 = math.exp %790 : vector<8x96xf32>
    %cst_232 = arith.constant 1.000000e+00 : f32
    %792 = vector.broadcast %cst_232 : f32 to vector<8x96xf32>
    %793 = arith.addf %792, %791 : vector<8x96xf32>
    %794 = arith.divf %792, %793 : vector<8x96xf32>
    %795 = vector.extract_strided_slice %794 {offsets = [0, 0], sizes = [8, 32], strides = [1, 1]} : vector<8x96xf32> to vector<8x32xf32>
    %796 = vector.extract_strided_slice %794 {offsets = [0, 32], sizes = [8, 32], strides = [1, 1]} : vector<8x96xf32> to vector<8x32xf32>
    %797 = vector.extract_strided_slice %794 {offsets = [0, 64], sizes = [8, 32], strides = [1, 1]} : vector<8x96xf32> to vector<8x32xf32>
    %798 = vector.extract_strided_slice %772 {offsets = [0, 96], sizes = [8, 32], strides = [1, 1]} : vector<8x128xf32> to vector<8x32xf32>
    %799 = math.tanh %798 : vector<8x32xf32>
    %800 = arith.mulf %796, %749 : vector<8x32xf32>
    %801 = arith.mulf %795, %799 : vector<8x32xf32>
    %802 = arith.addf %800, %801 : vector<8x32xf32>
    %803 = math.tanh %802 : vector<8x32xf32>
    %804 = arith.mulf %797, %803 : vector<8x32xf32>
    %805 = arith.index_cast %c6_i32_223 : i32 to index
    %c0_233 = arith.constant 0 : index
    %c0_234 = arith.constant 0 : index
    %806 = vector.load %arg16[%805, %c0_233, %c0_234] : memref<8x8x32xf32, #tpu.memory_space<vmem>>, vector<1x8x32xf32>
    %807 = vector.shape_cast %806 : vector<1x8x32xf32> to vector<8x32xf32>
    %808 = vector.shape_cast %788 : vector<8x32xf32> to vector<1x8x32xf32>
    tpu.vector_store %arg16[%805, %c0_233, %c0_234], %808 {strides = array<i32>} : memref<8x8x32xf32, #tpu.memory_space<vmem>>, vector<1x8x32xf32>,
    %809 = arith.index_cast %760 : i32 to index
    %c0_235 = arith.constant 0 : index
    %c0_236 = arith.constant 0 : index
    %810 = vector.load %arg17[%809, %c0_235, %c0_236] : memref<8x8x32xf32, #tpu.memory_space<vmem>>, vector<1x8x32xf32>
    %811 = vector.shape_cast %810 : vector<1x8x32xf32> to vector<8x32xf32>
    %812 = vector.shape_cast %804 : vector<8x32xf32> to vector<1x8x32xf32>
    tpu.vector_store %arg17[%809, %c0_235, %c0_236], %812 {strides = array<i32>} : memref<8x8x32xf32, #tpu.memory_space<vmem>>, vector<1x8x32xf32>,
    %c7_i32_237 = arith.constant 7 : i32
    %c7_i32_238 = arith.constant 7 : i32
    %813 = arith.subi %c7_i32_238, %c7_i32_237 : i32
    %814 = arith.index_cast %c7_i32_237 : i32 to index
    %c0_239 = arith.constant 0 : index
    %c0_240 = arith.constant 0 : index
    %815 = vector.load %arg18[%814, %c0_239, %c0_240] : memref<8x8x128xf32, #tpu.memory_space<vmem>>, vector<1x8x128xf32>
    %816 = vector.shape_cast %815 : vector<1x8x128xf32> to vector<8x128xf32>
    %817 = arith.truncf %788 : vector<8x32xf32> to vector<8x32xbf16>
    %cst_241 = arith.constant dense<0.000000e+00> : vector<8x128xf32>
    %818 = tpu.matmul %817, %439, %cst_241 {dimension_numbers = #tpu.dot_dimension_numbers<[1], [0], [0], [1], [0, 0, 1, 1], [], []>} : vector<8x32xbf16>, vector<32x128xbf16>, vector<8x128xf32> -> vector<8x128xf32>
    %819 = arith.addf %816, %818 : vector<8x128xf32>
    %820 = arith.index_cast %813 : i32 to index
    %c0_242 = arith.constant 0 : index
    %c0_243 = arith.constant 0 : index
    %821 = vector.load %arg19[%820, %c0_242, %c0_243] : memref<8x8x128xf32, #tpu.memory_space<vmem>>, vector<1x8x128xf32>
    %822 = vector.shape_cast %821 : vector<1x8x128xf32> to vector<8x128xf32>
    %823 = arith.truncf %804 : vector<8x32xf32> to vector<8x32xbf16>
    %cst_244 = arith.constant dense<0.000000e+00> : vector<8x128xf32>
    %824 = tpu.matmul %823, %440, %cst_244 {dimension_numbers = #tpu.dot_dimension_numbers<[1], [0], [0], [1], [0, 0, 1, 1], [], []>} : vector<8x32xbf16>, vector<32x128xbf16>, vector<8x128xf32> -> vector<8x128xf32>
    %825 = arith.addf %822, %824 : vector<8x128xf32>
    %826 = vector.extract_strided_slice %819 {offsets = [0, 0], sizes = [8, 96], strides = [1, 1]} : vector<8x128xf32> to vector<8x96xf32>
    %827 = arith.negf %826 : vector<8x96xf32>
    %828 = math.exp %827 : vector<8x96xf32>
    %cst_245 = arith.constant 1.000000e+00 : f32
    %829 = vector.broadcast %cst_245 : f32 to vector<8x96xf32>
    %830 = arith.addf %829, %828 : vector<8x96xf32>
    %831 = arith.divf %829, %830 : vector<8x96xf32>
    %832 = vector.extract_strided_slice %831 {offsets = [0, 0], sizes = [8, 32], strides = [1, 1]} : vector<8x96xf32> to vector<8x32xf32>
    %833 = vector.extract_strided_slice %831 {offsets = [0, 32], sizes = [8, 32], strides = [1, 1]} : vector<8x96xf32> to vector<8x32xf32>
    %834 = vector.extract_strided_slice %831 {offsets = [0, 64], sizes = [8, 32], strides = [1, 1]} : vector<8x96xf32> to vector<8x32xf32>
    %835 = vector.extract_strided_slice %819 {offsets = [0, 96], sizes = [8, 32], strides = [1, 1]} : vector<8x128xf32> to vector<8x32xf32>
    %836 = math.tanh %835 : vector<8x32xf32>
    %837 = arith.mulf %833, %786 : vector<8x32xf32>
    %838 = arith.mulf %832, %836 : vector<8x32xf32>
    %839 = arith.addf %837, %838 : vector<8x32xf32>
    %840 = math.tanh %839 : vector<8x32xf32>
    %841 = arith.mulf %834, %840 : vector<8x32xf32>
    %842 = vector.extract_strided_slice %825 {offsets = [0, 0], sizes = [8, 96], strides = [1, 1]} : vector<8x128xf32> to vector<8x96xf32>
    %843 = arith.negf %842 : vector<8x96xf32>
    %844 = math.exp %843 : vector<8x96xf32>
    %cst_246 = arith.constant 1.000000e+00 : f32
    %845 = vector.broadcast %cst_246 : f32 to vector<8x96xf32>
    %846 = arith.addf %845, %844 : vector<8x96xf32>
    %847 = arith.divf %845, %846 : vector<8x96xf32>
    %848 = vector.extract_strided_slice %847 {offsets = [0, 0], sizes = [8, 32], strides = [1, 1]} : vector<8x96xf32> to vector<8x32xf32>
    %849 = vector.extract_strided_slice %847 {offsets = [0, 32], sizes = [8, 32], strides = [1, 1]} : vector<8x96xf32> to vector<8x32xf32>
    %850 = vector.extract_strided_slice %847 {offsets = [0, 64], sizes = [8, 32], strides = [1, 1]} : vector<8x96xf32> to vector<8x32xf32>
    %851 = vector.extract_strided_slice %825 {offsets = [0, 96], sizes = [8, 32], strides = [1, 1]} : vector<8x128xf32> to vector<8x32xf32>
    %852 = math.tanh %851 : vector<8x32xf32>
    %853 = arith.mulf %849, %802 : vector<8x32xf32>
    %854 = arith.mulf %848, %852 : vector<8x32xf32>
    %855 = arith.addf %853, %854 : vector<8x32xf32>
    %856 = math.tanh %855 : vector<8x32xf32>
    %857 = arith.mulf %850, %856 : vector<8x32xf32>
    %858 = arith.index_cast %c7_i32_237 : i32 to index
    %c0_247 = arith.constant 0 : index
    %c0_248 = arith.constant 0 : index
    %859 = vector.load %arg16[%858, %c0_247, %c0_248] : memref<8x8x32xf32, #tpu.memory_space<vmem>>, vector<1x8x32xf32>
    %860 = vector.shape_cast %859 : vector<1x8x32xf32> to vector<8x32xf32>
    %861 = vector.shape_cast %841 : vector<8x32xf32> to vector<1x8x32xf32>
    tpu.vector_store %arg16[%858, %c0_247, %c0_248], %861 {strides = array<i32>} : memref<8x8x32xf32, #tpu.memory_space<vmem>>, vector<1x8x32xf32>,
    %862 = arith.index_cast %813 : i32 to index
    %c0_249 = arith.constant 0 : index
    %c0_250 = arith.constant 0 : index
    %863 = vector.load %arg17[%862, %c0_249, %c0_250] : memref<8x8x32xf32, #tpu.memory_space<vmem>>, vector<1x8x32xf32>
    %864 = vector.shape_cast %863 : vector<1x8x32xf32> to vector<8x32xf32>
    %865 = vector.shape_cast %857 : vector<8x32xf32> to vector<1x8x32xf32>
    tpu.vector_store %arg17[%862, %c0_249, %c0_250], %865 {strides = array<i32>} : memref<8x8x32xf32, #tpu.memory_space<vmem>>, vector<1x8x32xf32>,
    %c8_i32_251 = arith.constant 8 : i32
    %c7 = arith.constant 7 : index
    %c0_252 = arith.constant 0 : index
    %c0_253 = arith.constant 0 : index
    %866 = vector.load %arg16[%c7, %c0_252, %c0_253] : memref<8x8x32xf32, #tpu.memory_space<vmem>>, vector<1x8x32xf32>
    %867 = vector.shape_cast %866 : vector<1x8x32xf32> to vector<8x32xf32>
    %868 = arith.truncf %867 : vector<8x32xf32> to vector<8x32xbf16>
    %c7_254 = arith.constant 7 : index
    %c0_255 = arith.constant 0 : index
    %c0_256 = arith.constant 0 : index
    %869 = vector.load %arg17[%c7_254, %c0_255, %c0_256] : memref<8x8x32xf32, #tpu.memory_space<vmem>>, vector<1x8x32xf32>
    %870 = vector.shape_cast %869 : vector<1x8x32xf32> to vector<8x32xf32>
    %871 = arith.truncf %870 : vector<8x32xf32> to vector<8x32xbf16>
    %c0_257 = arith.constant 0 : index
    %c0_258 = arith.constant 0 : index
    %872 = vector.load %arg13[%c0_257, %c0_258] : memref<64x128xbf16, #tpu.memory_space<vmem>>, vector<32x128xbf16>
    %cst_259 = arith.constant dense<0.000000e+00> : vector<8x128xf32>
    %873 = tpu.matmul %868, %872, %cst_259 {dimension_numbers = #tpu.dot_dimension_numbers<[1], [0], [0], [1], [0, 0, 1, 1], [], []>} : vector<8x32xbf16>, vector<32x128xbf16>, vector<8x128xf32> -> vector<8x128xf32>
    %c32_260 = arith.constant 32 : index
    %c0_261 = arith.constant 0 : index
    %874 = vector.load %arg13[%c32_260, %c0_261] : memref<64x128xbf16, #tpu.memory_space<vmem>>, vector<32x128xbf16>
    %cst_262 = arith.constant dense<0.000000e+00> : vector<8x128xf32>
    %875 = tpu.matmul %871, %874, %cst_262 {dimension_numbers = #tpu.dot_dimension_numbers<[1], [0], [0], [1], [0, 0, 1, 1], [], []>} : vector<8x32xbf16>, vector<32x128xbf16>, vector<8x128xf32> -> vector<8x128xf32>
    %876 = arith.addf %873, %875 : vector<8x128xf32>
    %c0_263 = arith.constant 0 : index
    %c0_264 = arith.constant 0 : index
    %877 = vector.load %arg14[%c0_263, %c0_264] : memref<1x128xf32, #tpu.memory_space<vmem>>, vector<1x128xf32>
    %878 = vector.broadcast %877 : vector<1x128xf32> to vector<8x128xf32>
    %879 = arith.addf %876, %878 : vector<8x128xf32>
    %c0_265 = arith.constant 0 : index
    %c0_266 = arith.constant 0 : index
    %880 = vector.load %arg15[%c0_265, %c0_266] : memref<8x256xf32, #tpu.memory_space<vmem>>, vector<8x128xf32>
    tpu.vector_store %arg15[%c0_265, %c0_266], %879 {strides = array<i32>} : memref<8x256xf32, #tpu.memory_space<vmem>>, vector<8x128xf32>,
    %cst_267 = arith.constant dense<0xFF800000> : vector<8xf32>
    %881 = vector.multi_reduction <maximumf>, %879, %cst_267 [1] : vector<8x128xf32> to vector<8xf32>
    %882 = vector.shape_cast %881 : vector<8xf32> to vector<8x1xf32>
    %883 = vector.broadcast %882 : vector<8x1xf32> to vector<8x128xf32>
    %884 = arith.subf %879, %883 : vector<8x128xf32>
    %885 = math.exp %884 : vector<8x128xf32>
    %cst_268 = arith.constant dense<0.000000e+00> : vector<8xf32>
    %886 = vector.multi_reduction <add>, %885, %cst_268 [1] : vector<8x128xf32> to vector<8xf32>
    %887 = vector.shape_cast %886 : vector<8xf32> to vector<8x1xf32>
    %888 = vector.broadcast %887 : vector<8x1xf32> to vector<8x128xf32>
    %889 = arith.divf %885, %888 : vector<8x128xf32>
    %c0_269 = arith.constant 0 : index
    %c128 = arith.constant 128 : index
    %890 = vector.load %arg15[%c0_269, %c128] : memref<8x256xf32, #tpu.memory_space<vmem>>, vector<8x128xf32>
    tpu.vector_store %arg15[%c0_269, %c128], %889 {strides = array<i32>} : memref<8x256xf32, #tpu.memory_space<vmem>>, vector<8x128xf32>,
    return
  }
}

</mosaic_0001>

<llo_original>
// kernel: textrnn_forward.1
$region0: #{textrnn_forward.1}
  #allocation0 [shape = 'u32[]', space=smem, size = 0x4, offset = 0x4, fixed_abs, tag = 'smem constant byte address 0x4 - core index']
  #allocation1 [shape = 'u32[144,128]{1,0:T(1,128)}', space=vmem, size = 0x12000, scoped, tag = 'internal scratch']
  #allocation2 [shape = 'f32[8,8,32]{2,1,0:T(8,128)}', space=vmem, size = 0x8000, scoped, tag = 'scratch operand']
  #allocation3 [shape = 'f32[8,8,32]{2,1,0:T(8,128)}', space=vmem, size = 0x8000, scoped, tag = 'scratch operand']
  #allocation4 [shape = 'f32[8,8,128]{2,1,0:T(8,128)}', space=vmem, size = 0x8000, scoped, tag = 'scratch operand']
  #allocation5 [shape = 'f32[8,8,128]{2,1,0:T(8,128)}', space=vmem, size = 0x8000, scoped, tag = 'scratch operand']
  %s0 = inlined_call_operand.vmem [shape: bf16[8,8,16], index: 0, kind: input, shape index: {}]
  %s1 = inlined_call_operand.vmem [shape: bf16[16,128], index: 1, kind: input, shape index: {}]
  %s2 = inlined_call_operand.vmem [shape: bf16[32,128], index: 2, kind: input, shape index: {}]
  %s3 = inlined_call_operand.vmem [shape: f32[1,128], index: 3, kind: input, shape index: {}]
  %s4 = inlined_call_operand.vmem [shape: bf16[16,128], index: 4, kind: input, shape index: {}]
  %s5 = inlined_call_operand.vmem [shape: bf16[32,128], index: 5, kind: input, shape index: {}]
  %s6 = inlined_call_operand.vmem [shape: f32[1,128], index: 6, kind: input, shape index: {}]
  %s7 = inlined_call_operand.vmem [shape: bf16[64,128], index: 7, kind: input, shape index: {}]
  %s8 = inlined_call_operand.vmem [shape: bf16[32,128], index: 8, kind: input, shape index: {}]
  %s9 = inlined_call_operand.vmem [shape: f32[1,128], index: 9, kind: input, shape index: {}]
  %s10 = inlined_call_operand.vmem [shape: bf16[64,128], index: 10, kind: input, shape index: {}]
  %s11 = inlined_call_operand.vmem [shape: bf16[32,128], index: 11, kind: input, shape index: {}]
  %s12 = inlined_call_operand.vmem [shape: f32[1,128], index: 12, kind: input, shape index: {}]
  %s13 = inlined_call_operand.vmem [shape: bf16[64,128], index: 13, kind: input, shape index: {}]
  %s14 = inlined_call_operand.vmem [shape: f32[1,128], index: 14, kind: input, shape index: {}]
  %s15 = inlined_call_operand.vmem [shape: f32[8,256], index: 15, kind: output, shape index: {}]
  %s16 = sld [smem:[#allocation0]]
  $region84: #{textrnn_forward.1} parent=0
    _
  %s18 = ssub.s32 1, %s16
  %s19 = scalar_select 0, %s18, %s16
  // Predicated region
  $region2: #{textrnn_forward.1} parent=0 // pred_check
    _
  $region3: #{textrnn_forward.1} parent=0 // pred_check_branch
    %21 = sbr.rel (0) target = $region5
  $region4: #{textrnn_forward.1} parent=0 // pred_region
    _
  $region5: #{textrnn_forward.1} parent=0 // pred_fallthru
    _
  // Predicated region
  $region6: #{textrnn_forward.1} parent=0 // pred_check
    _
  $region7: #{textrnn_forward.1} parent=0 // pred_check_branch
    %23 = sbr.rel (0) target = $region9
  $region8: #{textrnn_forward.1} parent=0 // pred_region
    _
  $region9: #{textrnn_forward.1} parent=0 // pred_fallthru
    _
  // Predicated region
  $region10: #{textrnn_forward.1} parent=0 // pred_check
    _
  $region11: #{textrnn_forward.1} parent=0 // pred_check_branch
    %25 = sbr.rel (0) target = $region13
  $region12: #{textrnn_forward.1} parent=0 // pred_region
    _
  $region13: #{textrnn_forward.1} parent=0 // pred_fallthru
    _
  // Predicated region
  $region14: #{textrnn_forward.1} parent=0 // pred_check
    _
  $region15: #{textrnn_forward.1} parent=0 // pred_check_branch
    %27 = sbr.rel (0) target = $region17
  $region16: #{textrnn_forward.1} parent=0 // pred_region
    _
  $region17: #{textrnn_forward.1} parent=0 // pred_fallthru
    _
  // Predicated region
  $region18: #{textrnn_forward.1} parent=0 // pred_check
    _
  $region19: #{textrnn_forward.1} parent=0 // pred_check_branch
    %29 = sbr.rel (0) target = $region21
  $region20: #{textrnn_forward.1} parent=0 // pred_region
    _
  $region21: #{textrnn_forward.1} parent=0 // pred_fallthru
    _
  // Predicated region
  $region22: #{textrnn_forward.1} parent=0 // pred_check
    _
  $region23: #{textrnn_forward.1} parent=0 // pred_check_branch
    %31 = sbr.rel (0) target = $region25
  $region24: #{textrnn_forward.1} parent=0 // pred_region
    _
  $region25: #{textrnn_forward.1} parent=0 // pred_fallthru
    _
  // Predicated region
  $region26: #{textrnn_forward.1} parent=0 // pred_check
    _
  $region27: #{textrnn_forward.1} parent=0 // pred_check_branch
    %33 = sbr.rel (0) target = $region29
  $region28: #{textrnn_forward.1} parent=0 // pred_region
    _
  $region29: #{textrnn_forward.1} parent=0 // pred_fallthru
    _
  // Predicated region
  $region30: #{textrnn_forward.1} parent=0 // pred_check
    _
  $region31: #{textrnn_forward.1} parent=0 // pred_check_branch
    %35 = sbr.rel (0) target = $region33
  $region32: #{textrnn_forward.1} parent=0 // pred_region
    _
  $region33: #{textrnn_forward.1} parent=0 // pred_fallthru
    _
  // Predicated region
  $region34: #{textrnn_forward.1} parent=0 // pred_check
    _
  $region35: #{textrnn_forward.1} parent=0 // pred_check_branch
    %37 = sbr.rel (0) target = $region37
  $region36: #{textrnn_forward.1} parent=0 // pred_region
    _
  $region37: #{textrnn_forward.1} parent=0 // pred_fallthru
    _
  // Predicated region
  $region38: #{textrnn_forward.1} parent=0 // pred_check
    _
  $region39: #{textrnn_forward.1} parent=0 // pred_check_branch
    %39 = sbr.rel (0) target = $region41
  $region40: #{textrnn_forward.1} parent=0 // pred_region
    _
  $region41: #{textrnn_forward.1} parent=0 // pred_fallthru
    _
  // Predicated region
  $region42: #{textrnn_forward.1} parent=0 // pred_check
    _
  $region43: #{textrnn_forward.1} parent=0 // pred_check_branch
    %41 = sbr.rel (0) target = $region45
  $region44: #{textrnn_forward.1} parent=0 // pred_region
    _
  $region45: #{textrnn_forward.1} parent=0 // pred_fallthru
    _
  // Predicated region
  $region46: #{textrnn_forward.1} parent=0 // pred_check
    _
  $region47: #{textrnn_forward.1} parent=0 // pred_check_branch
    %43 = sbr.rel (0) target = $region49
  $region48: #{textrnn_forward.1} parent=0 // pred_region
    _
  $region49: #{textrnn_forward.1} parent=0 // pred_fallthru
    _
  // Predicated region
  $region50: #{textrnn_forward.1} parent=0 // pred_check
    _
  $region51: #{textrnn_forward.1} parent=0 // pred_check_branch
    %45 = sbr.rel (0) target = $region53
  $region52: #{textrnn_forward.1} parent=0 // pred_region
    _
  $region53: #{textrnn_forward.1} parent=0 // pred_fallthru
    _
  // Predicated region
  $region54: #{textrnn_forward.1} parent=0 // pred_check
    _
  $region55: #{textrnn_forward.1} parent=0 // pred_check_branch
    %47 = sbr.rel (0) target = $region57
  $region56: #{textrnn_forward.1} parent=0 // pred_region
    _
  $region57: #{textrnn_forward.1} parent=0 // pred_fallthru
    _
  // Predicated region
  $region58: #{textrnn_forward.1} parent=0 // pred_check
    _
  $region59: #{textrnn_forward.1} parent=0 // pred_check_branch
    %49 = sbr.rel (0) target = $region61
  $region60: #{textrnn_forward.1} parent=0 // pred_region
    _
  $region61: #{textrnn_forward.1} parent=0 // pred_fallthru
    _
  %v51 = vld [vmem:[%s3] sm:$0x1]
  %v52 = vld [vmem:[%s6] sm:$0x1]
  %v53 = vld [vmem:[%s1] sm:$0xf]
  %v54 = vld [vmem:[%s1 + $0x4] sm:$0xf]
  %v55 = vld [vmem:[%s4] sm:$0xf]
  %v56 = vld [vmem:[%s4 + $0x4] sm:$0xf]
  loop: start=0, step=1, limit=8
  $region62: #{textrnn_forward.1} parent=0 // loop_pre_header
    _
  $region63: #{textrnn_forward.1} parent=0 // loop_header
    %s58 = sphi 0, %s62
    %p59 = scmp.ge.s32.totalorder %s58, 8
  $region64: #{textrnn_forward.1} parent=0 // loop_header_branch
    %61 = sbr.rel (%p59) target = $region68
  $region65: #{textrnn_forward.1} parent=0 // loop_body
    %s63 = smul.addr %s58, 4
    %s64 = scalar_lea.vmem %s0, %s63
    %v65 = vld [vmem:[%s64] sm:$0xf]
    %v67 = vlaneseq
    %v68 = vshrl.u32 %v67, 7
    %v69 = vsub.s32 0, %v68
    %v70 = vrot.slane %v51, %v69
    %v74 = vunpack.c.l.b16 %v53
    %v75 = vunpack.c.l.b16 %v54
    %v76 = vpack.c.b16 %v75, %v74
    %vm78 = vcmask 130048
    %v80 = vsel %vm78, %v65, 0
    %82 = vmatprep.subr.bf16.mxu0 0
    %83 = vmatpush1.bf16.msra.mxu0 0
    %84 = vmatprep.subr.bf16.mxu0 0
    %85 = vmatpush1.bf16.msra.mxu0 0
    %86 = vmatprep.subr.bf16.mxu0 0
    %87 = vmatpush1.bf16.msra.mxu0 0
    %88 = vmatprep.subr.bf16.mxu0 0
    %89 = vmatpush1.bf16.msra.mxu0 0
    %90 = vmatprep.subr.bf16.mxu0 0
    %91 = vmatpush1.bf16.msra.mxu0 0
    %92 = vmatprep.subr.bf16.mxu0 0
    %93 = vmatpush1.bf16.msra.mxu0 0
    %94 = vmatprep.subr.bf16.mxu0 0
    %95 = vmatpush1.bf16.msra.mxu0 0
    %96 = vmatprep.subr.bf16.mxu0 0
    %97 = vmatpush1.bf16.msra.mxu0 %v76
    %98 = vmatprep.subr.bf16.mxu0 0
    %99 = vmatpush2.bf16.msra.mxu0 0
    %100 = vmatprep.subr.bf16.mxu0 0
    %101 = vmatpush2.bf16.msra.mxu0 0
    %102 = vmatprep.subr.bf16.mxu0 0
    %103 = vmatpush2.bf16.msra.mxu0 0
    %104 = vmatprep.subr.bf16.mxu0 0
    %105 = vmatpush2.bf16.msra.mxu0 0
    %106 = vmatprep.subr.bf16.mxu0 0
    %107 = vmatpush2.bf16.msra.mxu0 0
    %108 = vmatprep.subr.bf16.mxu0 0
    %109 = vmatpush2.bf16.msra.mxu0 0
    %110 = vmatprep.subr.bf16.mxu0 0
    %111 = vmatpush2.bf16.msra.mxu0 0
    %112 = vmatprep.subr.bf16.mxu0 0
    %113 = vmatpush2.bf16.msra.mxu0 0
    %114 = vmatprep.mubr.bf16.mxu0 0
    %115 = vmatmul.mubr.bf16.gmra.mxu0 %v80
    %v116 = vpop.f32.mrf.mxu0
    %v117 = vadd.f32 %v70, %v116
    %v118 = vpop.f32.mrf.mxu0
    %v119 = vpop.f32.mrf.mxu0
    %v120 = vpop.f32.mrf.mxu0
    %121 = vdwg.mxu0
    %s122 = smul.u32 %s58, 8
    %s123 = scalar_lea.vmem [#allocation4], %s122
    %124 = vst [vmem:[%s123] sm:$0xff] %v117
    %v126 = vlaneseq
    %v127 = vshrl.u32 %v126, 7
    %v128 = vsub.s32 0, %v127
    %v129 = vrot.slane %v52, %v128
    %v133 = vunpack.c.l.b16 %v55
    %v134 = vunpack.c.l.b16 %v56
    %v135 = vpack.c.b16 %v134, %v133
    %137 = vmatprep.subr.bf16.mxu0 0
    %138 = vmatpush1.bf16.msra.mxu0 0
    %139 = vmatprep.subr.bf16.mxu0 0
    %140 = vmatpush1.bf16.msra.mxu0 0
    %141 = vmatprep.subr.bf16.mxu0 0
    %142 = vmatpush1.bf16.msra.mxu0 0
    %143 = vmatprep.subr.bf16.mxu0 0
    %144 = vmatpush1.bf16.msra.mxu0 0
    %145 = vmatprep.subr.bf16.mxu0 0
    %146 = vmatpush1.bf16.msra.mxu0 0
    %147 = vmatprep.subr.bf16.mxu0 0
    %148 = vmatpush1.bf16.msra.mxu0 0
    %149 = vmatprep.subr.bf16.mxu0 0
    %150 = vmatpush1.bf16.msra.mxu0 0
    %151 = vmatprep.subr.bf16.mxu0 0
    %152 = vmatpush1.bf16.msra.mxu0 %v135
    %153 = vmatprep.subr.bf16.mxu0 0
    %154 = vmatpush2.bf16.msra.mxu0 0
    %155 = vmatprep.subr.bf16.mxu0 0
    %156 = vmatpush2.bf16.msra.mxu0 0
    %157 = vmatprep.subr.bf16.mxu0 0
    %158 = vmatpush2.bf16.msra.mxu0 0
    %159 = vmatprep.subr.bf16.mxu0 0
    %160 = vmatpush2.bf16.msra.mxu0 0
    %161 = vmatprep.subr.bf16.mxu0 0
    %162 = vmatpush2.bf16.msra.mxu0 0
    %163 = vmatprep.subr.bf16.mxu0 0
    %164 = vmatpush2.bf16.msra.mxu0 0
    %165 = vmatprep.subr.bf16.mxu0 0
    %166 = vmatpush2.bf16.msra.mxu0 0
    %167 = vmatprep.subr.bf16.mxu0 0
    %168 = vmatpush2.bf16.msra.mxu0 0
    %169 = vmatprep.mubr.bf16.mxu0 0
    %170 = vmatmul.mubr.bf16.gmra.mxu0 %v80
    %v171 = vpop.f32.mrf.mxu0
    %v172 = vadd.f32 %v129, %v171
    %v173 = vpop.f32.mrf.mxu0
    %v174 = vpop.f32.mrf.mxu0
    %v175 = vpop.f32.mrf.mxu0
    %176 = vdwg.mxu0
    %s177 = scalar_lea.vmem [#allocation5], %s122
    %178 = vst [vmem:[%s177] sm:$0xff] %v172
  $region66: #{textrnn_forward.1} parent=0 // loop_footer
    %s62 = sadd.s32 1, %s58
  $region67: #{textrnn_forward.1} parent=0 // loop_footer_branch
    %57 = sbr.rel target = $region63
  $region68: #{textrnn_forward.1} parent=0 // loop_exit
    _
  %v179 = vld [vmem:[%s2] sm:$0xf]
  %v180 = vld [vmem:[%s2 + $0x4] sm:$0xf]
  %v181 = vld [vmem:[%s2 + $0x8] sm:$0xf]
  %v182 = vld [vmem:[%s2 + $0xc] sm:$0xf]
  %v183 = vld [vmem:[%s5] sm:$0xf]
  %v184 = vld [vmem:[%s5 + $0x4] sm:$0xf]
  %v185 = vld [vmem:[%s5 + $0x8] sm:$0xf]
  %v186 = vld [vmem:[%s5 + $0xc] sm:$0xf]
  %v187 = vld [vmem:[#allocation4] sm:$0xff]
  %v192 = vunpack.c.l.b16 %v179
  %v193 = vunpack.c.l.b16 %v180
  %v194 = vunpack.c.l.b16 %v181
  %v195 = vunpack.c.l.b16 %v182
  %v196 = vpack.c.b16 %v193, %v192
  %v197 = vpack.c.b16 %v195, %v194
  %vm200 = vcmask 261120
  %v202 = vsel %vm200, 0, 0
  %204 = vmatprep.subr.bf16.mxu0 0
  %205 = vmatpush1.bf16.msra.mxu0 0
  %206 = vmatprep.subr.bf16.mxu0 0
  %207 = vmatpush1.bf16.msra.mxu0 0
  %208 = vmatprep.subr.bf16.mxu0 0
  %209 = vmatpush1.bf16.msra.mxu0 0
  %210 = vmatprep.subr.bf16.mxu0 0
  %211 = vmatpush1.bf16.msra.mxu0 0
  %212 = vmatprep.subr.bf16.mxu0 0
  %213 = vmatpush1.bf16.msra.mxu0 0
  %214 = vmatprep.subr.bf16.mxu0 0
  %215 = vmatpush1.bf16.msra.mxu0 0
  %216 = vmatprep.subr.bf16.mxu0 0
  %217 = vmatpush1.bf16.msra.mxu0 %v197
  %218 = vmatprep.subr.bf16.mxu0 0
  %219 = vmatpush1.bf16.msra.mxu0 %v196
  %220 = vmatprep.subr.bf16.mxu0 0
  %221 = vmatpush2.bf16.msra.mxu0 0
  %222 = vmatprep.subr.bf16.mxu0 0
  %223 = vmatpush2.bf16.msra.mxu0 0
  %224 = vmatprep.subr.bf16.mxu0 0
  %225 = vmatpush2.bf16.msra.mxu0 0
  %226 = vmatprep.subr.bf16.mxu0 0
  %227 = vmatpush2.bf16.msra.mxu0 0
  %228 = vmatprep.subr.bf16.mxu0 0
  %229 = vmatpush2.bf16.msra.mxu0 0
  %230 = vmatprep.subr.bf16.mxu0 0
  %231 = vmatpush2.bf16.msra.mxu0 0
  %232 = vmatprep.subr.bf16.mxu0 0
  %233 = vmatpush2.bf16.msra.mxu0 0
  %234 = vmatprep.subr.bf16.mxu0 0
  %235 = vmatpush2.bf16.msra.mxu0 0
  %236 = vmatprep.mubr.bf16.mxu0 0
  %237 = vmatmul.mubr.bf16.gmra.mxu0 %v202
  %v238 = vpop.f32.mrf.mxu0
  %v239 = vadd.f32 0.0, %v238
  %v240 = vpop.f32.mrf.mxu0
  %v241 = vpop.f32.mrf.mxu0
  %v242 = vpop.f32.mrf.mxu0
  %243 = vdwg.mxu0
  %v244 = vadd.f32 %v187, %v239
  %s245 = scalar_lea.vmem [#allocation5], 56
  %v246 = vld [vmem:[%s245] sm:$0xff]
  %v251 = vunpack.c.l.b16 %v183
  %v252 = vunpack.c.l.b16 %v184
  %v253 = vunpack.c.l.b16 %v185
  %v254 = vunpack.c.l.b16 %v186
  %v255 = vpack.c.b16 %v252, %v251
  %v256 = vpack.c.b16 %v254, %v253
  %259 = vmatprep.subr.bf16.mxu0 0
  %260 = vmatpush1.bf16.msra.mxu0 0
  %261 = vmatprep.subr.bf16.mxu0 0
  %262 = vmatpush1.bf16.msra.mxu0 0
  %263 = vmatprep.subr.bf16.mxu0 0
  %264 = vmatpush1.bf16.msra.mxu0 0
  %265 = vmatprep.subr.bf16.mxu0 0
  %266 = vmatpush1.bf16.msra.mxu0 0
  %267 = vmatprep.subr.bf16.mxu0 0
  %268 = vmatpush1.bf16.msra.mxu0 0
  %269 = vmatprep.subr.bf16.mxu0 0
  %270 = vmatpush1.bf16.msra.mxu0 0
  %271 = vmatprep.subr.bf16.mxu0 0
  %272 = vmatpush1.bf16.msra.mxu0 %v256
  %273 = vmatprep.subr.bf16.mxu0 0
  %274 = vmatpush1.bf16.msra.mxu0 %v255
  %275 = vmatprep.subr.bf16.mxu0 0
  %276 = vmatpush2.bf16.msra.mxu0 0
  %277 = vmatprep.subr.bf16.mxu0 0
  %278 = vmatpush2.bf16.msra.mxu0 0
  %279 = vmatprep.subr.bf16.mxu0 0
  %280 = vmatpush2.bf16.msra.mxu0 0
  %281 = vmatprep.subr.bf16.mxu0 0
  %282 = vmatpush2.bf16.msra.mxu0 0
  %283 = vmatprep.subr.bf16.mxu0 0
  %284 = vmatpush2.bf16.msra.mxu0 0
  %285 = vmatprep.subr.bf16.mxu0 0
  %286 = vmatpush2.bf16.msra.mxu0 0
  %287 = vmatprep.subr.bf16.mxu0 0
  %288 = vmatpush2.bf16.msra.mxu0 0
  %289 = vmatprep.subr.bf16.mxu0 0
  %290 = vmatpush2.bf16.msra.mxu0 0
  %291 = vmatprep.mubr.bf16.mxu0 0
  %292 = vmatmul.mubr.bf16.gmra.mxu0 %v202
  %v293 = vpop.f32.mrf.mxu0
  %v294 = vadd.f32 0.0, %v293
  %v295 = vpop.f32.mrf.mxu0
  %v296 = vpop.f32.mrf.mxu0
  %v297 = vpop.f32.mrf.mxu0
  %298 = vdwg.mxu0
  %v299 = vadd.f32 %v246, %v294
  %v300 = vxor.u32 %v244, 2147483648
  %v301 = vmul.f32 %v300, 1.442695
  %v302 = vpow.pop %v301
  %v303 = vadd.f32 %v302, 1.0
  %v304 = vrcp.pop %v303
  %v305 = vmul.f32 1.0, %v304
  %v306 = vtanh.pop %v244
  %v307 = vmul.f32 %v305, 0.0
  %309 = vrot.lane.b32.xlu0 %v306, 32
  %v310 = vpop.permute.xlu0 %309
  %v312 = vmul.f32 %v305, %v310
  %314 = vrot.lane.b32.xlu0 %v312, 32
  %v315 = vpop.permute.xlu0 %314
  %v317 = vadd.f32 %v307, %v315
  %v318 = vtanh.pop %v317
  %320 = vrot.lane.b32.xlu0 %v318, 32
  %v321 = vpop.permute.xlu0 %320
  %v323 = vmul.f32 %v305, %v321
  %v324 = vxor.u32 %v299, 2147483648
  %v325 = vmul.f32 %v324, 1.442695
  %v326 = vpow.pop %v325
  %v327 = vadd.f32 %v326, 1.0
  %v328 = vrcp.pop %v327
  %v329 = vmul.f32 1.0, %v328
  %v330 = vtanh.pop %v299
  %v331 = vmul.f32 %v329, 0.0
  %333 = vrot.lane.b32.xlu0 %v330, 32
  %v334 = vpop.permute.xlu0 %333
  %v336 = vmul.f32 %v329, %v334
  %338 = vrot.lane.b32.xlu0 %v336, 32
  %v339 = vpop.permute.xlu0 %338
  %v341 = vadd.f32 %v331, %v339
  %v342 = vtanh.pop %v341
  %344 = vrot.lane.b32.xlu0 %v342, 32
  %v345 = vpop.permute.xlu0 %344
  %v347 = vmul.f32 %v329, %v345
  %349 = vrot.lane.b32.xlu0 %v323, 64
  %v350 = vpop.permute.xlu0 %349
  %352 = vst.msk [vmem:[#allocation2] sm:$0xff] %vm200, %v350
  %354 = vrot.lane.b32.xlu0 %v347, 64
  %v355 = vpop.permute.xlu0 %354
  %s357 = scalar_lea.vmem [#allocation3], 56
  %358 = vst.msk [vmem:[%s357] sm:$0xff] %vm200, %v355
  %s359 = scalar_lea.vmem [#allocation4], 8
  %v360 = vld [vmem:[%s359] sm:$0xff]
  %v361 = vpack.c.bf16 %v323, %v323
  %363 = vrot.lane.b32.xlu0 %v361, 64
  %v364 = vpop.permute.xlu0 %363
  %v366 = vsel %vm200, %v364, 0
  %368 = vmatprep.subr.bf16.mxu0 0
  %369 = vmatpush1.bf16.msra.mxu0 0
  %370 = vmatprep.subr.bf16.mxu0 0
  %371 = vmatpush1.bf16.msra.mxu0 0
  %372 = vmatprep.subr.bf16.mxu0 0
  %373 = vmatpush1.bf16.msra.mxu0 0
  %374 = vmatprep.subr.bf16.mxu0 0
  %375 = vmatpush1.bf16.msra.mxu0 0
  %376 = vmatprep.subr.bf16.mxu0 0
  %377 = vmatpush1.bf16.msra.mxu0 0
  %378 = vmatprep.subr.bf16.mxu0 0
  %379 = vmatpush1.bf16.msra.mxu0 0
  %380 = vmatprep.subr.bf16.mxu0 0
  %381 = vmatpush1.bf16.msra.mxu0 %v197
  %382 = vmatprep.subr.bf16.mxu0 0
  %383 = vmatpush1.bf16.msra.mxu0 %v196
  %384 = vmatprep.subr.bf16.mxu0 0
  %385 = vmatpush2.bf16.msra.mxu0 0
  %386 = vmatprep.subr.bf16.mxu0 0
  %387 = vmatpush2.bf16.msra.mxu0 0
  %388 = vmatprep.subr.bf16.mxu0 0
  %389 = vmatpush2.bf16.msra.mxu0 0
  %390 = vmatprep.subr.bf16.mxu0 0
  %391 = vmatpush2.bf16.msra.mxu0 0
  %392 = vmatprep.subr.bf16.mxu0 0
  %393 = vmatpush2.bf16.msra.mxu0 0
  %394 = vmatprep.subr.bf16.mxu0 0
  %395 = vmatpush2.bf16.msra.mxu0 0
  %396 = vmatprep.subr.bf16.mxu0 0
  %397 = vmatpush2.bf16.msra.mxu0 0
  %398 = vmatprep.subr.bf16.mxu0 0
  %399 = vmatpush2.bf16.msra.mxu0 0
  %400 = vmatprep.mubr.bf16.mxu0 0
  %401 = vmatmul.mubr.bf16.gmra.mxu0 %v366
  %v402 = vpop.f32.mrf.mxu0
  %v403 = vadd.f32 0.0, %v402
  %v404 = vpop.f32.mrf.mxu0
  %v405 = vpop.f32.mrf.mxu0
  %v406 = vpop.f32.mrf.mxu0
  %407 = vdwg.mxu0
  %v408 = vadd.f32 %v360, %v403
  %s409 = scalar_lea.vmem [#allocation5], 48
  %v410 = vld [vmem:[%s409] sm:$0xff]
  %v411 = vpack.c.bf16 %v347, %v347
  %413 = vrot.lane.b32.xlu0 %v411, 64
  %v414 = vpop.permute.xlu0 %413
  %v416 = vsel %vm200, %v414, 0
  %418 = vmatprep.subr.bf16.mxu0 0
  %419 = vmatpush1.bf16.msra.mxu0 0
  %420 = vmatprep.subr.bf16.mxu0 0
  %421 = vmatpush1.bf16.msra.mxu0 0
  %422 = vmatprep.subr.bf16.mxu0 0
  %423 = vmatpush1.bf16.msra.mxu0 0
  %424 = vmatprep.subr.bf16.mxu0 0
  %425 = vmatpush1.bf16.msra.mxu0 0
  %426 = vmatprep.subr.bf16.mxu0 0
  %427 = vmatpush1.bf16.msra.mxu0 0
  %428 = vmatprep.subr.bf16.mxu0 0
  %429 = vmatpush1.bf16.msra.mxu0 0
  %430 = vmatprep.subr.bf16.mxu0 0
  %431 = vmatpush1.bf16.msra.mxu0 %v256
  %432 = vmatprep.subr.bf16.mxu0 0
  %433 = vmatpush1.bf16.msra.mxu0 %v255
  %434 = vmatprep.subr.bf16.mxu0 0
  %435 = vmatpush2.bf16.msra.mxu0 0
  %436 = vmatprep.subr.bf16.mxu0 0
  %437 = vmatpush2.bf16.msra.mxu0 0
  %438 = vmatprep.subr.bf16.mxu0 0
  %439 = vmatpush2.bf16.msra.mxu0 0
  %440 = vmatprep.subr.bf16.mxu0 0
  %441 = vmatpush2.bf16.msra.mxu0 0
  %442 = vmatprep.subr.bf16.mxu0 0
  %443 = vmatpush2.bf16.msra.mxu0 0
  %444 = vmatprep.subr.bf16.mxu0 0
  %445 = vmatpush2.bf16.msra.mxu0 0
  %446 = vmatprep.subr.bf16.mxu0 0
  %447 = vmatpush2.bf16.msra.mxu0 0
  %448 = vmatprep.subr.bf16.mxu0 0
  %449 = vmatpush2.bf16.msra.mxu0 0
  %450 = vmatprep.mubr.bf16.mxu0 0
  %451 = vmatmul.mubr.bf16.gmra.mxu0 %v416
  %v452 = vpop.f32.mrf.mxu0
  %v453 = vadd.f32 0.0, %v452
  %v454 = vpop.f32.mrf.mxu0
  %v455 = vpop.f32.mrf.mxu0
  %v456 = vpop.f32.mrf.mxu0
  %457 = vdwg.mxu0
  %v458 = vadd.f32 %v410, %v453
  %v459 = vxor.u32 %v408, 2147483648
  %v460 = vmul.f32 %v459, 1.442695
  %v461 = vpow.pop %v460
  %v462 = vadd.f32 %v461, 1.0
  %v463 = vrcp.pop %v462
  %v464 = vmul.f32 1.0, %v463
  %v465 = vtanh.pop %v408
  %v466 = vmul.f32 %v464, %v317
  %468 = vrot.lane.b32.xlu0 %v465, 32
  %v469 = vpop.permute.xlu0 %468
  %v471 = vmul.f32 %v464, %v469
  %473 = vrot.lane.b32.xlu0 %v471, 32
  %v474 = vpop.permute.xlu0 %473
  %v476 = vadd.f32 %v466, %v474
  %v477 = vtanh.pop %v476
  %479 = vrot.lane.b32.xlu0 %v477, 32
  %v480 = vpop.permute.xlu0 %479
  %v482 = vmul.f32 %v464, %v480
  %v483 = vxor.u32 %v458, 2147483648
  %v484 = vmul.f32 %v483, 1.442695
  %v485 = vpow.pop %v484
  %v486 = vadd.f32 %v485, 1.0
  %v487 = vrcp.pop %v486
  %v488 = vmul.f32 1.0, %v487
  %v489 = vtanh.pop %v458
  %v490 = vmul.f32 %v488, %v341
  %492 = vrot.lane.b32.xlu0 %v489, 32
  %v493 = vpop.permute.xlu0 %492
  %v495 = vmul.f32 %v488, %v493
  %497 = vrot.lane.b32.xlu0 %v495, 32
  %v498 = vpop.permute.xlu0 %497
  %v500 = vadd.f32 %v490, %v498
  %v501 = vtanh.pop %v500
  %503 = vrot.lane.b32.xlu0 %v501, 32
  %v504 = vpop.permute.xlu0 %503
  %v506 = vmul.f32 %v488, %v504
  %508 = vrot.lane.b32.xlu0 %v482, 64
  %v509 = vpop.permute.xlu0 %508
  %s511 = scalar_lea.vmem [#allocation2], 8
  %512 = vst.msk [vmem:[%s511] sm:$0xff] %vm200, %v509
  %514 = vrot.lane.b32.xlu0 %v506, 64
  %v515 = vpop.permute.xlu0 %514
  %s517 = scalar_lea.vmem [#allocation3], 48
  %518 = vst.msk [vmem:[%s517] sm:$0xff] %vm200, %v515
  %s519 = scalar_lea.vmem [#allocation4], 16
  %v520 = vld [vmem:[%s519] sm:$0xff]
  %v521 = vpack.c.bf16 %v482, %v482
  %523 = vrot.lane.b32.xlu0 %v521, 64
  %v524 = vpop.permute.xlu0 %523
  %v526 = vsel %vm200, %v524, 0
  %528 = vmatprep.subr.bf16.mxu0 0
  %529 = vmatpush1.bf16.msra.mxu0 0
  %530 = vmatprep.subr.bf16.mxu0 0
  %531 = vmatpush1.bf16.msra.mxu0 0
  %532 = vmatprep.subr.bf16.mxu0 0
  %533 = vmatpush1.bf16.msra.mxu0 0
  %534 = vmatprep.subr.bf16.mxu0 0
  %535 = vmatpush1.bf16.msra.mxu0 0
  %536 = vmatprep.subr.bf16.mxu0 0
  %537 = vmatpush1.bf16.msra.mxu0 0
  %538 = vmatprep.subr.bf16.mxu0 0
  %539 = vmatpush1.bf16.msra.mxu0 0
  %540 = vmatprep.subr.bf16.mxu0 0
  %541 = vmatpush1.bf16.msra.mxu0 %v197
  %542 = vmatprep.subr.bf16.mxu0 0
  %543 = vmatpush1.bf16.msra.mxu0 %v196
  %544 = vmatprep.subr.bf16.mxu0 0
  %545 = vmatpush2.bf16.msra.mxu0 0
  %546 = vmatprep.subr.bf16.mxu0 0
  %547 = vmatpush2.bf16.msra.mxu0 0
  %548 = vmatprep.subr.bf16.mxu0 0
  %549 = vmatpush2.bf16.msra.mxu0 0
  %550 = vmatprep.subr.bf16.mxu0 0
  %551 = vmatpush2.bf16.msra.mxu0 0
  %552 = vmatprep.subr.bf16.mxu0 0
  %553 = vmatpush2.bf16.msra.mxu0 0
  %554 = vmatprep.subr.bf16.mxu0 0
  %555 = vmatpush2.bf16.msra.mxu0 0
  %556 = vmatprep.subr.bf16.mxu0 0
  %557 = vmatpush2.bf16.msra.mxu0 0
  %558 = vmatprep.subr.bf16.mxu0 0
  %559 = vmatpush2.bf16.msra.mxu0 0
  %560 = vmatprep.mubr.bf16.mxu0 0
  %561 = vmatmul.mubr.bf16.gmra.mxu0 %v526
  %v562 = vpop.f32.mrf.mxu0
  %v563 = vadd.f32 0.0, %v562
  %v564 = vpop.f32.mrf.mxu0
  %v565 = vpop.f32.mrf.mxu0
  %v566 = vpop.f32.mrf.mxu0
  %567 = vdwg.mxu0
  %v568 = vadd.f32 %v520, %v563
  %s569 = scalar_lea.vmem [#allocation5], 40
  %v570 = vld [vmem:[%s569] sm:$0xff]
  %v571 = vpack.c.bf16 %v506, %v506
  %573 = vrot.lane.b32.xlu0 %v571, 64
  %v574 = vpop.permute.xlu0 %573
  %v576 = vsel %vm200, %v574, 0
  %578 = vmatprep.subr.bf16.mxu0 0
  %579 = vmatpush1.bf16.msra.mxu0 0
  %580 = vmatprep.subr.bf16.mxu0 0
  %581 = vmatpush1.bf16.msra.mxu0 0
  %582 = vmatprep.subr.bf16.mxu0 0
  %583 = vmatpush1.bf16.msra.mxu0 0
  %584 = vmatprep.subr.bf16.mxu0 0
  %585 = vmatpush1.bf16.msra.mxu0 0
  %586 = vmatprep.subr.bf16.mxu0 0
  %587 = vmatpush1.bf16.msra.mxu0 0
  %588 = vmatprep.subr.bf16.mxu0 0
  %589 = vmatpush1.bf16.msra.mxu0 0
  %590 = vmatprep.subr.bf16.mxu0 0
  %591 = vmatpush1.bf16.msra.mxu0 %v256
  %592 = vmatprep.subr.bf16.mxu0 0
  %593 = vmatpush1.bf16.msra.mxu0 %v255
  %594 = vmatprep.subr.bf16.mxu0 0
  %595 = vmatpush2.bf16.msra.mxu0 0
  %596 = vmatprep.subr.bf16.mxu0 0
  %597 = vmatpush2.bf16.msra.mxu0 0
  %598 = vmatprep.subr.bf16.mxu0 0
  %599 = vmatpush2.bf16.msra.mxu0 0
  %600 = vmatprep.subr.bf16.mxu0 0
  %601 = vmatpush2.bf16.msra.mxu0 0
  %602 = vmatprep.subr.bf16.mxu0 0
  %603 = vmatpush2.bf16.msra.mxu0 0
  %604 = vmatprep.subr.bf16.mxu0 0
  %605 = vmatpush2.bf16.msra.mxu0 0
  %606 = vmatprep.subr.bf16.mxu0 0
  %607 = vmatpush2.bf16.msra.mxu0 0
  %608 = vmatprep.subr.bf16.mxu0 0
  %609 = vmatpush2.bf16.msra.mxu0 0
  %610 = vmatprep.mubr.bf16.mxu0 0
  %611 = vmatmul.mubr.bf16.gmra.mxu0 %v576
  %v612 = vpop.f32.mrf.mxu0
  %v613 = vadd.f32 0.0, %v612
  %v614 = vpop.f32.mrf.mxu0
  %v615 = vpop.f32.mrf.mxu0
  %v616 = vpop.f32.mrf.mxu0
  %617 = vdwg.mxu0
  %v618 = vadd.f32 %v570, %v613
  %v619 = vxor.u32 %v568, 2147483648
  %v620 = vmul.f32 %v619, 1.442695
  %v621 = vpow.pop %v620
  %v622 = vadd.f32 %v621, 1.0
  %v623 = vrcp.pop %v622
  %v624 = vmul.f32 1.0, %v623
  %v625 = vtanh.pop %v568
  %v626 = vmul.f32 %v624, %v476
  %628 = vrot.lane.b32.xlu0 %v625, 32
  %v629 = vpop.permute.xlu0 %628
  %v631 = vmul.f32 %v624, %v629
  %633 = vrot.lane.b32.xlu0 %v631, 32
  %v634 = vpop.permute.xlu0 %633
  %v636 = vadd.f32 %v626, %v634
  %v637 = vtanh.pop %v636
  %639 = vrot.lane.b32.xlu0 %v637, 32
  %v640 = vpop.permute.xlu0 %639
  %v642 = vmul.f32 %v624, %v640
  %v643 = vxor.u32 %v618, 2147483648
  %v644 = vmul.f32 %v643, 1.442695
  %v645 = vpow.pop %v644
  %v646 = vadd.f32 %v645, 1.0
  %v647 = vrcp.pop %v646
  %v648 = vmul.f32 1.0, %v647
  %v649 = vtanh.pop %v618
  %v650 = vmul.f32 %v648, %v500
  %652 = vrot.lane.b32.xlu0 %v649, 32
  %v653 = vpop.permute.xlu0 %652
  %v655 = vmul.f32 %v648, %v653
  %657 = vrot.lane.b32.xlu0 %v655, 32
  %v658 = vpop.permute.xlu0 %657
  %v660 = vadd.f32 %v650, %v658
  %v661 = vtanh.pop %v660
  %663 = vrot.lane.b32.xlu0 %v661, 32
  %v664 = vpop.permute.xlu0 %663
  %v666 = vmul.f32 %v648, %v664
  %668 = vrot.lane.b32.xlu0 %v642, 64
  %v669 = vpop.permute.xlu0 %668
  %s671 = scalar_lea.vmem [#allocation2], 16
  %672 = vst.msk [vmem:[%s671] sm:$0xff] %vm200, %v669
  %674 = vrot.lane.b32.xlu0 %v666, 64
  %v675 = vpop.permute.xlu0 %674
  %s677 = scalar_lea.vmem [#allocation3], 40
  %678 = vst.msk [vmem:[%s677] sm:$0xff] %vm200, %v675
  %s679 = scalar_lea.vmem [#allocation4], 24
  %v680 = vld [vmem:[%s679] sm:$0xff]
  %v681 = vpack.c.bf16 %v642, %v642
  %683 = vrot.lane.b32.xlu0 %v681, 64
  %v684 = vpop.permute.xlu0 %683
  %v686 = vsel %vm200, %v684, 0
  %688 = vmatprep.subr.bf16.mxu0 0
  %689 = vmatpush1.bf16.msra.mxu0 0
  %690 = vmatprep.subr.bf16.mxu0 0
  %691 = vmatpush1.bf16.msra.mxu0 0
  %692 = vmatprep.subr.bf16.mxu0 0
  %693 = vmatpush1.bf16.msra.mxu0 0
  %694 = vmatprep.subr.bf16.mxu0 0
  %695 = vmatpush1.bf16.msra.mxu0 0
  %696 = vmatprep.subr.bf16.mxu0 0
  %697 = vmatpush1.bf16.msra.mxu0 0
  %698 = vmatprep.subr.bf16.mxu0 0
  %699 = vmatpush1.bf16.msra.mxu0 0
  %700 = vmatprep.subr.bf16.mxu0 0
  %701 = vmatpush1.bf16.msra.mxu0 %v197
  %702 = vmatprep.subr.bf16.mxu0 0
  %703 = vmatpush1.bf16.msra.mxu0 %v196
  %704 = vmatprep.subr.bf16.mxu0 0
  %705 = vmatpush2.bf16.msra.mxu0 0
  %706 = vmatprep.subr.bf16.mxu0 0
  %707 = vmatpush2.bf16.msra.mxu0 0
  %708 = vmatprep.subr.bf16.mxu0 0
  %709 = vmatpush2.bf16.msra.mxu0 0
  %710 = vmatprep.subr.bf16.mxu0 0
  %711 = vmatpush2.bf16.msra.mxu0 0
  %712 = vmatprep.subr.bf16.mxu0 0
  %713 = vmatpush2.bf16.msra.mxu0 0
  %714 = vmatprep.subr.bf16.mxu0 0
  %715 = vmatpush2.bf16.msra.mxu0 0
  %716 = vmatprep.subr.bf16.mxu0 0
  %717 = vmatpush2.bf16.msra.mxu0 0
  %718 = vmatprep.subr.bf16.mxu0 0
  %719 = vmatpush2.bf16.msra.mxu0 0
  %720 = vmatprep.mubr.bf16.mxu0 0
  %721 = vmatmul.mubr.bf16.gmra.mxu0 %v686
  %v722 = vpop.f32.mrf.mxu0
  %v723 = vadd.f32 0.0, %v722
  %v724 = vpop.f32.mrf.mxu0
  %v725 = vpop.f32.mrf.mxu0
  %v726 = vpop.f32.mrf.mxu0
  %727 = vdwg.mxu0
  %v728 = vadd.f32 %v680, %v723
  %s729 = scalar_lea.vmem [#allocation5], 32
  %v730 = vld [vmem:[%s729] sm:$0xff]
  %v731 = vpack.c.bf16 %v666, %v666
  %733 = vrot.lane.b32.xlu0 %v731, 64
  %v734 = vpop.permute.xlu0 %733
  %v736 = vsel %vm200, %v734, 0
  %738 = vmatprep.subr.bf16.mxu0 0
  %739 = vmatpush1.bf16.msra.mxu0 0
  %740 = vmatprep.subr.bf16.mxu0 0
  %741 = vmatpush1.bf16.msra.mxu0 0
  %742 = vmatprep.subr.bf16.mxu0 0
  %743 = vmatpush1.bf16.msra.mxu0 0
  %744 = vmatprep.subr.bf16.mxu0 0
  %745 = vmatpush1.bf16.msra.mxu0 0
  %746 = vmatprep.subr.bf16.mxu0 0
  %747 = vmatpush1.bf16.msra.mxu0 0
  %748 = vmatprep.subr.bf16.mxu0 0
  %749 = vmatpush1.bf16.msra.mxu0 0
  %750 = vmatprep.subr.bf16.mxu0 0
  %751 = vmatpush1.bf16.msra.mxu0 %v256
  %752 = vmatprep.subr.bf16.mxu0 0
  %753 = vmatpush1.bf16.msra.mxu0 %v255
  %754 = vmatprep.subr.bf16.mxu0 0
  %755 = vmatpush2.bf16.msra.mxu0 0
  %756 = vmatprep.subr.bf16.mxu0 0
  %757 = vmatpush2.bf16.msra.mxu0 0
  %758 = vmatprep.subr.bf16.mxu0 0
  %759 = vmatpush2.bf16.msra.mxu0 0
  %760 = vmatprep.subr.bf16.mxu0 0
  %761 = vmatpush2.bf16.msra.mxu0 0
  %762 = vmatprep.subr.bf16.mxu0 0
  %763 = vmatpush2.bf16.msra.mxu0 0
  %764 = vmatprep.subr.bf16.mxu0 0
  %765 = vmatpush2.bf16.msra.mxu0 0
  %766 = vmatprep.subr.bf16.mxu0 0
  %767 = vmatpush2.bf16.msra.mxu0 0
  %768 = vmatprep.subr.bf16.mxu0 0
  %769 = vmatpush2.bf16.msra.mxu0 0
  %770 = vmatprep.mubr.bf16.mxu0 0
  %771 = vmatmul.mubr.bf16.gmra.mxu0 %v736
  %v772 = vpop.f32.mrf.mxu0
  %v773 = vadd.f32 0.0, %v772
  %v774 = vpop.f32.mrf.mxu0
  %v775 = vpop.f32.mrf.mxu0
  %v776 = vpop.f32.mrf.mxu0
  %777 = vdwg.mxu0
  %v778 = vadd.f32 %v730, %v773
  %v779 = vxor.u32 %v728, 2147483648
  %v780 = vmul.f32 %v779, 1.442695
  %v781 = vpow.pop %v780
  %v782 = vadd.f32 %v781, 1.0
  %v783 = vrcp.pop %v782
  %v784 = vmul.f32 1.0, %v783
  %v785 = vtanh.pop %v728
  %v786 = vmul.f32 %v784, %v636
  %788 = vrot.lane.b32.xlu0 %v785, 32
  %v789 = vpop.permute.xlu0 %788
  %v791 = vmul.f32 %v784, %v789
  %793 = vrot.lane.b32.xlu0 %v791, 32
  %v794 = vpop.permute.xlu0 %793
  %v796 = vadd.f32 %v786, %v794
  %v797 = vtanh.pop %v796
  %799 = vrot.lane.b32.xlu0 %v797, 32
  %v800 = vpop.permute.xlu0 %799
  %v802 = vmul.f32 %v784, %v800
  %v803 = vxor.u32 %v778, 2147483648
  %v804 = vmul.f32 %v803, 1.442695
  %v805 = vpow.pop %v804
  %v806 = vadd.f32 %v805, 1.0
  %v807 = vrcp.pop %v806
  %v808 = vmul.f32 1.0, %v807
  %v809 = vtanh.pop %v778
  %v810 = vmul.f32 %v808, %v660
  %812 = vrot.lane.b32.xlu0 %v809, 32
  %v813 = vpop.permute.xlu0 %812
  %v815 = vmul.f32 %v808, %v813
  %817 = vrot.lane.b32.xlu0 %v815, 32
  %v818 = vpop.permute.xlu0 %817
  %v820 = vadd.f32 %v810, %v818
  %v821 = vtanh.pop %v820
  %823 = vrot.lane.b32.xlu0 %v821, 32
  %v824 = vpop.permute.xlu0 %823
  %v826 = vmul.f32 %v808, %v824
  %828 = vrot.lane.b32.xlu0 %v802, 64
  %v829 = vpop.permute.xlu0 %828
  %s831 = scalar_lea.vmem [#allocation2], 24
  %832 = vst.msk [vmem:[%s831] sm:$0xff] %vm200, %v829
  %834 = vrot.lane.b32.xlu0 %v826, 64
  %v835 = vpop.permute.xlu0 %834
  %s837 = scalar_lea.vmem [#allocation3], 32
  %838 = vst.msk [vmem:[%s837] sm:$0xff] %vm200, %v835
  %s839 = scalar_lea.vmem [#allocation4], 32
  %v840 = vld [vmem:[%s839] sm:$0xff]
  %v841 = vpack.c.bf16 %v802, %v802
  %843 = vrot.lane.b32.xlu0 %v841, 64
  %v844 = vpop.permute.xlu0 %843
  %v846 = vsel %vm200, %v844, 0
  %848 = vmatprep.subr.bf16.mxu0 0
  %849 = vmatpush1.bf16.msra.mxu0 0
  %850 = vmatprep.subr.bf16.mxu0 0
  %851 = vmatpush1.bf16.msra.mxu0 0
  %852 = vmatprep.subr.bf16.mxu0 0
  %853 = vmatpush1.bf16.msra.mxu0 0
  %854 = vmatprep.subr.bf16.mxu0 0
  %855 = vmatpush1.bf16.msra.mxu0 0
  %856 = vmatprep.subr.bf16.mxu0 0
  %857 = vmatpush1.bf16.msra.mxu0 0
  %858 = vmatprep.subr.bf16.mxu0 0
  %859 = vmatpush1.bf16.msra.mxu0 0
  %860 = vmatprep.subr.bf16.mxu0 0
  %861 = vmatpush1.bf16.msra.mxu0 %v197
  %862 = vmatprep.subr.bf16.mxu0 0
  %863 = vmatpush1.bf16.msra.mxu0 %v196
  %864 = vmatprep.subr.bf16.mxu0 0
  %865 = vmatpush2.bf16.msra.mxu0 0
  %866 = vmatprep.subr.bf16.mxu0 0
  %867 = vmatpush2.bf16.msra.mxu0 0
  %868 = vmatprep.subr.bf16.mxu0 0
  %869 = vmatpush2.bf16.msra.mxu0 0
  %870 = vmatprep.subr.bf16.mxu0 0
  %871 = vmatpush2.bf16.msra.mxu0 0
  %872 = vmatprep.subr.bf16.mxu0 0
  %873 = vmatpush2.bf16.msra.mxu0 0
  %874 = vmatprep.subr.bf16.mxu0 0
  %875 = vmatpush2.bf16.msra.mxu0 0
  %876 = vmatprep.subr.bf16.mxu0 0
  %877 = vmatpush2.bf16.msra.mxu0 0
  %878 = vmatprep.subr.bf16.mxu0 0
  %879 = vmatpush2.bf16.msra.mxu0 0
  %880 = vmatprep.mubr.bf16.mxu0 0
  %881 = vmatmul.mubr.bf16.gmra.mxu0 %v846
  %v882 = vpop.f32.mrf.mxu0
  %v883 = vadd.f32 0.0, %v882
  %v884 = vpop.f32.mrf.mxu0
  %v885 = vpop.f32.mrf.mxu0
  %v886 = vpop.f32.mrf.mxu0
  %887 = vdwg.mxu0
  %v888 = vadd.f32 %v840, %v883
  %s889 = scalar_lea.vmem [#allocation5], 24
  %v890 = vld [vmem:[%s889] sm:$0xff]
  %v891 = vpack.c.bf16 %v826, %v826
  %893 = vrot.lane.b32.xlu0 %v891, 64
  %v894 = vpop.permute.xlu0 %893
  %v896 = vsel %vm200, %v894, 0
  %898 = vmatprep.subr.bf16.mxu0 0
  %899 = vmatpush1.bf16.msra.mxu0 0
  %900 = vmatprep.subr.bf16.mxu0 0
  %901 = vmatpush1.bf16.msra.mxu0 0
  %902 = vmatprep.subr.bf16.mxu0 0
  %903 = vmatpush1.bf16.msra.mxu0 0
  %904 = vmatprep.subr.bf16.mxu0 0
  %905 = vmatpush1.bf16.msra.mxu0 0
  %906 = vmatprep.subr.bf16.mxu0 0
  %907 = vmatpush1.bf16.msra.mxu0 0
  %908 = vmatprep.subr.bf16.mxu0 0
  %909 = vmatpush1.bf16.msra.mxu0 0
  %910 = vmatprep.subr.bf16.mxu0 0
  %911 = vmatpush1.bf16.msra.mxu0 %v256
  %912 = vmatprep.subr.bf16.mxu0 0
  %913 = vmatpush1.bf16.msra.mxu0 %v255
  %914 = vmatprep.subr.bf16.mxu0 0
  %915 = vmatpush2.bf16.msra.mxu0 0
  %916 = vmatprep.subr.bf16.mxu0 0
  %917 = vmatpush2.bf16.msra.mxu0 0
  %918 = vmatprep.subr.bf16.mxu0 0
  %919 = vmatpush2.bf16.msra.mxu0 0
  %920 = vmatprep.subr.bf16.mxu0 0
  %921 = vmatpush2.bf16.msra.mxu0 0
  %922 = vmatprep.subr.bf16.mxu0 0
  %923 = vmatpush2.bf16.msra.mxu0 0
  %924 = vmatprep.subr.bf16.mxu0 0
  %925 = vmatpush2.bf16.msra.mxu0 0
  %926 = vmatprep.subr.bf16.mxu0 0
  %927 = vmatpush2.bf16.msra.mxu0 0
  %928 = vmatprep.subr.bf16.mxu0 0
  %929 = vmatpush2.bf16.msra.mxu0 0
  %930 = vmatprep.mubr.bf16.mxu0 0
  %931 = vmatmul.mubr.bf16.gmra.mxu0 %v896
  %v932 = vpop.f32.mrf.mxu0
  %v933 = vadd.f32 0.0, %v932
  %v934 = vpop.f32.mrf.mxu0
  %v935 = vpop.f32.mrf.mxu0
  %v936 = vpop.f32.mrf.mxu0
  %937 = vdwg.mxu0
  %v938 = vadd.f32 %v890, %v933
  %v939 = vxor.u32 %v888, 2147483648
  %v940 = vmul.f32 %v939, 1.442695
  %v941 = vpow.pop %v940
  %v942 = vadd.f32 %v941, 1.0
  %v943 = vrcp.pop %v942
  %v944 = vmul.f32 1.0, %v943
  %v945 = vtanh.pop %v888
  %v946 = vmul.f32 %v944, %v796
  %948 = vrot.lane.b32.xlu0 %v945, 32
  %v949 = vpop.permute.xlu0 %948
  %v951 = vmul.f32 %v944, %v949
  %953 = vrot.lane.b32.xlu0 %v951, 32
  %v954 = vpop.permute.xlu0 %953
  %v956 = vadd.f32 %v946, %v954
  %v957 = vtanh.pop %v956
  %959 = vrot.lane.b32.xlu0 %v957, 32
  %v960 = vpop.permute.xlu0 %959
  %v962 = vmul.f32 %v944, %v960
  %v963 = vxor.u32 %v938, 2147483648
  %v964 = vmul.f32 %v963, 1.442695
  %v965 = vpow.pop %v964
  %v966 = vadd.f32 %v965, 1.0
  %v967 = vrcp.pop %v966
  %v968 = vmul.f32 1.0, %v967
  %v969 = vtanh.pop %v938
  %v970 = vmul.f32 %v968, %v820
  %972 = vrot.lane.b32.xlu0 %v969, 32
  %v973 = vpop.permute.xlu0 %972
  %v975 = vmul.f32 %v968, %v973
  %977 = vrot.lane.b32.xlu0 %v975, 32
  %v978 = vpop.permute.xlu0 %977
  %v980 = vadd.f32 %v970, %v978
  %v981 = vtanh.pop %v980
  %983 = vrot.lane.b32.xlu0 %v981, 32
  %v984 = vpop.permute.xlu0 %983
  %v986 = vmul.f32 %v968, %v984
  %988 = vrot.lane.b32.xlu0 %v962, 64
  %v989 = vpop.permute.xlu0 %988
  %s991 = scalar_lea.vmem [#allocation2], 32
  %992 = vst.msk [vmem:[%s991] sm:$0xff] %vm200, %v989
  %994 = vrot.lane.b32.xlu0 %v986, 64
  %v995 = vpop.permute.xlu0 %994
  %s997 = scalar_lea.vmem [#allocation3], 24
  %998 = vst.msk [vmem:[%s997] sm:$0xff] %vm200, %v995
  %s999 = scalar_lea.vmem [#allocation4], 40
  %v1000 = vld [vmem:[%s999] sm:$0xff]
  %v1001 = vpack.c.bf16 %v962, %v962
  %1003 = vrot.lane.b32.xlu0 %v1001, 64
  %v1004 = vpop.permute.xlu0 %1003
  %v1006 = vsel %vm200, %v1004, 0
  %1008 = vmatprep.subr.bf16.mxu0 0
  %1009 = vmatpush1.bf16.msra.mxu0 0
  %1010 = vmatprep.subr.bf16.mxu0 0
  %1011 = vmatpush1.bf16.msra.mxu0 0
  %1012 = vmatprep.subr.bf16.mxu0 0
  %1013 = vmatpush1.bf16.msra.mxu0 0
  %1014 = vmatprep.subr.bf16.mxu0 0
  %1015 = vmatpush1.bf16.msra.mxu0 0
  %1016 = vmatprep.subr.bf16.mxu0 0
  %1017 = vmatpush1.bf16.msra.mxu0 0
  %1018 = vmatprep.subr.bf16.mxu0 0
  %1019 = vmatpush1.bf16.msra.mxu0 0
  %1020 = vmatprep.subr.bf16.mxu0 0
  %1021 = vmatpush1.bf16.msra.mxu0 %v197
  %1022 = vmatprep.subr.bf16.mxu0 0
  %1023 = vmatpush1.bf16.msra.mxu0 %v196
  %1024 = vmatprep.subr.bf16.mxu0 0
  %1025 = vmatpush2.bf16.msra.mxu0 0
  %1026 = vmatprep.subr.bf16.mxu0 0
  %1027 = vmatpush2.bf16.msra.mxu0 0
  %1028 = vmatprep.subr.bf16.mxu0 0
  %1029 = vmatpush2.bf16.msra.mxu0 0
  %1030 = vmatprep.subr.bf16.mxu0 0
  %1031 = vmatpush2.bf16.msra.mxu0 0
  %1032 = vmatprep.subr.bf16.mxu0 0
  %1033 = vmatpush2.bf16.msra.mxu0 0
  %1034 = vmatprep.subr.bf16.mxu0 0
  %1035 = vmatpush2.bf16.msra.mxu0 0
  %1036 = vmatprep.subr.bf16.mxu0 0
  %1037 = vmatpush2.bf16.msra.mxu0 0
  %1038 = vmatprep.subr.bf16.mxu0 0
  %1039 = vmatpush2.bf16.msra.mxu0 0
  %1040 = vmatprep.mubr.bf16.mxu0 0
  %1041 = vmatmul.mubr.bf16.gmra.mxu0 %v1006
  %v1042 = vpop.f32.mrf.mxu0
  %v1043 = vadd.f32 0.0, %v1042
  %v1044 = vpop.f32.mrf.mxu0
  %v1045 = vpop.f32.mrf.mxu0
  %v1046 = vpop.f32.mrf.mxu0
  %1047 = vdwg.mxu0
  %v1048 = vadd.f32 %v1000, %v1043
  %s1049 = scalar_lea.vmem [#allocation5], 16
  %v1050 = vld [vmem:[%s1049] sm:$0xff]
  %v1051 = vpack.c.bf16 %v986, %v986
  %1053 = vrot.lane.b32.xlu0 %v1051, 64
  %v1054 = vpop.permute.xlu0 %1053
  %v1056 = vsel %vm200, %v1054, 0
  %1058 = vmatprep.subr.bf16.mxu0 0
  %1059 = vmatpush1.bf16.msra.mxu0 0
  %1060 = vmatprep.subr.bf16.mxu0 0
  %1061 = vmatpush1.bf16.msra.mxu0 0
  %1062 = vmatprep.subr.bf16.mxu0 0
  %1063 = vmatpush1.bf16.msra.mxu0 0
  %1064 = vmatprep.subr.bf16.mxu0 0
  %1065 = vmatpush1.bf16.msra.mxu0 0
  %1066 = vmatprep.subr.bf16.mxu0 0
  %1067 = vmatpush1.bf16.msra.mxu0 0
  %1068 = vmatprep.subr.bf16.mxu0 0
  %1069 = vmatpush1.bf16.msra.mxu0 0
  %1070 = vmatprep.subr.bf16.mxu0 0
  %1071 = vmatpush1.bf16.msra.mxu0 %v256
  %1072 = vmatprep.subr.bf16.mxu0 0
  %1073 = vmatpush1.bf16.msra.mxu0 %v255
  %1074 = vmatprep.subr.bf16.mxu0 0
  %1075 = vmatpush2.bf16.msra.mxu0 0
  %1076 = vmatprep.subr.bf16.mxu0 0
  %1077 = vmatpush2.bf16.msra.mxu0 0
  %1078 = vmatprep.subr.bf16.mxu0 0
  %1079 = vmatpush2.bf16.msra.mxu0 0
  %1080 = vmatprep.subr.bf16.mxu0 0
  %1081 = vmatpush2.bf16.msra.mxu0 0
  %1082 = vmatprep.subr.bf16.mxu0 0
  %1083 = vmatpush2.bf16.msra.mxu0 0
  %1084 = vmatprep.subr.bf16.mxu0 0
  %1085 = vmatpush2.bf16.msra.mxu0 0
  %1086 = vmatprep.subr.bf16.mxu0 0
  %1087 = vmatpush2.bf16.msra.mxu0 0
  %1088 = vmatprep.subr.bf16.mxu0 0
  %1089 = vmatpush2.bf16.msra.mxu0 0
  %1090 = vmatprep.mubr.bf16.mxu0 0
  %1091 = vmatmul.mubr.bf16.gmra.mxu0 %v1056
  %v1092 = vpop.f32.mrf.mxu0
  %v1093 = vadd.f32 0.0, %v1092
  %v1094 = vpop.f32.mrf.mxu0
  %v1095 = vpop.f32.mrf.mxu0
  %v1096 = vpop.f32.mrf.mxu0
  %1097 = vdwg.mxu0
  %v1098 = vadd.f32 %v1050, %v1093
  %v1099 = vxor.u32 %v1048, 2147483648
  %v1100 = vmul.f32 %v1099, 1.442695
  %v1101 = vpow.pop %v1100
  %v1102 = vadd.f32 %v1101, 1.0
  %v1103 = vrcp.pop %v1102
  %v1104 = vmul.f32 1.0, %v1103
  %v1105 = vtanh.pop %v1048
  %v1106 = vmul.f32 %v1104, %v956
  %1108 = vrot.lane.b32.xlu0 %v1105, 32
  %v1109 = vpop.permute.xlu0 %1108
  %v1111 = vmul.f32 %v1104, %v1109
  %1113 = vrot.lane.b32.xlu0 %v1111, 32
  %v1114 = vpop.permute.xlu0 %1113
  %v1116 = vadd.f32 %v1106, %v1114
  %v1117 = vtanh.pop %v1116
  %1119 = vrot.lane.b32.xlu0 %v1117, 32
  %v1120 = vpop.permute.xlu0 %1119
  %v1122 = vmul.f32 %v1104, %v1120
  %v1123 = vxor.u32 %v1098, 2147483648
  %v1124 = vmul.f32 %v1123, 1.442695
  %v1125 = vpow.pop %v1124
  %v1126 = vadd.f32 %v1125, 1.0
  %v1127 = vrcp.pop %v1126
  %v1128 = vmul.f32 1.0, %v1127
  %v1129 = vtanh.pop %v1098
  %v1130 = vmul.f32 %v1128, %v980
  %1132 = vrot.lane.b32.xlu0 %v1129, 32
  %v1133 = vpop.permute.xlu0 %1132
  %v1135 = vmul.f32 %v1128, %v1133
  %1137 = vrot.lane.b32.xlu0 %v1135, 32
  %v1138 = vpop.permute.xlu0 %1137
  %v1140 = vadd.f32 %v1130, %v1138
  %v1141 = vtanh.pop %v1140
  %1143 = vrot.lane.b32.xlu0 %v1141, 32
  %v1144 = vpop.permute.xlu0 %1143
  %v1146 = vmul.f32 %v1128, %v1144
  %1148 = vrot.lane.b32.xlu0 %v1122, 64
  %v1149 = vpop.permute.xlu0 %1148
  %s1151 = scalar_lea.vmem [#allocation2], 40
  %1152 = vst.msk [vmem:[%s1151] sm:$0xff] %vm200, %v1149
  %1154 = vrot.lane.b32.xlu0 %v1146, 64
  %v1155 = vpop.permute.xlu0 %1154
  %s1157 = scalar_lea.vmem [#allocation3], 16
  %1158 = vst.msk [vmem:[%s1157] sm:$0xff] %vm200, %v1155
  %s1159 = scalar_lea.vmem [#allocation4], 48
  %v1160 = vld [vmem:[%s1159] sm:$0xff]
  %v1161 = vpack.c.bf16 %v1122, %v1122
  %1163 = vrot.lane.b32.xlu0 %v1161, 64
  %v1164 = vpop.permute.xlu0 %1163
  %v1166 = vsel %vm200, %v1164, 0
  %1168 = vmatprep.subr.bf16.mxu0 0
  %1169 = vmatpush1.bf16.msra.mxu0 0
  %1170 = vmatprep.subr.bf16.mxu0 0
  %1171 = vmatpush1.bf16.msra.mxu0 0
  %1172 = vmatprep.subr.bf16.mxu0 0
  %1173 = vmatpush1.bf16.msra.mxu0 0
  %1174 = vmatprep.subr.bf16.mxu0 0
  %1175 = vmatpush1.bf16.msra.mxu0 0
  %1176 = vmatprep.subr.bf16.mxu0 0
  %1177 = vmatpush1.bf16.msra.mxu0 0
  %1178 = vmatprep.subr.bf16.mxu0 0
  %1179 = vmatpush1.bf16.msra.mxu0 0
  %1180 = vmatprep.subr.bf16.mxu0 0
  %1181 = vmatpush1.bf16.msra.mxu0 %v197
  %1182 = vmatprep.subr.bf16.mxu0 0
  %1183 = vmatpush1.bf16.msra.mxu0 %v196
  %1184 = vmatprep.subr.bf16.mxu0 0
  %1185 = vmatpush2.bf16.msra.mxu0 0
  %1186 = vmatprep.subr.bf16.mxu0 0
  %1187 = vmatpush2.bf16.msra.mxu0 0
  %1188 = vmatprep.subr.bf16.mxu0 0
  %1189 = vmatpush2.bf16.msra.mxu0 0
  %1190 = vmatprep.subr.bf16.mxu0 0
  %1191 = vmatpush2.bf16.msra.mxu0 0
  %1192 = vmatprep.subr.bf16.mxu0 0
  %1193 = vmatpush2.bf16.msra.mxu0 0
  %1194 = vmatprep.subr.bf16.mxu0 0
  %1195 = vmatpush2.bf16.msra.mxu0 0
  %1196 = vmatprep.subr.bf16.mxu0 0
  %1197 = vmatpush2.bf16.msra.mxu0 0
  %1198 = vmatprep.subr.bf16.mxu0 0
  %1199 = vmatpush2.bf16.msra.mxu0 0
  %1200 = vmatprep.mubr.bf16.mxu0 0
  %1201 = vmatmul.mubr.bf16.gmra.mxu0 %v1166
  %v1202 = vpop.f32.mrf.mxu0
  %v1203 = vadd.f32 0.0, %v1202
  %v1204 = vpop.f32.mrf.mxu0
  %v1205 = vpop.f32.mrf.mxu0
  %v1206 = vpop.f32.mrf.mxu0
  %1207 = vdwg.mxu0
  %v1208 = vadd.f32 %v1160, %v1203
  %s1209 = scalar_lea.vmem [#allocation5], 8
  %v1210 = vld [vmem:[%s1209] sm:$0xff]
  %v1211 = vpack.c.bf16 %v1146, %v1146
  %1213 = vrot.lane.b32.xlu0 %v1211, 64
  %v1214 = vpop.permute.xlu0 %1213
  %v1216 = vsel %vm200, %v1214, 0
  %1218 = vmatprep.subr.bf16.mxu0 0
  %1219 = vmatpush1.bf16.msra.mxu0 0
  %1220 = vmatprep.subr.bf16.mxu0 0
  %1221 = vmatpush1.bf16.msra.mxu0 0
  %1222 = vmatprep.subr.bf16.mxu0 0
  %1223 = vmatpush1.bf16.msra.mxu0 0
  %1224 = vmatprep.subr.bf16.mxu0 0
  %1225 = vmatpush1.bf16.msra.mxu0 0
  %1226 = vmatprep.subr.bf16.mxu0 0
  %1227 = vmatpush1.bf16.msra.mxu0 0
  %1228 = vmatprep.subr.bf16.mxu0 0
  %1229 = vmatpush1.bf16.msra.mxu0 0
  %1230 = vmatprep.subr.bf16.mxu0 0
  %1231 = vmatpush1.bf16.msra.mxu0 %v256
  %1232 = vmatprep.subr.bf16.mxu0 0
  %1233 = vmatpush1.bf16.msra.mxu0 %v255
  %1234 = vmatprep.subr.bf16.mxu0 0
  %1235 = vmatpush2.bf16.msra.mxu0 0
  %1236 = vmatprep.subr.bf16.mxu0 0
  %1237 = vmatpush2.bf16.msra.mxu0 0
  %1238 = vmatprep.subr.bf16.mxu0 0
  %1239 = vmatpush2.bf16.msra.mxu0 0
  %1240 = vmatprep.subr.bf16.mxu0 0
  %1241 = vmatpush2.bf16.msra.mxu0 0
  %1242 = vmatprep.subr.bf16.mxu0 0
  %1243 = vmatpush2.bf16.msra.mxu0 0
  %1244 = vmatprep.subr.bf16.mxu0 0
  %1245 = vmatpush2.bf16.msra.mxu0 0
  %1246 = vmatprep.subr.bf16.mxu0 0
  %1247 = vmatpush2.bf16.msra.mxu0 0
  %1248 = vmatprep.subr.bf16.mxu0 0
  %1249 = vmatpush2.bf16.msra.mxu0 0
  %1250 = vmatprep.mubr.bf16.mxu0 0
  %1251 = vmatmul.mubr.bf16.gmra.mxu0 %v1216
  %v1252 = vpop.f32.mrf.mxu0
  %v1253 = vadd.f32 0.0, %v1252
  %v1254 = vpop.f32.mrf.mxu0
  %v1255 = vpop.f32.mrf.mxu0
  %v1256 = vpop.f32.mrf.mxu0
  %1257 = vdwg.mxu0
  %v1258 = vadd.f32 %v1210, %v1253
  %v1259 = vxor.u32 %v1208, 2147483648
  %v1260 = vmul.f32 %v1259, 1.442695
  %v1261 = vpow.pop %v1260
  %v1262 = vadd.f32 %v1261, 1.0
  %v1263 = vrcp.pop %v1262
  %v1264 = vmul.f32 1.0, %v1263
  %v1265 = vtanh.pop %v1208
  %v1266 = vmul.f32 %v1264, %v1116
  %1268 = vrot.lane.b32.xlu0 %v1265, 32
  %v1269 = vpop.permute.xlu0 %1268
  %v1271 = vmul.f32 %v1264, %v1269
  %1273 = vrot.lane.b32.xlu0 %v1271, 32
  %v1274 = vpop.permute.xlu0 %1273
  %v1276 = vadd.f32 %v1266, %v1274
  %v1277 = vtanh.pop %v1276
  %1279 = vrot.lane.b32.xlu0 %v1277, 32
  %v1280 = vpop.permute.xlu0 %1279
  %v1282 = vmul.f32 %v1264, %v1280
  %v1283 = vxor.u32 %v1258, 2147483648
  %v1284 = vmul.f32 %v1283, 1.442695
  %v1285 = vpow.pop %v1284
  %v1286 = vadd.f32 %v1285, 1.0
  %v1287 = vrcp.pop %v1286
  %v1288 = vmul.f32 1.0, %v1287
  %v1289 = vtanh.pop %v1258
  %v1290 = vmul.f32 %v1288, %v1140
  %1292 = vrot.lane.b32.xlu0 %v1289, 32
  %v1293 = vpop.permute.xlu0 %1292
  %v1295 = vmul.f32 %v1288, %v1293
  %1297 = vrot.lane.b32.xlu0 %v1295, 32
  %v1298 = vpop.permute.xlu0 %1297
  %v1300 = vadd.f32 %v1290, %v1298
  %v1301 = vtanh.pop %v1300
  %1303 = vrot.lane.b32.xlu0 %v1301, 32
  %v1304 = vpop.permute.xlu0 %1303
  %v1306 = vmul.f32 %v1288, %v1304
  %1308 = vrot.lane.b32.xlu0 %v1282, 64
  %v1309 = vpop.permute.xlu0 %1308
  %s1311 = scalar_lea.vmem [#allocation2], 48
  %1312 = vst.msk [vmem:[%s1311] sm:$0xff] %vm200, %v1309
  %1314 = vrot.lane.b32.xlu0 %v1306, 64
  %v1315 = vpop.permute.xlu0 %1314
  %s1317 = scalar_lea.vmem [#allocation3], 8
  %1318 = vst.msk [vmem:[%s1317] sm:$0xff] %vm200, %v1315
  %s1319 = scalar_lea.vmem [#allocation4], 56
  %v1320 = vld [vmem:[%s1319] sm:$0xff]
  %v1321 = vpack.c.bf16 %v1282, %v1282
  %1323 = vrot.lane.b32.xlu0 %v1321, 64
  %v1324 = vpop.permute.xlu0 %1323
  %v1326 = vsel %vm200, %v1324, 0
  %1328 = vmatprep.subr.bf16.mxu0 0
  %1329 = vmatpush1.bf16.msra.mxu0 0
  %1330 = vmatprep.subr.bf16.mxu0 0
  %1331 = vmatpush1.bf16.msra.mxu0 0
  %1332 = vmatprep.subr.bf16.mxu0 0
  %1333 = vmatpush1.bf16.msra.mxu0 0
  %1334 = vmatprep.subr.bf16.mxu0 0
  %1335 = vmatpush1.bf16.msra.mxu0 0
  %1336 = vmatprep.subr.bf16.mxu0 0
  %1337 = vmatpush1.bf16.msra.mxu0 0
  %1338 = vmatprep.subr.bf16.mxu0 0
  %1339 = vmatpush1.bf16.msra.mxu0 0
  %1340 = vmatprep.subr.bf16.mxu0 0
  %1341 = vmatpush1.bf16.msra.mxu0 %v197
  %1342 = vmatprep.subr.bf16.mxu0 0
  %1343 = vmatpush1.bf16.msra.mxu0 %v196
  %1344 = vmatprep.subr.bf16.mxu0 0
  %1345 = vmatpush2.bf16.msra.mxu0 0
  %1346 = vmatprep.subr.bf16.mxu0 0
  %1347 = vmatpush2.bf16.msra.mxu0 0
  %1348 = vmatprep.subr.bf16.mxu0 0
  %1349 = vmatpush2.bf16.msra.mxu0 0
  %1350 = vmatprep.subr.bf16.mxu0 0
  %1351 = vmatpush2.bf16.msra.mxu0 0
  %1352 = vmatprep.subr.bf16.mxu0 0
  %1353 = vmatpush2.bf16.msra.mxu0 0
  %1354 = vmatprep.subr.bf16.mxu0 0
  %1355 = vmatpush2.bf16.msra.mxu0 0
  %1356 = vmatprep.subr.bf16.mxu0 0
  %1357 = vmatpush2.bf16.msra.mxu0 0
  %1358 = vmatprep.subr.bf16.mxu0 0
  %1359 = vmatpush2.bf16.msra.mxu0 0
  %1360 = vmatprep.mubr.bf16.mxu0 0
  %1361 = vmatmul.mubr.bf16.gmra.mxu0 %v1326
  %v1362 = vpop.f32.mrf.mxu0
  %v1363 = vadd.f32 0.0, %v1362
  %v1364 = vpop.f32.mrf.mxu0
  %v1365 = vpop.f32.mrf.mxu0
  %v1366 = vpop.f32.mrf.mxu0
  %1367 = vdwg.mxu0
  %v1368 = vadd.f32 %v1320, %v1363
  %v1369 = vld [vmem:[#allocation5] sm:$0xff]
  %v1370 = vpack.c.bf16 %v1306, %v1306
  %1372 = vrot.lane.b32.xlu0 %v1370, 64
  %v1373 = vpop.permute.xlu0 %1372
  %v1375 = vsel %vm200, %v1373, 0
  %1377 = vmatprep.subr.bf16.mxu0 0
  %1378 = vmatpush1.bf16.msra.mxu0 0
  %1379 = vmatprep.subr.bf16.mxu0 0
  %1380 = vmatpush1.bf16.msra.mxu0 0
  %1381 = vmatprep.subr.bf16.mxu0 0
  %1382 = vmatpush1.bf16.msra.mxu0 0
  %1383 = vmatprep.subr.bf16.mxu0 0
  %1384 = vmatpush1.bf16.msra.mxu0 0
  %1385 = vmatprep.subr.bf16.mxu0 0
  %1386 = vmatpush1.bf16.msra.mxu0 0
  %1387 = vmatprep.subr.bf16.mxu0 0
  %1388 = vmatpush1.bf16.msra.mxu0 0
  %1389 = vmatprep.subr.bf16.mxu0 0
  %1390 = vmatpush1.bf16.msra.mxu0 %v256
  %1391 = vmatprep.subr.bf16.mxu0 0
  %1392 = vmatpush1.bf16.msra.mxu0 %v255
  %1393 = vmatprep.subr.bf16.mxu0 0
  %1394 = vmatpush2.bf16.msra.mxu0 0
  %1395 = vmatprep.subr.bf16.mxu0 0
  %1396 = vmatpush2.bf16.msra.mxu0 0
  %1397 = vmatprep.subr.bf16.mxu0 0
  %1398 = vmatpush2.bf16.msra.mxu0 0
  %1399 = vmatprep.subr.bf16.mxu0 0
  %1400 = vmatpush2.bf16.msra.mxu0 0
  %1401 = vmatprep.subr.bf16.mxu0 0
  %1402 = vmatpush2.bf16.msra.mxu0 0
  %1403 = vmatprep.subr.bf16.mxu0 0
  %1404 = vmatpush2.bf16.msra.mxu0 0
  %1405 = vmatprep.subr.bf16.mxu0 0
  %1406 = vmatpush2.bf16.msra.mxu0 0
  %1407 = vmatprep.subr.bf16.mxu0 0
  %1408 = vmatpush2.bf16.msra.mxu0 0
  %1409 = vmatprep.mubr.bf16.mxu0 0
  %1410 = vmatmul.mubr.bf16.gmra.mxu0 %v1375
  %v1411 = vpop.f32.mrf.mxu0
  %v1412 = vadd.f32 0.0, %v1411
  %v1413 = vpop.f32.mrf.mxu0
  %v1414 = vpop.f32.mrf.mxu0
  %v1415 = vpop.f32.mrf.mxu0
  %1416 = vdwg.mxu0
  %v1417 = vadd.f32 %v1369, %v1412
  %v1418 = vxor.u32 %v1368, 2147483648
  %v1419 = vmul.f32 %v1418, 1.442695
  %v1420 = vpow.pop %v1419
  %v1421 = vadd.f32 %v1420, 1.0
  %v1422 = vrcp.pop %v1421
  %v1423 = vmul.f32 1.0, %v1422
  %v1424 = vtanh.pop %v1368
  %v1425 = vmul.f32 %v1423, %v1276
  %1427 = vrot.lane.b32.xlu0 %v1424, 32
  %v1428 = vpop.permute.xlu0 %1427
  %v1430 = vmul.f32 %v1423, %v1428
  %1432 = vrot.lane.b32.xlu0 %v1430, 32
  %v1433 = vpop.permute.xlu0 %1432
  %v1435 = vadd.f32 %v1425, %v1433
  %v1436 = vtanh.pop %v1435
  %1438 = vrot.lane.b32.xlu0 %v1436, 32
  %v1439 = vpop.permute.xlu0 %1438
  %v1441 = vmul.f32 %v1423, %v1439
  %v1442 = vxor.u32 %v1417, 2147483648
  %v1443 = vmul.f32 %v1442, 1.442695
  %v1444 = vpow.pop %v1443
  %v1445 = vadd.f32 %v1444, 1.0
  %v1446 = vrcp.pop %v1445
  %v1447 = vmul.f32 1.0, %v1446
  %v1448 = vtanh.pop %v1417
  %v1449 = vmul.f32 %v1447, %v1300
  %1451 = vrot.lane.b32.xlu0 %v1448, 32
  %v1452 = vpop.permute.xlu0 %1451
  %v1454 = vmul.f32 %v1447, %v1452
  %1456 = vrot.lane.b32.xlu0 %v1454, 32
  %v1457 = vpop.permute.xlu0 %1456
  %v1459 = vadd.f32 %v1449, %v1457
  %v1460 = vtanh.pop %v1459
  %1462 = vrot.lane.b32.xlu0 %v1460, 32
  %v1463 = vpop.permute.xlu0 %1462
  %v1465 = vmul.f32 %v1447, %v1463
  %1467 = vrot.lane.b32.xlu0 %v1441, 64
  %v1468 = vpop.permute.xlu0 %1467
  %s1470 = scalar_lea.vmem [#allocation2], 56
  %1471 = vst.msk [vmem:[%s1470] sm:$0xff] %vm200, %v1468
  %1473 = vrot.lane.b32.xlu0 %v1465, 64
  %v1474 = vpop.permute.xlu0 %1473
  %1476 = vst.msk [vmem:[#allocation3] sm:$0xff] %vm200, %v1474
  %v1477 = vld [vmem:[%s9] sm:$0x1]
  %v1478 = vld [vmem:[%s12] sm:$0x1]
  %v1479 = vld [vmem:[%s7] sm:$0xf]
  %v1480 = vld [vmem:[%s7 + $0x4] sm:$0xf]
  %v1481 = vld [vmem:[%s7 + $0x8] sm:$0xf]
  %v1482 = vld [vmem:[%s7 + $0xc] sm:$0xf]
  %v1483 = vld [vmem:[%s7 + $0x10] sm:$0xf]
  %v1484 = vld [vmem:[%s7 + $0x14] sm:$0xf]
  %v1485 = vld [vmem:[%s7 + $0x18] sm:$0xf]
  %v1486 = vld [vmem:[%s7 + $0x1c] sm:$0xf]
  %v1487 = vld [vmem:[%s10] sm:$0xf]
  %v1488 = vld [vmem:[%s10 + $0x4] sm:$0xf]
  %v1489 = vld [vmem:[%s10 + $0x8] sm:$0xf]
  %v1490 = vld [vmem:[%s10 + $0xc] sm:$0xf]
  %v1491 = vld [vmem:[%s10 + $0x10] sm:$0xf]
  %v1492 = vld [vmem:[%s10 + $0x14] sm:$0xf]
  %v1493 = vld [vmem:[%s10 + $0x18] sm:$0xf]
  %v1494 = vld [vmem:[%s10 + $0x1c] sm:$0xf]
  loop: start=0, step=1, limit=8
  $region69: #{textrnn_forward.1} parent=0 // loop_pre_header
    _
  $region70: #{textrnn_forward.1} parent=0 // loop_header
    %s1496 = sphi 0, %s1500
    %p1497 = scmp.ge.s32.totalorder %s1496, 8
  $region71: #{textrnn_forward.1} parent=0 // loop_header_branch
    %1499 = sbr.rel (%p1497) target = $region75
  $region72: #{textrnn_forward.1} parent=0 // loop_body
    %s1501 = smul.u32 %s1496, 8
    %s1502 = scalar_lea.vmem [#allocation2], %s1501
    %v1503 = vld [vmem:[%s1502] sm:$0xff]
    %v1504 = vpack.c.bf16 %v1503, %v1503
    %s1505 = scalar_lea.vmem [#allocation3], %s1501
    %v1506 = vld [vmem:[%s1505] sm:$0xff]
    %v1507 = vpack.c.bf16 %v1506, %v1506
    %v1512 = vunpack.c.l.b16 %v1483
    %v1513 = vunpack.c.l.b16 %v1484
    %v1514 = vunpack.c.l.b16 %v1485
    %v1515 = vunpack.c.l.b16 %v1486
    %v1516 = vpack.c.b16 %v1513, %v1512
    %v1517 = vpack.c.b16 %v1515, %v1514
    %v1521 = vsel %vm200, %v1507, 0
    %1523 = vmatprep.subr.bf16.mxu0 0
    %1524 = vmatpush1.bf16.msra.mxu0 0
    %1525 = vmatprep.subr.bf16.mxu0 0
    %1526 = vmatpush1.bf16.msra.mxu0 0
    %1527 = vmatprep.subr.bf16.mxu0 0
    %1528 = vmatpush1.bf16.msra.mxu0 0
    %1529 = vmatprep.subr.bf16.mxu0 0
    %1530 = vmatpush1.bf16.msra.mxu0 0
    %1531 = vmatprep.subr.bf16.mxu0 0
    %1532 = vmatpush1.bf16.msra.mxu0 0
    %1533 = vmatprep.subr.bf16.mxu0 0
    %1534 = vmatpush1.bf16.msra.mxu0 0
    %1535 = vmatprep.subr.bf16.mxu0 0
    %1536 = vmatpush1.bf16.msra.mxu0 %v1517
    %1537 = vmatprep.subr.bf16.mxu0 0
    %1538 = vmatpush1.bf16.msra.mxu0 %v1516
    %1539 = vmatprep.subr.bf16.mxu0 0
    %1540 = vmatpush2.bf16.msra.mxu0 0
    %1541 = vmatprep.subr.bf16.mxu0 0
    %1542 = vmatpush2.bf16.msra.mxu0 0
    %1543 = vmatprep.subr.bf16.mxu0 0
    %1544 = vmatpush2.bf16.msra.mxu0 0
    %1545 = vmatprep.subr.bf16.mxu0 0
    %1546 = vmatpush2.bf16.msra.mxu0 0
    %1547 = vmatprep.subr.bf16.mxu0 0
    %1548 = vmatpush2.bf16.msra.mxu0 0
    %1549 = vmatprep.subr.bf16.mxu0 0
    %1550 = vmatpush2.bf16.msra.mxu0 0
    %1551 = vmatprep.subr.bf16.mxu0 0
    %1552 = vmatpush2.bf16.msra.mxu0 0
    %1553 = vmatprep.subr.bf16.mxu0 0
    %1554 = vmatpush2.bf16.msra.mxu0 0
    %1555 = vmatprep.mubr.bf16.mxu0 0
    %1556 = vmatmul.mubr.bf16.gmra.mxu0 %v1521
    %v1557 = vpop.f32.mrf.mxu0
    %v1558 = vadd.f32 0.0, %v1557
    %v1559 = vpop.f32.mrf.mxu0
    %v1560 = vpop.f32.mrf.mxu0
    %v1561 = vpop.f32.mrf.mxu0
    %1562 = vdwg.mxu0
    %v1567 = vunpack.c.l.b16 %v1479
    %v1568 = vunpack.c.l.b16 %v1480
    %v1569 = vunpack.c.l.b16 %v1481
    %v1570 = vunpack.c.l.b16 %v1482
    %v1571 = vpack.c.b16 %v1568, %v1567
    %v1572 = vpack.c.b16 %v1570, %v1569
    %v1576 = vsel %vm200, %v1504, 0
    %1578 = vmatprep.subr.bf16.mxu0 0
    %1579 = vmatpush1.bf16.msra.mxu0 0
    %1580 = vmatprep.subr.bf16.mxu0 0
    %1581 = vmatpush1.bf16.msra.mxu0 0
    %1582 = vmatprep.subr.bf16.mxu0 0
    %1583 = vmatpush1.bf16.msra.mxu0 0
    %1584 = vmatprep.subr.bf16.mxu0 0
    %1585 = vmatpush1.bf16.msra.mxu0 0
    %1586 = vmatprep.subr.bf16.mxu0 0
    %1587 = vmatpush1.bf16.msra.mxu0 0
    %1588 = vmatprep.subr.bf16.mxu0 0
    %1589 = vmatpush1.bf16.msra.mxu0 0
    %1590 = vmatprep.subr.bf16.mxu0 0
    %1591 = vmatpush1.bf16.msra.mxu0 %v1572
    %1592 = vmatprep.subr.bf16.mxu0 0
    %1593 = vmatpush1.bf16.msra.mxu0 %v1571
    %1594 = vmatprep.subr.bf16.mxu0 0
    %1595 = vmatpush2.bf16.msra.mxu0 0
    %1596 = vmatprep.subr.bf16.mxu0 0
    %1597 = vmatpush2.bf16.msra.mxu0 0
    %1598 = vmatprep.subr.bf16.mxu0 0
    %1599 = vmatpush2.bf16.msra.mxu0 0
    %1600 = vmatprep.subr.bf16.mxu0 0
    %1601 = vmatpush2.bf16.msra.mxu0 0
    %1602 = vmatprep.subr.bf16.mxu0 0
    %1603 = vmatpush2.bf16.msra.mxu0 0
    %1604 = vmatprep.subr.bf16.mxu0 0
    %1605 = vmatpush2.bf16.msra.mxu0 0
    %1606 = vmatprep.subr.bf16.mxu0 0
    %1607 = vmatpush2.bf16.msra.mxu0 0
    %1608 = vmatprep.subr.bf16.mxu0 0
    %1609 = vmatpush2.bf16.msra.mxu0 0
    %1610 = vmatprep.mubr.bf16.mxu0 0
    %1611 = vmatmul.mubr.bf16.gmra.mxu0 %v1576
    %v1612 = vpop.f32.mrf.mxu0
    %v1613 = vadd.f32 %v1558, %v1612
    %v1614 = vpop.f32.mrf.mxu0
    %v1615 = vpop.f32.mrf.mxu0
    %v1616 = vpop.f32.mrf.mxu0
    %1617 = vdwg.mxu0
    %v1619 = vlaneseq
    %v1620 = vshrl.u32 %v1619, 7
    %v1621 = vsub.s32 0, %v1620
    %v1622 = vrot.slane %v1477, %v1621
    %v1624 = vadd.f32 %v1613, %v1622
    %s1625 = scalar_lea.vmem [#allocation4], %s1501
    %1626 = vst [vmem:[%s1625] sm:$0xff] %v1624
    %v1631 = vunpack.c.l.b16 %v1491
    %v1632 = vunpack.c.l.b16 %v1492
    %v1633 = vunpack.c.l.b16 %v1493
    %v1634 = vunpack.c.l.b16 %v1494
    %v1635 = vpack.c.b16 %v1632, %v1631
    %v1636 = vpack.c.b16 %v1634, %v1633
    %1639 = vmatprep.subr.bf16.mxu0 0
    %1640 = vmatpush1.bf16.msra.mxu0 0
    %1641 = vmatprep.subr.bf16.mxu0 0
    %1642 = vmatpush1.bf16.msra.mxu0 0
    %1643 = vmatprep.subr.bf16.mxu0 0
    %1644 = vmatpush1.bf16.msra.mxu0 0
    %1645 = vmatprep.subr.bf16.mxu0 0
    %1646 = vmatpush1.bf16.msra.mxu0 0
    %1647 = vmatprep.subr.bf16.mxu0 0
    %1648 = vmatpush1.bf16.msra.mxu0 0
    %1649 = vmatprep.subr.bf16.mxu0 0
    %1650 = vmatpush1.bf16.msra.mxu0 0
    %1651 = vmatprep.subr.bf16.mxu0 0
    %1652 = vmatpush1.bf16.msra.mxu0 %v1636
    %1653 = vmatprep.subr.bf16.mxu0 0
    %1654 = vmatpush1.bf16.msra.mxu0 %v1635
    %1655 = vmatprep.subr.bf16.mxu0 0
    %1656 = vmatpush2.bf16.msra.mxu0 0
    %1657 = vmatprep.subr.bf16.mxu0 0
    %1658 = vmatpush2.bf16.msra.mxu0 0
    %1659 = vmatprep.subr.bf16.mxu0 0
    %1660 = vmatpush2.bf16.msra.mxu0 0
    %1661 = vmatprep.subr.bf16.mxu0 0
    %1662 = vmatpush2.bf16.msra.mxu0 0
    %1663 = vmatprep.subr.bf16.mxu0 0
    %1664 = vmatpush2.bf16.msra.mxu0 0
    %1665 = vmatprep.subr.bf16.mxu0 0
    %1666 = vmatpush2.bf16.msra.mxu0 0
    %1667 = vmatprep.subr.bf16.mxu0 0
    %1668 = vmatpush2.bf16.msra.mxu0 0
    %1669 = vmatprep.subr.bf16.mxu0 0
    %1670 = vmatpush2.bf16.msra.mxu0 0
    %1671 = vmatprep.mubr.bf16.mxu0 0
    %1672 = vmatmul.mubr.bf16.gmra.mxu0 %v1521
    %v1673 = vpop.f32.mrf.mxu0
    %v1674 = vadd.f32 0.0, %v1673
    %v1675 = vpop.f32.mrf.mxu0
    %v1676 = vpop.f32.mrf.mxu0
    %v1677 = vpop.f32.mrf.mxu0
    %1678 = vdwg.mxu0
    %v1683 = vunpack.c.l.b16 %v1487
    %v1684 = vunpack.c.l.b16 %v1488
    %v1685 = vunpack.c.l.b16 %v1489
    %v1686 = vunpack.c.l.b16 %v1490
    %v1687 = vpack.c.b16 %v1684, %v1683
    %v1688 = vpack.c.b16 %v1686, %v1685
    %1691 = vmatprep.subr.bf16.mxu0 0
    %1692 = vmatpush1.bf16.msra.mxu0 0
    %1693 = vmatprep.subr.bf16.mxu0 0
    %1694 = vmatpush1.bf16.msra.mxu0 0
    %1695 = vmatprep.subr.bf16.mxu0 0
    %1696 = vmatpush1.bf16.msra.mxu0 0
    %1697 = vmatprep.subr.bf16.mxu0 0
    %1698 = vmatpush1.bf16.msra.mxu0 0
    %1699 = vmatprep.subr.bf16.mxu0 0
    %1700 = vmatpush1.bf16.msra.mxu0 0
    %1701 = vmatprep.subr.bf16.mxu0 0
    %1702 = vmatpush1.bf16.msra.mxu0 0
    %1703 = vmatprep.subr.bf16.mxu0 0
    %1704 = vmatpush1.bf16.msra.mxu0 %v1688
    %1705 = vmatprep.subr.bf16.mxu0 0
    %1706 = vmatpush1.bf16.msra.mxu0 %v1687
    %1707 = vmatprep.subr.bf16.mxu0 0
    %1708 = vmatpush2.bf16.msra.mxu0 0
    %1709 = vmatprep.subr.bf16.mxu0 0
    %1710 = vmatpush2.bf16.msra.mxu0 0
    %1711 = vmatprep.subr.bf16.mxu0 0
    %1712 = vmatpush2.bf16.msra.mxu0 0
    %1713 = vmatprep.subr.bf16.mxu0 0
    %1714 = vmatpush2.bf16.msra.mxu0 0
    %1715 = vmatprep.subr.bf16.mxu0 0
    %1716 = vmatpush2.bf16.msra.mxu0 0
    %1717 = vmatprep.subr.bf16.mxu0 0
    %1718 = vmatpush2.bf16.msra.mxu0 0
    %1719 = vmatprep.subr.bf16.mxu0 0
    %1720 = vmatpush2.bf16.msra.mxu0 0
    %1721 = vmatprep.subr.bf16.mxu0 0
    %1722 = vmatpush2.bf16.msra.mxu0 0
    %1723 = vmatprep.mubr.bf16.mxu0 0
    %1724 = vmatmul.mubr.bf16.gmra.mxu0 %v1576
    %v1725 = vpop.f32.mrf.mxu0
    %v1726 = vadd.f32 %v1674, %v1725
    %v1727 = vpop.f32.mrf.mxu0
    %v1728 = vpop.f32.mrf.mxu0
    %v1729 = vpop.f32.mrf.mxu0
    %1730 = vdwg.mxu0
    %v1732 = vlaneseq
    %v1733 = vshrl.u32 %v1732, 7
    %v1734 = vsub.s32 0, %v1733
    %v1735 = vrot.slane %v1478, %v1734
    %v1737 = vadd.f32 %v1726, %v1735
    %s1738 = scalar_lea.vmem [#allocation5], %s1501
    %1739 = vst [vmem:[%s1738] sm:$0xff] %v1737
  $region73: #{textrnn_forward.1} parent=0 // loop_footer
    %s1500 = sadd.s32 1, %s1496
  $region74: #{textrnn_forward.1} parent=0 // loop_footer_branch
    %1495 = sbr.rel target = $region70
  $region75: #{textrnn_forward.1} parent=0 // loop_exit
    _
  %v1740 = vld [vmem:[%s8] sm:$0xf]
  %v1741 = vld [vmem:[%s8 + $0x4] sm:$0xf]
  %v1742 = vld [vmem:[%s8 + $0x8] sm:$0xf]
  %v1743 = vld [vmem:[%s8 + $0xc] sm:$0xf]
  %v1744 = vld [vmem:[%s11] sm:$0xf]
  %v1745 = vld [vmem:[%s11 + $0x4] sm:$0xf]
  %v1746 = vld [vmem:[%s11 + $0x8] sm:$0xf]
  %v1747 = vld [vmem:[%s11 + $0xc] sm:$0xf]
  %v1748 = vld [vmem:[#allocation4] sm:$0xff]
  %v1753 = vunpack.c.l.b16 %v1740
  %v1754 = vunpack.c.l.b16 %v1741
  %v1755 = vunpack.c.l.b16 %v1742
  %v1756 = vunpack.c.l.b16 %v1743
  %v1757 = vpack.c.b16 %v1754, %v1753
  %v1758 = vpack.c.b16 %v1756, %v1755
  %1761 = vmatprep.subr.bf16.mxu0 0
  %1762 = vmatpush1.bf16.msra.mxu0 0
  %1763 = vmatprep.subr.bf16.mxu0 0
  %1764 = vmatpush1.bf16.msra.mxu0 0
  %1765 = vmatprep.subr.bf16.mxu0 0
  %1766 = vmatpush1.bf16.msra.mxu0 0
  %1767 = vmatprep.subr.bf16.mxu0 0
  %1768 = vmatpush1.bf16.msra.mxu0 0
  %1769 = vmatprep.subr.bf16.mxu0 0
  %1770 = vmatpush1.bf16.msra.mxu0 0
  %1771 = vmatprep.subr.bf16.mxu0 0
  %1772 = vmatpush1.bf16.msra.mxu0 0
  %1773 = vmatprep.subr.bf16.mxu0 0
  %1774 = vmatpush1.bf16.msra.mxu0 %v1758
  %1775 = vmatprep.subr.bf16.mxu0 0
  %1776 = vmatpush1.bf16.msra.mxu0 %v1757
  %1777 = vmatprep.subr.bf16.mxu0 0
  %1778 = vmatpush2.bf16.msra.mxu0 0
  %1779 = vmatprep.subr.bf16.mxu0 0
  %1780 = vmatpush2.bf16.msra.mxu0 0
  %1781 = vmatprep.subr.bf16.mxu0 0
  %1782 = vmatpush2.bf16.msra.mxu0 0
  %1783 = vmatprep.subr.bf16.mxu0 0
  %1784 = vmatpush2.bf16.msra.mxu0 0
  %1785 = vmatprep.subr.bf16.mxu0 0
  %1786 = vmatpush2.bf16.msra.mxu0 0
  %1787 = vmatprep.subr.bf16.mxu0 0
  %1788 = vmatpush2.bf16.msra.mxu0 0
  %1789 = vmatprep.subr.bf16.mxu0 0
  %1790 = vmatpush2.bf16.msra.mxu0 0
  %1791 = vmatprep.subr.bf16.mxu0 0
  %1792 = vmatpush2.bf16.msra.mxu0 0
  %1793 = vmatprep.mubr.bf16.mxu0 0
  %1794 = vmatmul.mubr.bf16.gmra.mxu0 %v202
  %v1795 = vpop.f32.mrf.mxu0
  %v1796 = vadd.f32 0.0, %v1795
  %v1797 = vpop.f32.mrf.mxu0
  %v1798 = vpop.f32.mrf.mxu0
  %v1799 = vpop.f32.mrf.mxu0
  %1800 = vdwg.mxu0
  %v1801 = vadd.f32 %v1748, %v1796
  %v1802 = vld [vmem:[%s245] sm:$0xff]
  %v1807 = vunpack.c.l.b16 %v1744
  %v1808 = vunpack.c.l.b16 %v1745
  %v1809 = vunpack.c.l.b16 %v1746
  %v1810 = vunpack.c.l.b16 %v1747
  %v1811 = vpack.c.b16 %v1808, %v1807
  %v1812 = vpack.c.b16 %v1810, %v1809
  %1815 = vmatprep.subr.bf16.mxu0 0
  %1816 = vmatpush1.bf16.msra.mxu0 0
  %1817 = vmatprep.subr.bf16.mxu0 0
  %1818 = vmatpush1.bf16.msra.mxu0 0
  %1819 = vmatprep.subr.bf16.mxu0 0
  %1820 = vmatpush1.bf16.msra.mxu0 0
  %1821 = vmatprep.subr.bf16.mxu0 0
  %1822 = vmatpush1.bf16.msra.mxu0 0
  %1823 = vmatprep.subr.bf16.mxu0 0
  %1824 = vmatpush1.bf16.msra.mxu0 0
  %1825 = vmatprep.subr.bf16.mxu0 0
  %1826 = vmatpush1.bf16.msra.mxu0 0
  %1827 = vmatprep.subr.bf16.mxu0 0
  %1828 = vmatpush1.bf16.msra.mxu0 %v1812
  %1829 = vmatprep.subr.bf16.mxu0 0
  %1830 = vmatpush1.bf16.msra.mxu0 %v1811
  %1831 = vmatprep.subr.bf16.mxu0 0
  %1832 = vmatpush2.bf16.msra.mxu0 0
  %1833 = vmatprep.subr.bf16.mxu0 0
  %1834 = vmatpush2.bf16.msra.mxu0 0
  %1835 = vmatprep.subr.bf16.mxu0 0
  %1836 = vmatpush2.bf16.msra.mxu0 0
  %1837 = vmatprep.subr.bf16.mxu0 0
  %1838 = vmatpush2.bf16.msra.mxu0 0
  %1839 = vmatprep.subr.bf16.mxu0 0
  %1840 = vmatpush2.bf16.msra.mxu0 0
  %1841 = vmatprep.subr.bf16.mxu0 0
  %1842 = vmatpush2.bf16.msra.mxu0 0
  %1843 = vmatprep.subr.bf16.mxu0 0
  %1844 = vmatpush2.bf16.msra.mxu0 0
  %1845 = vmatprep.subr.bf16.mxu0 0
  %1846 = vmatpush2.bf16.msra.mxu0 0
  %1847 = vmatprep.mubr.bf16.mxu0 0
  %1848 = vmatmul.mubr.bf16.gmra.mxu0 %v202
  %v1849 = vpop.f32.mrf.mxu0
  %v1850 = vadd.f32 0.0, %v1849
  %v1851 = vpop.f32.mrf.mxu0
  %v1852 = vpop.f32.mrf.mxu0
  %v1853 = vpop.f32.mrf.mxu0
  %1854 = vdwg.mxu0
  %v1855 = vadd.f32 %v1802, %v1850
  %v1856 = vxor.u32 %v1801, 2147483648
  %v1857 = vmul.f32 %v1856, 1.442695
  %v1858 = vpow.pop %v1857
  %v1859 = vadd.f32 %v1858, 1.0
  %v1860 = vrcp.pop %v1859
  %v1861 = vmul.f32 1.0, %v1860
  %v1862 = vtanh.pop %v1801
  %v1863 = vmul.f32 %v1861, 0.0
  %1865 = vrot.lane.b32.xlu0 %v1862, 32
  %v1866 = vpop.permute.xlu0 %1865
  %v1868 = vmul.f32 %v1861, %v1866
  %1870 = vrot.lane.b32.xlu0 %v1868, 32
  %v1871 = vpop.permute.xlu0 %1870
  %v1873 = vadd.f32 %v1863, %v1871
  %v1874 = vtanh.pop %v1873
  %1876 = vrot.lane.b32.xlu0 %v1874, 32
  %v1877 = vpop.permute.xlu0 %1876
  %v1879 = vmul.f32 %v1861, %v1877
  %v1880 = vxor.u32 %v1855, 2147483648
  %v1881 = vmul.f32 %v1880, 1.442695
  %v1882 = vpow.pop %v1881
  %v1883 = vadd.f32 %v1882, 1.0
  %v1884 = vrcp.pop %v1883
  %v1885 = vmul.f32 1.0, %v1884
  %v1886 = vtanh.pop %v1855
  %v1887 = vmul.f32 %v1885, 0.0
  %1889 = vrot.lane.b32.xlu0 %v1886, 32
  %v1890 = vpop.permute.xlu0 %1889
  %v1892 = vmul.f32 %v1885, %v1890
  %1894 = vrot.lane.b32.xlu0 %v1892, 32
  %v1895 = vpop.permute.xlu0 %1894
  %v1897 = vadd.f32 %v1887, %v1895
  %v1898 = vtanh.pop %v1897
  %1900 = vrot.lane.b32.xlu0 %v1898, 32
  %v1901 = vpop.permute.xlu0 %1900
  %v1903 = vmul.f32 %v1885, %v1901
  %1905 = vrot.lane.b32.xlu0 %v1879, 64
  %v1906 = vpop.permute.xlu0 %1905
  %1908 = vst.msk [vmem:[#allocation2] sm:$0xff] %vm200, %v1906
  %1910 = vrot.lane.b32.xlu0 %v1903, 64
  %v1911 = vpop.permute.xlu0 %1910
  %1913 = vst.msk [vmem:[%s357] sm:$0xff] %vm200, %v1911
  %v1914 = vld [vmem:[%s359] sm:$0xff]
  %v1915 = vpack.c.bf16 %v1879, %v1879
  %1917 = vrot.lane.b32.xlu0 %v1915, 64
  %v1918 = vpop.permute.xlu0 %1917
  %v1920 = vsel %vm200, %v1918, 0
  %1922 = vmatprep.subr.bf16.mxu0 0
  %1923 = vmatpush1.bf16.msra.mxu0 0
  %1924 = vmatprep.subr.bf16.mxu0 0
  %1925 = vmatpush1.bf16.msra.mxu0 0
  %1926 = vmatprep.subr.bf16.mxu0 0
  %1927 = vmatpush1.bf16.msra.mxu0 0
  %1928 = vmatprep.subr.bf16.mxu0 0
  %1929 = vmatpush1.bf16.msra.mxu0 0
  %1930 = vmatprep.subr.bf16.mxu0 0
  %1931 = vmatpush1.bf16.msra.mxu0 0
  %1932 = vmatprep.subr.bf16.mxu0 0
  %1933 = vmatpush1.bf16.msra.mxu0 0
  %1934 = vmatprep.subr.bf16.mxu0 0
  %1935 = vmatpush1.bf16.msra.mxu0 %v1758
  %1936 = vmatprep.subr.bf16.mxu0 0
  %1937 = vmatpush1.bf16.msra.mxu0 %v1757
  %1938 = vmatprep.subr.bf16.mxu0 0
  %1939 = vmatpush2.bf16.msra.mxu0 0
  %1940 = vmatprep.subr.bf16.mxu0 0
  %1941 = vmatpush2.bf16.msra.mxu0 0
  %1942 = vmatprep.subr.bf16.mxu0 0
  %1943 = vmatpush2.bf16.msra.mxu0 0
  %1944 = vmatprep.subr.bf16.mxu0 0
  %1945 = vmatpush2.bf16.msra.mxu0 0
  %1946 = vmatprep.subr.bf16.mxu0 0
  %1947 = vmatpush2.bf16.msra.mxu0 0
  %1948 = vmatprep.subr.bf16.mxu0 0
  %1949 = vmatpush2.bf16.msra.mxu0 0
  %1950 = vmatprep.subr.bf16.mxu0 0
  %1951 = vmatpush2.bf16.msra.mxu0 0
  %1952 = vmatprep.subr.bf16.mxu0 0
  %1953 = vmatpush2.bf16.msra.mxu0 0
  %1954 = vmatprep.mubr.bf16.mxu0 0
  %1955 = vmatmul.mubr.bf16.gmra.mxu0 %v1920
  %v1956 = vpop.f32.mrf.mxu0
  %v1957 = vadd.f32 0.0, %v1956
  %v1958 = vpop.f32.mrf.mxu0
  %v1959 = vpop.f32.mrf.mxu0
  %v1960 = vpop.f32.mrf.mxu0
  %1961 = vdwg.mxu0
  %v1962 = vadd.f32 %v1914, %v1957
  %v1963 = vld [vmem:[%s409] sm:$0xff]
  %v1964 = vpack.c.bf16 %v1903, %v1903
  %1966 = vrot.lane.b32.xlu0 %v1964, 64
  %v1967 = vpop.permute.xlu0 %1966
  %v1969 = vsel %vm200, %v1967, 0
  %1971 = vmatprep.subr.bf16.mxu0 0
  %1972 = vmatpush1.bf16.msra.mxu0 0
  %1973 = vmatprep.subr.bf16.mxu0 0
  %1974 = vmatpush1.bf16.msra.mxu0 0
  %1975 = vmatprep.subr.bf16.mxu0 0
  %1976 = vmatpush1.bf16.msra.mxu0 0
  %1977 = vmatprep.subr.bf16.mxu0 0
  %1978 = vmatpush1.bf16.msra.mxu0 0
  %1979 = vmatprep.subr.bf16.mxu0 0
  %1980 = vmatpush1.bf16.msra.mxu0 0
  %1981 = vmatprep.subr.bf16.mxu0 0
  %1982 = vmatpush1.bf16.msra.mxu0 0
  %1983 = vmatprep.subr.bf16.mxu0 0
  %1984 = vmatpush1.bf16.msra.mxu0 %v1812
  %1985 = vmatprep.subr.bf16.mxu0 0
  %1986 = vmatpush1.bf16.msra.mxu0 %v1811
  %1987 = vmatprep.subr.bf16.mxu0 0
  %1988 = vmatpush2.bf16.msra.mxu0 0
  %1989 = vmatprep.subr.bf16.mxu0 0
  %1990 = vmatpush2.bf16.msra.mxu0 0
  %1991 = vmatprep.subr.bf16.mxu0 0
  %1992 = vmatpush2.bf16.msra.mxu0 0
  %1993 = vmatprep.subr.bf16.mxu0 0
  %1994 = vmatpush2.bf16.msra.mxu0 0
  %1995 = vmatprep.subr.bf16.mxu0 0
  %1996 = vmatpush2.bf16.msra.mxu0 0
  %1997 = vmatprep.subr.bf16.mxu0 0
  %1998 = vmatpush2.bf16.msra.mxu0 0
  %1999 = vmatprep.subr.bf16.mxu0 0
  %2000 = vmatpush2.bf16.msra.mxu0 0
  %2001 = vmatprep.subr.bf16.mxu0 0
  %2002 = vmatpush2.bf16.msra.mxu0 0
  %2003 = vmatprep.mubr.bf16.mxu0 0
  %2004 = vmatmul.mubr.bf16.gmra.mxu0 %v1969
  %v2005 = vpop.f32.mrf.mxu0
  %v2006 = vadd.f32 0.0, %v2005
  %v2007 = vpop.f32.mrf.mxu0
  %v2008 = vpop.f32.mrf.mxu0
  %v2009 = vpop.f32.mrf.mxu0
  %2010 = vdwg.mxu0
  %v2011 = vadd.f32 %v1963, %v2006
  %v2012 = vxor.u32 %v1962, 2147483648
  %v2013 = vmul.f32 %v2012, 1.442695
  %v2014 = vpow.pop %v2013
  %v2015 = vadd.f32 %v2014, 1.0
  %v2016 = vrcp.pop %v2015
  %v2017 = vmul.f32 1.0, %v2016
  %v2018 = vtanh.pop %v1962
  %v2019 = vmul.f32 %v2017, %v1873
  %2021 = vrot.lane.b32.xlu0 %v2018, 32
  %v2022 = vpop.permute.xlu0 %2021
  %v2024 = vmul.f32 %v2017, %v2022
  %2026 = vrot.lane.b32.xlu0 %v2024, 32
  %v2027 = vpop.permute.xlu0 %2026
  %v2029 = vadd.f32 %v2019, %v2027
  %v2030 = vtanh.pop %v2029
  %2032 = vrot.lane.b32.xlu0 %v2030, 32
  %v2033 = vpop.permute.xlu0 %2032
  %v2035 = vmul.f32 %v2017, %v2033
  %v2036 = vxor.u32 %v2011, 2147483648
  %v2037 = vmul.f32 %v2036, 1.442695
  %v2038 = vpow.pop %v2037
  %v2039 = vadd.f32 %v2038, 1.0
  %v2040 = vrcp.pop %v2039
  %v2041 = vmul.f32 1.0, %v2040
  %v2042 = vtanh.pop %v2011
  %v2043 = vmul.f32 %v2041, %v1897
  %2045 = vrot.lane.b32.xlu0 %v2042, 32
  %v2046 = vpop.permute.xlu0 %2045
  %v2048 = vmul.f32 %v2041, %v2046
  %2050 = vrot.lane.b32.xlu0 %v2048, 32
  %v2051 = vpop.permute.xlu0 %2050
  %v2053 = vadd.f32 %v2043, %v2051
  %v2054 = vtanh.pop %v2053
  %2056 = vrot.lane.b32.xlu0 %v2054, 32
  %v2057 = vpop.permute.xlu0 %2056
  %v2059 = vmul.f32 %v2041, %v2057
  %2061 = vrot.lane.b32.xlu0 %v2035, 64
  %v2062 = vpop.permute.xlu0 %2061
  %2064 = vst.msk [vmem:[%s511] sm:$0xff] %vm200, %v2062
  %2066 = vrot.lane.b32.xlu0 %v2059, 64
  %v2067 = vpop.permute.xlu0 %2066
  %2069 = vst.msk [vmem:[%s517] sm:$0xff] %vm200, %v2067
  %v2070 = vld [vmem:[%s519] sm:$0xff]
  %v2071 = vpack.c.bf16 %v2035, %v2035
  %2073 = vrot.lane.b32.xlu0 %v2071, 64
  %v2074 = vpop.permute.xlu0 %2073
  %v2076 = vsel %vm200, %v2074, 0
  %2078 = vmatprep.subr.bf16.mxu0 0
  %2079 = vmatpush1.bf16.msra.mxu0 0
  %2080 = vmatprep.subr.bf16.mxu0 0
  %2081 = vmatpush1.bf16.msra.mxu0 0
  %2082 = vmatprep.subr.bf16.mxu0 0
  %2083 = vmatpush1.bf16.msra.mxu0 0
  %2084 = vmatprep.subr.bf16.mxu0 0
  %2085 = vmatpush1.bf16.msra.mxu0 0
  %2086 = vmatprep.subr.bf16.mxu0 0
  %2087 = vmatpush1.bf16.msra.mxu0 0
  %2088 = vmatprep.subr.bf16.mxu0 0
  %2089 = vmatpush1.bf16.msra.mxu0 0
  %2090 = vmatprep.subr.bf16.mxu0 0
  %2091 = vmatpush1.bf16.msra.mxu0 %v1758
  %2092 = vmatprep.subr.bf16.mxu0 0
  %2093 = vmatpush1.bf16.msra.mxu0 %v1757
  %2094 = vmatprep.subr.bf16.mxu0 0
  %2095 = vmatpush2.bf16.msra.mxu0 0
  %2096 = vmatprep.subr.bf16.mxu0 0
  %2097 = vmatpush2.bf16.msra.mxu0 0
  %2098 = vmatprep.subr.bf16.mxu0 0
  %2099 = vmatpush2.bf16.msra.mxu0 0
  %2100 = vmatprep.subr.bf16.mxu0 0
  %2101 = vmatpush2.bf16.msra.mxu0 0
  %2102 = vmatprep.subr.bf16.mxu0 0
  %2103 = vmatpush2.bf16.msra.mxu0 0
  %2104 = vmatprep.subr.bf16.mxu0 0
  %2105 = vmatpush2.bf16.msra.mxu0 0
  %2106 = vmatprep.subr.bf16.mxu0 0
  %2107 = vmatpush2.bf16.msra.mxu0 0
  %2108 = vmatprep.subr.bf16.mxu0 0
  %2109 = vmatpush2.bf16.msra.mxu0 0
  %2110 = vmatprep.mubr.bf16.mxu0 0
  %2111 = vmatmul.mubr.bf16.gmra.mxu0 %v2076
  %v2112 = vpop.f32.mrf.mxu0
  %v2113 = vadd.f32 0.0, %v2112
  %v2114 = vpop.f32.mrf.mxu0
  %v2115 = vpop.f32.mrf.mxu0
  %v2116 = vpop.f32.mrf.mxu0
  %2117 = vdwg.mxu0
  %v2118 = vadd.f32 %v2070, %v2113
  %v2119 = vld [vmem:[%s569] sm:$0xff]
  %v2120 = vpack.c.bf16 %v2059, %v2059
  %2122 = vrot.lane.b32.xlu0 %v2120, 64
  %v2123 = vpop.permute.xlu0 %2122
  %v2125 = vsel %vm200, %v2123, 0
  %2127 = vmatprep.subr.bf16.mxu0 0
  %2128 = vmatpush1.bf16.msra.mxu0 0
  %2129 = vmatprep.subr.bf16.mxu0 0
  %2130 = vmatpush1.bf16.msra.mxu0 0
  %2131 = vmatprep.subr.bf16.mxu0 0
  %2132 = vmatpush1.bf16.msra.mxu0 0
  %2133 = vmatprep.subr.bf16.mxu0 0
  %2134 = vmatpush1.bf16.msra.mxu0 0
  %2135 = vmatprep.subr.bf16.mxu0 0
  %2136 = vmatpush1.bf16.msra.mxu0 0
  %2137 = vmatprep.subr.bf16.mxu0 0
  %2138 = vmatpush1.bf16.msra.mxu0 0
  %2139 = vmatprep.subr.bf16.mxu0 0
  %2140 = vmatpush1.bf16.msra.mxu0 %v1812
  %2141 = vmatprep.subr.bf16.mxu0 0
  %2142 = vmatpush1.bf16.msra.mxu0 %v1811
  %2143 = vmatprep.subr.bf16.mxu0 0
  %2144 = vmatpush2.bf16.msra.mxu0 0
  %2145 = vmatprep.subr.bf16.mxu0 0
  %2146 = vmatpush2.bf16.msra.mxu0 0
  %2147 = vmatprep.subr.bf16.mxu0 0
  %2148 = vmatpush2.bf16.msra.mxu0 0
  %2149 = vmatprep.subr.bf16.mxu0 0
  %2150 = vmatpush2.bf16.msra.mxu0 0
  %2151 = vmatprep.subr.bf16.mxu0 0
  %2152 = vmatpush2.bf16.msra.mxu0 0
  %2153 = vmatprep.subr.bf16.mxu0 0
  %2154 = vmatpush2.bf16.msra.mxu0 0
  %2155 = vmatprep.subr.bf16.mxu0 0
  %2156 = vmatpush2.bf16.msra.mxu0 0
  %2157 = vmatprep.subr.bf16.mxu0 0
  %2158 = vmatpush2.bf16.msra.mxu0 0
  %2159 = vmatprep.mubr.bf16.mxu0 0
  %2160 = vmatmul.mubr.bf16.gmra.mxu0 %v2125
  %v2161 = vpop.f32.mrf.mxu0
  %v2162 = vadd.f32 0.0, %v2161
  %v2163 = vpop.f32.mrf.mxu0
  %v2164 = vpop.f32.mrf.mxu0
  %v2165 = vpop.f32.mrf.mxu0
  %2166 = vdwg.mxu0
  %v2167 = vadd.f32 %v2119, %v2162
  %v2168 = vxor.u32 %v2118, 2147483648
  %v2169 = vmul.f32 %v2168, 1.442695
  %v2170 = vpow.pop %v2169
  %v2171 = vadd.f32 %v2170, 1.0
  %v2172 = vrcp.pop %v2171
  %v2173 = vmul.f32 1.0, %v2172
  %v2174 = vtanh.pop %v2118
  %v2175 = vmul.f32 %v2173, %v2029
  %2177 = vrot.lane.b32.xlu0 %v2174, 32
  %v2178 = vpop.permute.xlu0 %2177
  %v2180 = vmul.f32 %v2173, %v2178
  %2182 = vrot.lane.b32.xlu0 %v2180, 32
  %v2183 = vpop.permute.xlu0 %2182
  %v2185 = vadd.f32 %v2175, %v2183
  %v2186 = vtanh.pop %v2185
  %2188 = vrot.lane.b32.xlu0 %v2186, 32
  %v2189 = vpop.permute.xlu0 %2188
  %v2191 = vmul.f32 %v2173, %v2189
  %v2192 = vxor.u32 %v2167, 2147483648
  %v2193 = vmul.f32 %v2192, 1.442695
  %v2194 = vpow.pop %v2193
  %v2195 = vadd.f32 %v2194, 1.0
  %v2196 = vrcp.pop %v2195
  %v2197 = vmul.f32 1.0, %v2196
  %v2198 = vtanh.pop %v2167
  %v2199 = vmul.f32 %v2197, %v2053
  %2201 = vrot.lane.b32.xlu0 %v2198, 32
  %v2202 = vpop.permute.xlu0 %2201
  %v2204 = vmul.f32 %v2197, %v2202
  %2206 = vrot.lane.b32.xlu0 %v2204, 32
  %v2207 = vpop.permute.xlu0 %2206
  %v2209 = vadd.f32 %v2199, %v2207
  %v2210 = vtanh.pop %v2209
  %2212 = vrot.lane.b32.xlu0 %v2210, 32
  %v2213 = vpop.permute.xlu0 %2212
  %v2215 = vmul.f32 %v2197, %v2213
  %2217 = vrot.lane.b32.xlu0 %v2191, 64
  %v2218 = vpop.permute.xlu0 %2217
  %2220 = vst.msk [vmem:[%s671] sm:$0xff] %vm200, %v2218
  %2222 = vrot.lane.b32.xlu0 %v2215, 64
  %v2223 = vpop.permute.xlu0 %2222
  %2225 = vst.msk [vmem:[%s677] sm:$0xff] %vm200, %v2223
  %v2226 = vld [vmem:[%s679] sm:$0xff]
  %v2227 = vpack.c.bf16 %v2191, %v2191
  %2229 = vrot.lane.b32.xlu0 %v2227, 64
  %v2230 = vpop.permute.xlu0 %2229
  %v2232 = vsel %vm200, %v2230, 0
  %2234 = vmatprep.subr.bf16.mxu0 0
  %2235 = vmatpush1.bf16.msra.mxu0 0
  %2236 = vmatprep.subr.bf16.mxu0 0
  %2237 = vmatpush1.bf16.msra.mxu0 0
  %2238 = vmatprep.subr.bf16.mxu0 0
  %2239 = vmatpush1.bf16.msra.mxu0 0
  %2240 = vmatprep.subr.bf16.mxu0 0
  %2241 = vmatpush1.bf16.msra.mxu0 0
  %2242 = vmatprep.subr.bf16.mxu0 0
  %2243 = vmatpush1.bf16.msra.mxu0 0
  %2244 = vmatprep.subr.bf16.mxu0 0
  %2245 = vmatpush1.bf16.msra.mxu0 0
  %2246 = vmatprep.subr.bf16.mxu0 0
  %2247 = vmatpush1.bf16.msra.mxu0 %v1758
  %2248 = vmatprep.subr.bf16.mxu0 0
  %2249 = vmatpush1.bf16.msra.mxu0 %v1757
  %2250 = vmatprep.subr.bf16.mxu0 0
  %2251 = vmatpush2.bf16.msra.mxu0 0
  %2252 = vmatprep.subr.bf16.mxu0 0
  %2253 = vmatpush2.bf16.msra.mxu0 0
  %2254 = vmatprep.subr.bf16.mxu0 0
  %2255 = vmatpush2.bf16.msra.mxu0 0
  %2256 = vmatprep.subr.bf16.mxu0 0
  %2257 = vmatpush2.bf16.msra.mxu0 0
  %2258 = vmatprep.subr.bf16.mxu0 0
  %2259 = vmatpush2.bf16.msra.mxu0 0
  %2260 = vmatprep.subr.bf16.mxu0 0
  %2261 = vmatpush2.bf16.msra.mxu0 0
  %2262 = vmatprep.subr.bf16.mxu0 0
  %2263 = vmatpush2.bf16.msra.mxu0 0
  %2264 = vmatprep.subr.bf16.mxu0 0
  %2265 = vmatpush2.bf16.msra.mxu0 0
  %2266 = vmatprep.mubr.bf16.mxu0 0
  %2267 = vmatmul.mubr.bf16.gmra.mxu0 %v2232
  %v2268 = vpop.f32.mrf.mxu0
  %v2269 = vadd.f32 0.0, %v2268
  %v2270 = vpop.f32.mrf.mxu0
  %v2271 = vpop.f32.mrf.mxu0
  %v2272 = vpop.f32.mrf.mxu0
  %2273 = vdwg.mxu0
  %v2274 = vadd.f32 %v2226, %v2269
  %v2275 = vld [vmem:[%s729] sm:$0xff]
  %v2276 = vpack.c.bf16 %v2215, %v2215
  %2278 = vrot.lane.b32.xlu0 %v2276, 64
  %v2279 = vpop.permute.xlu0 %2278
  %v2281 = vsel %vm200, %v2279, 0
  %2283 = vmatprep.subr.bf16.mxu0 0
  %2284 = vmatpush1.bf16.msra.mxu0 0
  %2285 = vmatprep.subr.bf16.mxu0 0
  %2286 = vmatpush1.bf16.msra.mxu0 0
  %2287 = vmatprep.subr.bf16.mxu0 0
  %2288 = vmatpush1.bf16.msra.mxu0 0
  %2289 = vmatprep.subr.bf16.mxu0 0
  %2290 = vmatpush1.bf16.msra.mxu0 0
  %2291 = vmatprep.subr.bf16.mxu0 0
  %2292 = vmatpush1.bf16.msra.mxu0 0
  %2293 = vmatprep.subr.bf16.mxu0 0
  %2294 = vmatpush1.bf16.msra.mxu0 0
  %2295 = vmatprep.subr.bf16.mxu0 0
  %2296 = vmatpush1.bf16.msra.mxu0 %v1812
  %2297 = vmatprep.subr.bf16.mxu0 0
  %2298 = vmatpush1.bf16.msra.mxu0 %v1811
  %2299 = vmatprep.subr.bf16.mxu0 0
  %2300 = vmatpush2.bf16.msra.mxu0 0
  %2301 = vmatprep.subr.bf16.mxu0 0
  %2302 = vmatpush2.bf16.msra.mxu0 0
  %2303 = vmatprep.subr.bf16.mxu0 0
  %2304 = vmatpush2.bf16.msra.mxu0 0
  %2305 = vmatprep.subr.bf16.mxu0 0
  %2306 = vmatpush2.bf16.msra.mxu0 0
  %2307 = vmatprep.subr.bf16.mxu0 0
  %2308 = vmatpush2.bf16.msra.mxu0 0
  %2309 = vmatprep.subr.bf16.mxu0 0
  %2310 = vmatpush2.bf16.msra.mxu0 0
  %2311 = vmatprep.subr.bf16.mxu0 0
  %2312 = vmatpush2.bf16.msra.mxu0 0
  %2313 = vmatprep.subr.bf16.mxu0 0
  %2314 = vmatpush2.bf16.msra.mxu0 0
  %2315 = vmatprep.mubr.bf16.mxu0 0
  %2316 = vmatmul.mubr.bf16.gmra.mxu0 %v2281
  %v2317 = vpop.f32.mrf.mxu0
  %v2318 = vadd.f32 0.0, %v2317
  %v2319 = vpop.f32.mrf.mxu0
  %v2320 = vpop.f32.mrf.mxu0
  %v2321 = vpop.f32.mrf.mxu0
  %2322 = vdwg.mxu0
  %v2323 = vadd.f32 %v2275, %v2318
  %v2324 = vxor.u32 %v2274, 2147483648
  %v2325 = vmul.f32 %v2324, 1.442695
  %v2326 = vpow.pop %v2325
  %v2327 = vadd.f32 %v2326, 1.0
  %v2328 = vrcp.pop %v2327
  %v2329 = vmul.f32 1.0, %v2328
  %v2330 = vtanh.pop %v2274
  %v2331 = vmul.f32 %v2329, %v2185
  %2333 = vrot.lane.b32.xlu0 %v2330, 32
  %v2334 = vpop.permute.xlu0 %2333
  %v2336 = vmul.f32 %v2329, %v2334
  %2338 = vrot.lane.b32.xlu0 %v2336, 32
  %v2339 = vpop.permute.xlu0 %2338
  %v2341 = vadd.f32 %v2331, %v2339
  %v2342 = vtanh.pop %v2341
  %2344 = vrot.lane.b32.xlu0 %v2342, 32
  %v2345 = vpop.permute.xlu0 %2344
  %v2347 = vmul.f32 %v2329, %v2345
  %v2348 = vxor.u32 %v2323, 2147483648
  %v2349 = vmul.f32 %v2348, 1.442695
  %v2350 = vpow.pop %v2349
  %v2351 = vadd.f32 %v2350, 1.0
  %v2352 = vrcp.pop %v2351
  %v2353 = vmul.f32 1.0, %v2352
  %v2354 = vtanh.pop %v2323
  %v2355 = vmul.f32 %v2353, %v2209
  %2357 = vrot.lane.b32.xlu0 %v2354, 32
  %v2358 = vpop.permute.xlu0 %2357
  %v2360 = vmul.f32 %v2353, %v2358
  %2362 = vrot.lane.b32.xlu0 %v2360, 32
  %v2363 = vpop.permute.xlu0 %2362
  %v2365 = vadd.f32 %v2355, %v2363
  %v2366 = vtanh.pop %v2365
  %2368 = vrot.lane.b32.xlu0 %v2366, 32
  %v2369 = vpop.permute.xlu0 %2368
  %v2371 = vmul.f32 %v2353, %v2369
  %2373 = vrot.lane.b32.xlu0 %v2347, 64
  %v2374 = vpop.permute.xlu0 %2373
  %2376 = vst.msk [vmem:[%s831] sm:$0xff] %vm200, %v2374
  %2378 = vrot.lane.b32.xlu0 %v2371, 64
  %v2379 = vpop.permute.xlu0 %2378
  %2381 = vst.msk [vmem:[%s837] sm:$0xff] %vm200, %v2379
  %v2382 = vld [vmem:[%s839] sm:$0xff]
  %v2383 = vpack.c.bf16 %v2347, %v2347
  %2385 = vrot.lane.b32.xlu0 %v2383, 64
  %v2386 = vpop.permute.xlu0 %2385
  %v2388 = vsel %vm200, %v2386, 0
  %2390 = vmatprep.subr.bf16.mxu0 0
  %2391 = vmatpush1.bf16.msra.mxu0 0
  %2392 = vmatprep.subr.bf16.mxu0 0
  %2393 = vmatpush1.bf16.msra.mxu0 0
  %2394 = vmatprep.subr.bf16.mxu0 0
  %2395 = vmatpush1.bf16.msra.mxu0 0
  %2396 = vmatprep.subr.bf16.mxu0 0
  %2397 = vmatpush1.bf16.msra.mxu0 0
  %2398 = vmatprep.subr.bf16.mxu0 0
  %2399 = vmatpush1.bf16.msra.mxu0 0
  %2400 = vmatprep.subr.bf16.mxu0 0
  %2401 = vmatpush1.bf16.msra.mxu0 0
  %2402 = vmatprep.subr.bf16.mxu0 0
  %2403 = vmatpush1.bf16.msra.mxu0 %v1758
  %2404 = vmatprep.subr.bf16.mxu0 0
  %2405 = vmatpush1.bf16.msra.mxu0 %v1757
  %2406 = vmatprep.subr.bf16.mxu0 0
  %2407 = vmatpush2.bf16.msra.mxu0 0
  %2408 = vmatprep.subr.bf16.mxu0 0
  %2409 = vmatpush2.bf16.msra.mxu0 0
  %2410 = vmatprep.subr.bf16.mxu0 0
  %2411 = vmatpush2.bf16.msra.mxu0 0
  %2412 = vmatprep.subr.bf16.mxu0 0
  %2413 = vmatpush2.bf16.msra.mxu0 0
  %2414 = vmatprep.subr.bf16.mxu0 0
  %2415 = vmatpush2.bf16.msra.mxu0 0
  %2416 = vmatprep.subr.bf16.mxu0 0
  %2417 = vmatpush2.bf16.msra.mxu0 0
  %2418 = vmatprep.subr.bf16.mxu0 0
  %2419 = vmatpush2.bf16.msra.mxu0 0
  %2420 = vmatprep.subr.bf16.mxu0 0
  %2421 = vmatpush2.bf16.msra.mxu0 0
  %2422 = vmatprep.mubr.bf16.mxu0 0
  %2423 = vmatmul.mubr.bf16.gmra.mxu0 %v2388
  %v2424 = vpop.f32.mrf.mxu0
  %v2425 = vadd.f32 0.0, %v2424
  %v2426 = vpop.f32.mrf.mxu0
  %v2427 = vpop.f32.mrf.mxu0
  %v2428 = vpop.f32.mrf.mxu0
  %2429 = vdwg.mxu0
  %v2430 = vadd.f32 %v2382, %v2425
  %v2431 = vld [vmem:[%s889] sm:$0xff]
  %v2432 = vpack.c.bf16 %v2371, %v2371
  %2434 = vrot.lane.b32.xlu0 %v2432, 64
  %v2435 = vpop.permute.xlu0 %2434
  %v2437 = vsel %vm200, %v2435, 0
  %2439 = vmatprep.subr.bf16.mxu0 0
  %2440 = vmatpush1.bf16.msra.mxu0 0
  %2441 = vmatprep.subr.bf16.mxu0 0
  %2442 = vmatpush1.bf16.msra.mxu0 0
  %2443 = vmatprep.subr.bf16.mxu0 0
  %2444 = vmatpush1.bf16.msra.mxu0 0
  %2445 = vmatprep.subr.bf16.mxu0 0
  %2446 = vmatpush1.bf16.msra.mxu0 0
  %2447 = vmatprep.subr.bf16.mxu0 0
  %2448 = vmatpush1.bf16.msra.mxu0 0
  %2449 = vmatprep.subr.bf16.mxu0 0
  %2450 = vmatpush1.bf16.msra.mxu0 0
  %2451 = vmatprep.subr.bf16.mxu0 0
  %2452 = vmatpush1.bf16.msra.mxu0 %v1812
  %2453 = vmatprep.subr.bf16.mxu0 0
  %2454 = vmatpush1.bf16.msra.mxu0 %v1811
  %2455 = vmatprep.subr.bf16.mxu0 0
  %2456 = vmatpush2.bf16.msra.mxu0 0
  %2457 = vmatprep.subr.bf16.mxu0 0
  %2458 = vmatpush2.bf16.msra.mxu0 0
  %2459 = vmatprep.subr.bf16.mxu0 0
  %2460 = vmatpush2.bf16.msra.mxu0 0
  %2461 = vmatprep.subr.bf16.mxu0 0
  %2462 = vmatpush2.bf16.msra.mxu0 0
  %2463 = vmatprep.subr.bf16.mxu0 0
  %2464 = vmatpush2.bf16.msra.mxu0 0
  %2465 = vmatprep.subr.bf16.mxu0 0
  %2466 = vmatpush2.bf16.msra.mxu0 0
  %2467 = vmatprep.subr.bf16.mxu0 0
  %2468 = vmatpush2.bf16.msra.mxu0 0
  %2469 = vmatprep.subr.bf16.mxu0 0
  %2470 = vmatpush2.bf16.msra.mxu0 0
  %2471 = vmatprep.mubr.bf16.mxu0 0
  %2472 = vmatmul.mubr.bf16.gmra.mxu0 %v2437
  %v2473 = vpop.f32.mrf.mxu0
  %v2474 = vadd.f32 0.0, %v2473
  %v2475 = vpop.f32.mrf.mxu0
  %v2476 = vpop.f32.mrf.mxu0
  %v2477 = vpop.f32.mrf.mxu0
  %2478 = vdwg.mxu0
  %v2479 = vadd.f32 %v2431, %v2474
  %v2480 = vxor.u32 %v2430, 2147483648
  %v2481 = vmul.f32 %v2480, 1.442695
  %v2482 = vpow.pop %v2481
  %v2483 = vadd.f32 %v2482, 1.0
  %v2484 = vrcp.pop %v2483
  %v2485 = vmul.f32 1.0, %v2484
  %v2486 = vtanh.pop %v2430
  %v2487 = vmul.f32 %v2485, %v2341
  %2489 = vrot.lane.b32.xlu0 %v2486, 32
  %v2490 = vpop.permute.xlu0 %2489
  %v2492 = vmul.f32 %v2485, %v2490
  %2494 = vrot.lane.b32.xlu0 %v2492, 32
  %v2495 = vpop.permute.xlu0 %2494
  %v2497 = vadd.f32 %v2487, %v2495
  %v2498 = vtanh.pop %v2497
  %2500 = vrot.lane.b32.xlu0 %v2498, 32
  %v2501 = vpop.permute.xlu0 %2500
  %v2503 = vmul.f32 %v2485, %v2501
  %v2504 = vxor.u32 %v2479, 2147483648
  %v2505 = vmul.f32 %v2504, 1.442695
  %v2506 = vpow.pop %v2505
  %v2507 = vadd.f32 %v2506, 1.0
  %v2508 = vrcp.pop %v2507
  %v2509 = vmul.f32 1.0, %v2508
  %v2510 = vtanh.pop %v2479
  %v2511 = vmul.f32 %v2509, %v2365
  %2513 = vrot.lane.b32.xlu0 %v2510, 32
  %v2514 = vpop.permute.xlu0 %2513
  %v2516 = vmul.f32 %v2509, %v2514
  %2518 = vrot.lane.b32.xlu0 %v2516, 32
  %v2519 = vpop.permute.xlu0 %2518
  %v2521 = vadd.f32 %v2511, %v2519
  %v2522 = vtanh.pop %v2521
  %2524 = vrot.lane.b32.xlu0 %v2522, 32
  %v2525 = vpop.permute.xlu0 %2524
  %v2527 = vmul.f32 %v2509, %v2525
  %2529 = vrot.lane.b32.xlu0 %v2503, 64
  %v2530 = vpop.permute.xlu0 %2529
  %2532 = vst.msk [vmem:[%s991] sm:$0xff] %vm200, %v2530
  %2534 = vrot.lane.b32.xlu0 %v2527, 64
  %v2535 = vpop.permute.xlu0 %2534
  %2537 = vst.msk [vmem:[%s997] sm:$0xff] %vm200, %v2535
  %v2538 = vld [vmem:[%s999] sm:$0xff]
  %v2539 = vpack.c.bf16 %v2503, %v2503
  %2541 = vrot.lane.b32.xlu0 %v2539, 64
  %v2542 = vpop.permute.xlu0 %2541
  %v2544 = vsel %vm200, %v2542, 0
  %2546 = vmatprep.subr.bf16.mxu0 0
  %2547 = vmatpush1.bf16.msra.mxu0 0
  %2548 = vmatprep.subr.bf16.mxu0 0
  %2549 = vmatpush1.bf16.msra.mxu0 0
  %2550 = vmatprep.subr.bf16.mxu0 0
  %2551 = vmatpush1.bf16.msra.mxu0 0
  %2552 = vmatprep.subr.bf16.mxu0 0
  %2553 = vmatpush1.bf16.msra.mxu0 0
  %2554 = vmatprep.subr.bf16.mxu0 0
  %2555 = vmatpush1.bf16.msra.mxu0 0
  %2556 = vmatprep.subr.bf16.mxu0 0
  %2557 = vmatpush1.bf16.msra.mxu0 0
  %2558 = vmatprep.subr.bf16.mxu0 0
  %2559 = vmatpush1.bf16.msra.mxu0 %v1758
  %2560 = vmatprep.subr.bf16.mxu0 0
  %2561 = vmatpush1.bf16.msra.mxu0 %v1757
  %2562 = vmatprep.subr.bf16.mxu0 0
  %2563 = vmatpush2.bf16.msra.mxu0 0
  %2564 = vmatprep.subr.bf16.mxu0 0
  %2565 = vmatpush2.bf16.msra.mxu0 0
  %2566 = vmatprep.subr.bf16.mxu0 0
  %2567 = vmatpush2.bf16.msra.mxu0 0
  %2568 = vmatprep.subr.bf16.mxu0 0
  %2569 = vmatpush2.bf16.msra.mxu0 0
  %2570 = vmatprep.subr.bf16.mxu0 0
  %2571 = vmatpush2.bf16.msra.mxu0 0
  %2572 = vmatprep.subr.bf16.mxu0 0
  %2573 = vmatpush2.bf16.msra.mxu0 0
  %2574 = vmatprep.subr.bf16.mxu0 0
  %2575 = vmatpush2.bf16.msra.mxu0 0
  %2576 = vmatprep.subr.bf16.mxu0 0
  %2577 = vmatpush2.bf16.msra.mxu0 0
  %2578 = vmatprep.mubr.bf16.mxu0 0
  %2579 = vmatmul.mubr.bf16.gmra.mxu0 %v2544
  %v2580 = vpop.f32.mrf.mxu0
  %v2581 = vadd.f32 0.0, %v2580
  %v2582 = vpop.f32.mrf.mxu0
  %v2583 = vpop.f32.mrf.mxu0
  %v2584 = vpop.f32.mrf.mxu0
  %2585 = vdwg.mxu0
  %v2586 = vadd.f32 %v2538, %v2581
  %v2587 = vld [vmem:[%s1049] sm:$0xff]
  %v2588 = vpack.c.bf16 %v2527, %v2527
  %2590 = vrot.lane.b32.xlu0 %v2588, 64
  %v2591 = vpop.permute.xlu0 %2590
  %v2593 = vsel %vm200, %v2591, 0
  %2595 = vmatprep.subr.bf16.mxu0 0
  %2596 = vmatpush1.bf16.msra.mxu0 0
  %2597 = vmatprep.subr.bf16.mxu0 0
  %2598 = vmatpush1.bf16.msra.mxu0 0
  %2599 = vmatprep.subr.bf16.mxu0 0
  %2600 = vmatpush1.bf16.msra.mxu0 0
  %2601 = vmatprep.subr.bf16.mxu0 0
  %2602 = vmatpush1.bf16.msra.mxu0 0
  %2603 = vmatprep.subr.bf16.mxu0 0
  %2604 = vmatpush1.bf16.msra.mxu0 0
  %2605 = vmatprep.subr.bf16.mxu0 0
  %2606 = vmatpush1.bf16.msra.mxu0 0
  %2607 = vmatprep.subr.bf16.mxu0 0
  %2608 = vmatpush1.bf16.msra.mxu0 %v1812
  %2609 = vmatprep.subr.bf16.mxu0 0
  %2610 = vmatpush1.bf16.msra.mxu0 %v1811
  %2611 = vmatprep.subr.bf16.mxu0 0
  %2612 = vmatpush2.bf16.msra.mxu0 0
  %2613 = vmatprep.subr.bf16.mxu0 0
  %2614 = vmatpush2.bf16.msra.mxu0 0
  %2615 = vmatprep.subr.bf16.mxu0 0
  %2616 = vmatpush2.bf16.msra.mxu0 0
  %2617 = vmatprep.subr.bf16.mxu0 0
  %2618 = vmatpush2.bf16.msra.mxu0 0
  %2619 = vmatprep.subr.bf16.mxu0 0
  %2620 = vmatpush2.bf16.msra.mxu0 0
  %2621 = vmatprep.subr.bf16.mxu0 0
  %2622 = vmatpush2.bf16.msra.mxu0 0
  %2623 = vmatprep.subr.bf16.mxu0 0
  %2624 = vmatpush2.bf16.msra.mxu0 0
  %2625 = vmatprep.subr.bf16.mxu0 0
  %2626 = vmatpush2.bf16.msra.mxu0 0
  %2627 = vmatprep.mubr.bf16.mxu0 0
  %2628 = vmatmul.mubr.bf16.gmra.mxu0 %v2593
  %v2629 = vpop.f32.mrf.mxu0
  %v2630 = vadd.f32 0.0, %v2629
  %v2631 = vpop.f32.mrf.mxu0
  %v2632 = vpop.f32.mrf.mxu0
  %v2633 = vpop.f32.mrf.mxu0
  %2634 = vdwg.mxu0
  %v2635 = vadd.f32 %v2587, %v2630
  %v2636 = vxor.u32 %v2586, 2147483648
  %v2637 = vmul.f32 %v2636, 1.442695
  %v2638 = vpow.pop %v2637
  %v2639 = vadd.f32 %v2638, 1.0
  %v2640 = vrcp.pop %v2639
  %v2641 = vmul.f32 1.0, %v2640
  %v2642 = vtanh.pop %v2586
  %v2643 = vmul.f32 %v2641, %v2497
  %2645 = vrot.lane.b32.xlu0 %v2642, 32
  %v2646 = vpop.permute.xlu0 %2645
  %v2648 = vmul.f32 %v2641, %v2646
  %2650 = vrot.lane.b32.xlu0 %v2648, 32
  %v2651 = vpop.permute.xlu0 %2650
  %v2653 = vadd.f32 %v2643, %v2651
  %v2654 = vtanh.pop %v2653
  %2656 = vrot.lane.b32.xlu0 %v2654, 32
  %v2657 = vpop.permute.xlu0 %2656
  %v2659 = vmul.f32 %v2641, %v2657
  %v2660 = vxor.u32 %v2635, 2147483648
  %v2661 = vmul.f32 %v2660, 1.442695
  %v2662 = vpow.pop %v2661
  %v2663 = vadd.f32 %v2662, 1.0
  %v2664 = vrcp.pop %v2663
  %v2665 = vmul.f32 1.0, %v2664
  %v2666 = vtanh.pop %v2635
  %v2667 = vmul.f32 %v2665, %v2521
  %2669 = vrot.lane.b32.xlu0 %v2666, 32
  %v2670 = vpop.permute.xlu0 %2669
  %v2672 = vmul.f32 %v2665, %v2670
  %2674 = vrot.lane.b32.xlu0 %v2672, 32
  %v2675 = vpop.permute.xlu0 %2674
  %v2677 = vadd.f32 %v2667, %v2675
  %v2678 = vtanh.pop %v2677
  %2680 = vrot.lane.b32.xlu0 %v2678, 32
  %v2681 = vpop.permute.xlu0 %2680
  %v2683 = vmul.f32 %v2665, %v2681
  %2685 = vrot.lane.b32.xlu0 %v2659, 64
  %v2686 = vpop.permute.xlu0 %2685
  %2688 = vst.msk [vmem:[%s1151] sm:$0xff] %vm200, %v2686
  %2690 = vrot.lane.b32.xlu0 %v2683, 64
  %v2691 = vpop.permute.xlu0 %2690
  %2693 = vst.msk [vmem:[%s1157] sm:$0xff] %vm200, %v2691
  %v2694 = vld [vmem:[%s1159] sm:$0xff]
  %v2695 = vpack.c.bf16 %v2659, %v2659
  %2697 = vrot.lane.b32.xlu0 %v2695, 64
  %v2698 = vpop.permute.xlu0 %2697
  %v2700 = vsel %vm200, %v2698, 0
  %2702 = vmatprep.subr.bf16.mxu0 0
  %2703 = vmatpush1.bf16.msra.mxu0 0
  %2704 = vmatprep.subr.bf16.mxu0 0
  %2705 = vmatpush1.bf16.msra.mxu0 0
  %2706 = vmatprep.subr.bf16.mxu0 0
  %2707 = vmatpush1.bf16.msra.mxu0 0
  %2708 = vmatprep.subr.bf16.mxu0 0
  %2709 = vmatpush1.bf16.msra.mxu0 0
  %2710 = vmatprep.subr.bf16.mxu0 0
  %2711 = vmatpush1.bf16.msra.mxu0 0
  %2712 = vmatprep.subr.bf16.mxu0 0
  %2713 = vmatpush1.bf16.msra.mxu0 0
  %2714 = vmatprep.subr.bf16.mxu0 0
  %2715 = vmatpush1.bf16.msra.mxu0 %v1758
  %2716 = vmatprep.subr.bf16.mxu0 0
  %2717 = vmatpush1.bf16.msra.mxu0 %v1757
  %2718 = vmatprep.subr.bf16.mxu0 0
  %2719 = vmatpush2.bf16.msra.mxu0 0
  %2720 = vmatprep.subr.bf16.mxu0 0
  %2721 = vmatpush2.bf16.msra.mxu0 0
  %2722 = vmatprep.subr.bf16.mxu0 0
  %2723 = vmatpush2.bf16.msra.mxu0 0
  %2724 = vmatprep.subr.bf16.mxu0 0
  %2725 = vmatpush2.bf16.msra.mxu0 0
  %2726 = vmatprep.subr.bf16.mxu0 0
  %2727 = vmatpush2.bf16.msra.mxu0 0
  %2728 = vmatprep.subr.bf16.mxu0 0
  %2729 = vmatpush2.bf16.msra.mxu0 0
  %2730 = vmatprep.subr.bf16.mxu0 0
  %2731 = vmatpush2.bf16.msra.mxu0 0
  %2732 = vmatprep.subr.bf16.mxu0 0
  %2733 = vmatpush2.bf16.msra.mxu0 0
  %2734 = vmatprep.mubr.bf16.mxu0 0
  %2735 = vmatmul.mubr.bf16.gmra.mxu0 %v2700
  %v2736 = vpop.f32.mrf.mxu0
  %v2737 = vadd.f32 0.0, %v2736
  %v2738 = vpop.f32.mrf.mxu0
  %v2739 = vpop.f32.mrf.mxu0
  %v2740 = vpop.f32.mrf.mxu0
  %2741 = vdwg.mxu0
  %v2742 = vadd.f32 %v2694, %v2737
  %v2743 = vld [vmem:[%s1209] sm:$0xff]
  %v2744 = vpack.c.bf16 %v2683, %v2683
  %2746 = vrot.lane.b32.xlu0 %v2744, 64
  %v2747 = vpop.permute.xlu0 %2746
  %v2749 = vsel %vm200, %v2747, 0
  %2751 = vmatprep.subr.bf16.mxu0 0
  %2752 = vmatpush1.bf16.msra.mxu0 0
  %2753 = vmatprep.subr.bf16.mxu0 0
  %2754 = vmatpush1.bf16.msra.mxu0 0
  %2755 = vmatprep.subr.bf16.mxu0 0
  %2756 = vmatpush1.bf16.msra.mxu0 0
  %2757 = vmatprep.subr.bf16.mxu0 0
  %2758 = vmatpush1.bf16.msra.mxu0 0
  %2759 = vmatprep.subr.bf16.mxu0 0
  %2760 = vmatpush1.bf16.msra.mxu0 0
  %2761 = vmatprep.subr.bf16.mxu0 0
  %2762 = vmatpush1.bf16.msra.mxu0 0
  %2763 = vmatprep.subr.bf16.mxu0 0
  %2764 = vmatpush1.bf16.msra.mxu0 %v1812
  %2765 = vmatprep.subr.bf16.mxu0 0
  %2766 = vmatpush1.bf16.msra.mxu0 %v1811
  %2767 = vmatprep.subr.bf16.mxu0 0
  %2768 = vmatpush2.bf16.msra.mxu0 0
  %2769 = vmatprep.subr.bf16.mxu0 0
  %2770 = vmatpush2.bf16.msra.mxu0 0
  %2771 = vmatprep.subr.bf16.mxu0 0
  %2772 = vmatpush2.bf16.msra.mxu0 0
  %2773 = vmatprep.subr.bf16.mxu0 0
  %2774 = vmatpush2.bf16.msra.mxu0 0
  %2775 = vmatprep.subr.bf16.mxu0 0
  %2776 = vmatpush2.bf16.msra.mxu0 0
  %2777 = vmatprep.subr.bf16.mxu0 0
  %2778 = vmatpush2.bf16.msra.mxu0 0
  %2779 = vmatprep.subr.bf16.mxu0 0
  %2780 = vmatpush2.bf16.msra.mxu0 0
  %2781 = vmatprep.subr.bf16.mxu0 0
  %2782 = vmatpush2.bf16.msra.mxu0 0
  %2783 = vmatprep.mubr.bf16.mxu0 0
  %2784 = vmatmul.mubr.bf16.gmra.mxu0 %v2749
  %v2785 = vpop.f32.mrf.mxu0
  %v2786 = vadd.f32 0.0, %v2785
  %v2787 = vpop.f32.mrf.mxu0
  %v2788 = vpop.f32.mrf.mxu0
  %v2789 = vpop.f32.mrf.mxu0
  %2790 = vdwg.mxu0
  %v2791 = vadd.f32 %v2743, %v2786
  %v2792 = vxor.u32 %v2742, 2147483648
  %v2793 = vmul.f32 %v2792, 1.442695
  %v2794 = vpow.pop %v2793
  %v2795 = vadd.f32 %v2794, 1.0
  %v2796 = vrcp.pop %v2795
  %v2797 = vmul.f32 1.0, %v2796
  %v2798 = vtanh.pop %v2742
  %v2799 = vmul.f32 %v2797, %v2653
  %2801 = vrot.lane.b32.xlu0 %v2798, 32
  %v2802 = vpop.permute.xlu0 %2801
  %v2804 = vmul.f32 %v2797, %v2802
  %2806 = vrot.lane.b32.xlu0 %v2804, 32
  %v2807 = vpop.permute.xlu0 %2806
  %v2809 = vadd.f32 %v2799, %v2807
  %v2810 = vtanh.pop %v2809
  %2812 = vrot.lane.b32.xlu0 %v2810, 32
  %v2813 = vpop.permute.xlu0 %2812
  %v2815 = vmul.f32 %v2797, %v2813
  %v2816 = vxor.u32 %v2791, 2147483648
  %v2817 = vmul.f32 %v2816, 1.442695
  %v2818 = vpow.pop %v2817
  %v2819 = vadd.f32 %v2818, 1.0
  %v2820 = vrcp.pop %v2819
  %v2821 = vmul.f32 1.0, %v2820
  %v2822 = vtanh.pop %v2791
  %v2823 = vmul.f32 %v2821, %v2677
  %2825 = vrot.lane.b32.xlu0 %v2822, 32
  %v2826 = vpop.permute.xlu0 %2825
  %v2828 = vmul.f32 %v2821, %v2826
  %2830 = vrot.lane.b32.xlu0 %v2828, 32
  %v2831 = vpop.permute.xlu0 %2830
  %v2833 = vadd.f32 %v2823, %v2831
  %v2834 = vtanh.pop %v2833
  %2836 = vrot.lane.b32.xlu0 %v2834, 32
  %v2837 = vpop.permute.xlu0 %2836
  %v2839 = vmul.f32 %v2821, %v2837
  %2841 = vrot.lane.b32.xlu0 %v2815, 64
  %v2842 = vpop.permute.xlu0 %2841
  %2844 = vst.msk [vmem:[%s1311] sm:$0xff] %vm200, %v2842
  %2846 = vrot.lane.b32.xlu0 %v2839, 64
  %v2847 = vpop.permute.xlu0 %2846
  %2849 = vst.msk [vmem:[%s1317] sm:$0xff] %vm200, %v2847
  %v2850 = vld [vmem:[%s1319] sm:$0xff]
  %v2851 = vpack.c.bf16 %v2815, %v2815
  %2853 = vrot.lane.b32.xlu0 %v2851, 64
  %v2854 = vpop.permute.xlu0 %2853
  %v2856 = vsel %vm200, %v2854, 0
  %2858 = vmatprep.subr.bf16.mxu0 0
  %2859 = vmatpush1.bf16.msra.mxu0 0
  %2860 = vmatprep.subr.bf16.mxu0 0
  %2861 = vmatpush1.bf16.msra.mxu0 0
  %2862 = vmatprep.subr.bf16.mxu0 0
  %2863 = vmatpush1.bf16.msra.mxu0 0
  %2864 = vmatprep.subr.bf16.mxu0 0
  %2865 = vmatpush1.bf16.msra.mxu0 0
  %2866 = vmatprep.subr.bf16.mxu0 0
  %2867 = vmatpush1.bf16.msra.mxu0 0
  %2868 = vmatprep.subr.bf16.mxu0 0
  %2869 = vmatpush1.bf16.msra.mxu0 0
  %2870 = vmatprep.subr.bf16.mxu0 0
  %2871 = vmatpush1.bf16.msra.mxu0 %v1758
  %2872 = vmatprep.subr.bf16.mxu0 0
  %2873 = vmatpush1.bf16.msra.mxu0 %v1757
  %2874 = vmatprep.subr.bf16.mxu0 0
  %2875 = vmatpush2.bf16.msra.mxu0 0
  %2876 = vmatprep.subr.bf16.mxu0 0
  %2877 = vmatpush2.bf16.msra.mxu0 0
  %2878 = vmatprep.subr.bf16.mxu0 0
  %2879 = vmatpush2.bf16.msra.mxu0 0
  %2880 = vmatprep.subr.bf16.mxu0 0
  %2881 = vmatpush2.bf16.msra.mxu0 0
  %2882 = vmatprep.subr.bf16.mxu0 0
  %2883 = vmatpush2.bf16.msra.mxu0 0
  %2884 = vmatprep.subr.bf16.mxu0 0
  %2885 = vmatpush2.bf16.msra.mxu0 0
  %2886 = vmatprep.subr.bf16.mxu0 0
  %2887 = vmatpush2.bf16.msra.mxu0 0
  %2888 = vmatprep.subr.bf16.mxu0 0
  %2889 = vmatpush2.bf16.msra.mxu0 0
  %2890 = vmatprep.mubr.bf16.mxu0 0
  %2891 = vmatmul.mubr.bf16.gmra.mxu0 %v2856
  %v2892 = vpop.f32.mrf.mxu0
  %v2893 = vadd.f32 0.0, %v2892
  %v2894 = vpop.f32.mrf.mxu0
  %v2895 = vpop.f32.mrf.mxu0
  %v2896 = vpop.f32.mrf.mxu0
  %2897 = vdwg.mxu0
  %v2898 = vadd.f32 %v2850, %v2893
  %v2899 = vld [vmem:[#allocation5] sm:$0xff]
  %v2900 = vpack.c.bf16 %v2839, %v2839
  %2902 = vrot.lane.b32.xlu0 %v2900, 64
  %v2903 = vpop.permute.xlu0 %2902
  %v2905 = vsel %vm200, %v2903, 0
  %2907 = vmatprep.subr.bf16.mxu0 0
  %2908 = vmatpush1.bf16.msra.mxu0 0
  %2909 = vmatprep.subr.bf16.mxu0 0
  %2910 = vmatpush1.bf16.msra.mxu0 0
  %2911 = vmatprep.subr.bf16.mxu0 0
  %2912 = vmatpush1.bf16.msra.mxu0 0
  %2913 = vmatprep.subr.bf16.mxu0 0
  %2914 = vmatpush1.bf16.msra.mxu0 0
  %2915 = vmatprep.subr.bf16.mxu0 0
  %2916 = vmatpush1.bf16.msra.mxu0 0
  %2917 = vmatprep.subr.bf16.mxu0 0
  %2918 = vmatpush1.bf16.msra.mxu0 0
  %2919 = vmatprep.subr.bf16.mxu0 0
  %2920 = vmatpush1.bf16.msra.mxu0 %v1812
  %2921 = vmatprep.subr.bf16.mxu0 0
  %2922 = vmatpush1.bf16.msra.mxu0 %v1811
  %2923 = vmatprep.subr.bf16.mxu0 0
  %2924 = vmatpush2.bf16.msra.mxu0 0
  %2925 = vmatprep.subr.bf16.mxu0 0
  %2926 = vmatpush2.bf16.msra.mxu0 0
  %2927 = vmatprep.subr.bf16.mxu0 0
  %2928 = vmatpush2.bf16.msra.mxu0 0
  %2929 = vmatprep.subr.bf16.mxu0 0
  %2930 = vmatpush2.bf16.msra.mxu0 0
  %2931 = vmatprep.subr.bf16.mxu0 0
  %2932 = vmatpush2.bf16.msra.mxu0 0
  %2933 = vmatprep.subr.bf16.mxu0 0
  %2934 = vmatpush2.bf16.msra.mxu0 0
  %2935 = vmatprep.subr.bf16.mxu0 0
  %2936 = vmatpush2.bf16.msra.mxu0 0
  %2937 = vmatprep.subr.bf16.mxu0 0
  %2938 = vmatpush2.bf16.msra.mxu0 0
  %2939 = vmatprep.mubr.bf16.mxu0 0
  %2940 = vmatmul.mubr.bf16.gmra.mxu0 %v2905
  %v2941 = vpop.f32.mrf.mxu0
  %v2942 = vadd.f32 0.0, %v2941
  %v2943 = vpop.f32.mrf.mxu0
  %v2944 = vpop.f32.mrf.mxu0
  %v2945 = vpop.f32.mrf.mxu0
  %2946 = vdwg.mxu0
  %v2947 = vadd.f32 %v2899, %v2942
  %v2948 = vxor.u32 %v2898, 2147483648
  %v2949 = vmul.f32 %v2948, 1.442695
  %v2950 = vpow.pop %v2949
  %v2951 = vadd.f32 %v2950, 1.0
  %v2952 = vrcp.pop %v2951
  %v2953 = vmul.f32 1.0, %v2952
  %v2954 = vtanh.pop %v2898
  %v2955 = vmul.f32 %v2953, %v2809
  %2957 = vrot.lane.b32.xlu0 %v2954, 32
  %v2958 = vpop.permute.xlu0 %2957
  %v2960 = vmul.f32 %v2953, %v2958
  %2962 = vrot.lane.b32.xlu0 %v2960, 32
  %v2963 = vpop.permute.xlu0 %2962
  %v2965 = vadd.f32 %v2955, %v2963
  %v2966 = vtanh.pop %v2965
  %2968 = vrot.lane.b32.xlu0 %v2966, 32
  %v2969 = vpop.permute.xlu0 %2968
  %v2971 = vmul.f32 %v2953, %v2969
  %v2972 = vxor.u32 %v2947, 2147483648
  %v2973 = vmul.f32 %v2972, 1.442695
  %v2974 = vpow.pop %v2973
  %v2975 = vadd.f32 %v2974, 1.0
  %v2976 = vrcp.pop %v2975
  %v2977 = vmul.f32 1.0, %v2976
  %v2978 = vtanh.pop %v2947
  %v2979 = vmul.f32 %v2977, %v2833
  %2981 = vrot.lane.b32.xlu0 %v2978, 32
  %v2982 = vpop.permute.xlu0 %2981
  %v2984 = vmul.f32 %v2977, %v2982
  %2986 = vrot.lane.b32.xlu0 %v2984, 32
  %v2987 = vpop.permute.xlu0 %2986
  %v2989 = vadd.f32 %v2979, %v2987
  %v2990 = vtanh.pop %v2989
  %2992 = vrot.lane.b32.xlu0 %v2990, 32
  %v2993 = vpop.permute.xlu0 %2992
  %v2995 = vmul.f32 %v2977, %v2993
  %2997 = vrot.lane.b32.xlu0 %v2971, 64
  %v2998 = vpop.permute.xlu0 %2997
  %3000 = vst.msk [vmem:[%s1470] sm:$0xff] %vm200, %v2998
  %3002 = vrot.lane.b32.xlu0 %v2995, 64
  %v3003 = vpop.permute.xlu0 %3002
  %3005 = vst.msk [vmem:[#allocation3] sm:$0xff] %vm200, %v3003
  %v3006 = vld [vmem:[%s1470] sm:$0xff]
  %v3007 = vpack.c.bf16 %v3006, %v3006
  %v3008 = vld [vmem:[%s357] sm:$0xff]
  %v3009 = vpack.c.bf16 %v3008, %v3008
  %v3010 = vld [vmem:[%s13] sm:$0xf]
  %v3011 = vld [vmem:[%s13 + $0x4] sm:$0xf]
  %v3012 = vld [vmem:[%s13 + $0x8] sm:$0xf]
  %v3013 = vld [vmem:[%s13 + $0xc] sm:$0xf]
  %v3014 = vld [vmem:[%s13 + $0x10] sm:$0xf]
  %v3015 = vld [vmem:[%s13 + $0x14] sm:$0xf]
  %v3016 = vld [vmem:[%s13 + $0x18] sm:$0xf]
  %v3017 = vld [vmem:[%s13 + $0x1c] sm:$0xf]
  %v3022 = vunpack.c.l.b16 %v3014
  %v3023 = vunpack.c.l.b16 %v3015
  %v3024 = vunpack.c.l.b16 %v3016
  %v3025 = vunpack.c.l.b16 %v3017
  %v3026 = vpack.c.b16 %v3023, %v3022
  %v3027 = vpack.c.b16 %v3025, %v3024
  %v3031 = vsel %vm200, %v3009, 0
  %3033 = vmatprep.subr.bf16.mxu0 0
  %3034 = vmatpush1.bf16.msra.mxu0 0
  %3035 = vmatprep.subr.bf16.mxu0 0
  %3036 = vmatpush1.bf16.msra.mxu0 0
  %3037 = vmatprep.subr.bf16.mxu0 0
  %3038 = vmatpush1.bf16.msra.mxu0 0
  %3039 = vmatprep.subr.bf16.mxu0 0
  %3040 = vmatpush1.bf16.msra.mxu0 0
  %3041 = vmatprep.subr.bf16.mxu0 0
  %3042 = vmatpush1.bf16.msra.mxu0 0
  %3043 = vmatprep.subr.bf16.mxu0 0
  %3044 = vmatpush1.bf16.msra.mxu0 0
  %3045 = vmatprep.subr.bf16.mxu0 0
  %3046 = vmatpush1.bf16.msra.mxu0 %v3027
  %3047 = vmatprep.subr.bf16.mxu0 0
  %3048 = vmatpush1.bf16.msra.mxu0 %v3026
  %3049 = vmatprep.subr.bf16.mxu0 0
  %3050 = vmatpush2.bf16.msra.mxu0 0
  %3051 = vmatprep.subr.bf16.mxu0 0
  %3052 = vmatpush2.bf16.msra.mxu0 0
  %3053 = vmatprep.subr.bf16.mxu0 0
  %3054 = vmatpush2.bf16.msra.mxu0 0
  %3055 = vmatprep.subr.bf16.mxu0 0
  %3056 = vmatpush2.bf16.msra.mxu0 0
  %3057 = vmatprep.subr.bf16.mxu0 0
  %3058 = vmatpush2.bf16.msra.mxu0 0
  %3059 = vmatprep.subr.bf16.mxu0 0
  %3060 = vmatpush2.bf16.msra.mxu0 0
  %3061 = vmatprep.subr.bf16.mxu0 0
  %3062 = vmatpush2.bf16.msra.mxu0 0
  %3063 = vmatprep.subr.bf16.mxu0 0
  %3064 = vmatpush2.bf16.msra.mxu0 0
  %3065 = vmatprep.mubr.bf16.mxu0 0
  %3066 = vmatmul.mubr.bf16.gmra.mxu0 %v3031
  %v3067 = vpop.f32.mrf.mxu0
  %v3068 = vadd.f32 0.0, %v3067
  %v3069 = vpop.f32.mrf.mxu0
  %v3070 = vpop.f32.mrf.mxu0
  %v3071 = vpop.f32.mrf.mxu0
  %3072 = vdwg.mxu0
  %v3077 = vunpack.c.l.b16 %v3010
  %v3078 = vunpack.c.l.b16 %v3011
  %v3079 = vunpack.c.l.b16 %v3012
  %v3080 = vunpack.c.l.b16 %v3013
  %v3081 = vpack.c.b16 %v3078, %v3077
  %v3082 = vpack.c.b16 %v3080, %v3079
  %v3086 = vsel %vm200, %v3007, 0
  %3088 = vmatprep.subr.bf16.mxu0 0
  %3089 = vmatpush1.bf16.msra.mxu0 0
  %3090 = vmatprep.subr.bf16.mxu0 0
  %3091 = vmatpush1.bf16.msra.mxu0 0
  %3092 = vmatprep.subr.bf16.mxu0 0
  %3093 = vmatpush1.bf16.msra.mxu0 0
  %3094 = vmatprep.subr.bf16.mxu0 0
  %3095 = vmatpush1.bf16.msra.mxu0 0
  %3096 = vmatprep.subr.bf16.mxu0 0
  %3097 = vmatpush1.bf16.msra.mxu0 0
  %3098 = vmatprep.subr.bf16.mxu0 0
  %3099 = vmatpush1.bf16.msra.mxu0 0
  %3100 = vmatprep.subr.bf16.mxu0 0
  %3101 = vmatpush1.bf16.msra.mxu0 %v3082
  %3102 = vmatprep.subr.bf16.mxu0 0
  %3103 = vmatpush1.bf16.msra.mxu0 %v3081
  %3104 = vmatprep.subr.bf16.mxu0 0
  %3105 = vmatpush2.bf16.msra.mxu0 0
  %3106 = vmatprep.subr.bf16.mxu0 0
  %3107 = vmatpush2.bf16.msra.mxu0 0
  %3108 = vmatprep.subr.bf16.mxu0 0
  %3109 = vmatpush2.bf16.msra.mxu0 0
  %3110 = vmatprep.subr.bf16.mxu0 0
  %3111 = vmatpush2.bf16.msra.mxu0 0
  %3112 = vmatprep.subr.bf16.mxu0 0
  %3113 = vmatpush2.bf16.msra.mxu0 0
  %3114 = vmatprep.subr.bf16.mxu0 0
  %3115 = vmatpush2.bf16.msra.mxu0 0
  %3116 = vmatprep.subr.bf16.mxu0 0
  %3117 = vmatpush2.bf16.msra.mxu0 0
  %3118 = vmatprep.subr.bf16.mxu0 0
  %3119 = vmatpush2.bf16.msra.mxu0 0
  %3120 = vmatprep.mubr.bf16.mxu0 0
  %3121 = vmatmul.mubr.bf16.gmra.mxu0 %v3086
  %v3122 = vpop.f32.mrf.mxu0
  %v3123 = vadd.f32 %v3068, %v3122
  %v3124 = vpop.f32.mrf.mxu0
  %v3125 = vpop.f32.mrf.mxu0
  %v3126 = vpop.f32.mrf.mxu0
  %3127 = vdwg.mxu0
  %v3128 = vld [vmem:[%s14] sm:$0x1]
  %v3130 = vlaneseq
  %v3131 = vshrl.u32 %v3130, 7
  %v3132 = vsub.s32 0, %v3131
  %v3133 = vrot.slane %v3128, %v3132
  %v3135 = vadd.f32 %v3123, %v3133
  %3136 = vst [vmem:[%s15] sm:$0xff] %v3135
  %3137 = vmax.xlane.f32.xlu0 %v3135
  %v3138 = vpop.xlane.xlu0 %3137
  %v3139 = vsub.f32 %v3135, %v3138
  %v3140 = vmul.f32 %v3139, 1.442695
  %v3141 = vpow.pop %v3140
  %3142 = vadd.xlane.f32.xlu0 %v3141
  %v3143 = vpop.xlane.xlu0 %3142
  %v3144 = vrcp.pop %v3143
  %v3145 = vmul.f32 %v3141, %v3144
  %3146 = vst [vmem:[%s15 + $0x8] sm:$0xff] %v3145
  // Predicated region
  $region76: #{textrnn_forward.1} parent=0 // pred_check
    _
  $region77: #{textrnn_forward.1} parent=0 // pred_check_branch
    %3148 = sbr.rel (0) target = $region79
  $region78: #{textrnn_forward.1} parent=0 // pred_region
    _
  $region79: #{textrnn_forward.1} parent=0 // pred_fallthru
    _
  // Predicated region
  $region80: #{textrnn_forward.1} parent=0 // pred_check
    _
  $region81: #{textrnn_forward.1} parent=0 // pred_check_branch
    %3150 = sbr.rel (0) target = $region83
  $region82: #{textrnn_forward.1} parent=0 // pred_region
    _
  $region83: #{textrnn_forward.1} parent=0 // pred_fallthru
    _

</llo_original>
